<compile_context>
chip_gen: v7x
topology: tpu7x:2x2x1
jax: 0.10.0
libtpu: 0.0.40
codegen_flags: <defaults>
</compile_context>

<pallas_src>
import functools

import jax
import jax.numpy as jnp
from jax import lax
from jax.experimental import pallas as pl
from jax.experimental.pallas import tpu as pltpu


def _stn3d_kernel(N, TILE_P,
                  x_ref,
                  w1_ref, b1_ref, s1_ref, t1_ref,
                  w2_ref, b2_ref, s2_ref, t2_ref,
                  w3_ref, b3_ref, s3_ref, t3_ref,
                  w4_ref, b4_ref, s4_ref, t4_ref,
                  w5_ref, b5_ref, s5_ref, t5_ref,
                  w6_ref, b6_ref,
                  o_ref, acc_ref):
    """Per-tile conv stage + online max; FC tail on the last tile of each batch."""
    p = pl.program_id(1)

    @pl.when(p == 0)
    def _():
        acc_ref[...] = jnp.full_like(acc_ref, -jnp.inf)

    def bn_relu(y, b_ref, s_ref, t_ref):
        # bias + folded inference BatchNorm + ReLU, all in f32 (v5e VPU has no bf16).
        return jnp.maximum((y + b_ref[...]) * s_ref[...] + t_ref[...], 0.0)

    # ---- pointwise conv stage on one (C, TILE_P) tile (NCW read directly) ----
    x_bf = x_ref[0].astype(jnp.bfloat16)                          # (C, TILE_P)
    h = lax.dot_general(x_bf, w1_ref[...],                        # contract the C axis
                        dimension_numbers=(((0,), (0,)), ((), ())),
                        preferred_element_type=jnp.float32)       # (TILE_P, 64)
    h = bn_relu(h, b1_ref, s1_ref, t1_ref)
    h = bn_relu(jnp.dot(h.astype(jnp.bfloat16), w2_ref[...],
                        preferred_element_type=jnp.float32),
                b2_ref, s2_ref, t2_ref)                           # (TILE_P, 128)
    h = bn_relu(jnp.dot(h.astype(jnp.bfloat16), w3_ref[...],
                        preferred_element_type=jnp.float32),
                b3_ref, s3_ref, t3_ref)                           # (TILE_P, 1024)

    # Mask padded points (last tile when N % TILE_P != 0) so they never win the max.
    point_ids = p * TILE_P + lax.broadcasted_iota(jnp.int32, (TILE_P, 1), 0)
    h = jnp.where(point_ids < N, h, -jnp.inf)
    acc_ref[...] = jnp.maximum(acc_ref[...], jnp.max(h, axis=0, keepdims=True))

    # ---- FC tail: once per batch element, on the last point tile ----
    @pl.when(p == pl.num_programs(1) - 1)
    def _():
        g = acc_ref[...]                                          # (8, 1024), rows identical
        f = bn_relu(jnp.dot(g.astype(jnp.bfloat16), w4_ref[...],
                            preferred_element_type=jnp.float32),
                    b4_ref, s4_ref, t4_ref)                       # (8, 512)
        f = bn_relu(jnp.dot(f.astype(jnp.bfloat16), w5_ref[...],
                            preferred_element_type=jnp.float32),
                    b5_ref, s5_ref, t5_ref)                       # (8, 256)
        out = jnp.dot(f.astype(jnp.bfloat16), w6_ref[...],
                      preferred_element_type=jnp.float32) + b6_ref[...]   # (8, 128)
        o_ref[0] = out


def init_params(key, num_channal=5):
    """Deterministic synthetic parameters matching the PyTorch module's shapes."""
    dims = [(num_channal, 64), (64, 128), (128, 1024),
            (1024, 512), (512, 256), (256, 9)]
    eps = 1e-5
    keys = jax.random.split(key, 4 * len(dims))
    params = []
    for i, (cin, cout) in enumerate(dims):
        kw, kb, kg, kbe = keys[4 * i:4 * i + 4]
        w = 0.05 * jax.random.normal(kw, (cin, cout), jnp.float32)
        b = 0.05 * jax.random.normal(kb, (1, cout), jnp.float32)
        if i < 5:  # layers followed by BatchNorm1d
            gamma = 1.0 + 0.1 * jax.random.normal(kg, (1, cout), jnp.float32)
            beta = 0.1 * jax.random.normal(kbe, (1, cout), jnp.float32)
            running_mean = jnp.zeros((1, cout), jnp.float32)
            running_var = jnp.ones((1, cout), jnp.float32)
            scale = gamma / jnp.sqrt(running_var + eps)
            shift = beta - running_mean * scale
            params += [w, b, scale, shift]
        else:      # fc3 has no BatchNorm
            params += [w, b]
    return tuple(params)


def stn3d_forward(x, params):
    """x: (B, num_channal, N) float32 (PyTorch NCW layout). Returns (B, 3, 3)."""
    B, C, N = x.shape
    # Point tile: last BlockSpec dim must be a multiple of 128 or equal the full dim.
    TILE_P = N if N <= 512 else 512
    num_tiles = pl.cdiv(N, TILE_P)

    (w1, b1, s1, t1, w2, b2, s2, t2, w3, b3, s3, t3,
     w4, b4, s4, t4, w5, b5, s5, t5, w6, b6) = params

    # bf16 matmul weights (f32 accumulation in-kernel); pad fc3 to 128 output
    # lanes for a lane-dense store, sliced back to 9 below.
    wb1, wb2, wb3, wb4, wb5 = (w.astype(jnp.bfloat16) for w in (w1, w2, w3, w4, w5))
    w6p = jnp.zeros((w6.shape[0], 128), jnp.float32).at[:, :9].set(w6).astype(jnp.bfloat16)
    b6p = jnp.zeros((1, 128), jnp.float32).at[:, :9].set(b6)

    inputs = (x,
              wb1, b1, s1, t1,
              wb2, b2, s2, t2,
              wb3, b3, s3, t3,
              wb4, b4, s4, t4,
              wb5, b5, s5, t5,
              w6p, b6p)

    resident = lambda b, p: (0, 0)            # params pinned to block (0, 0) -> no re-DMA
    param_specs = [pl.BlockSpec(a.shape, resident) for a in inputs[1:]]

    out = pl.pallas_call(
        functools.partial(_stn3d_kernel, N, TILE_P),
        out_shape=jax.ShapeDtypeStruct((B, 8, 128), jnp.float32),
        grid_spec=pltpu.PrefetchScalarGridSpec(
            num_scalar_prefetch=0,
            grid=(B, num_tiles),
            in_specs=[pl.BlockSpec((1, C, TILE_P), lambda b, p: (b, 0, p))]
                     + param_specs,
            out_specs=pl.BlockSpec((1, 8, 128), lambda b, p: (b, 0, 0)),
            scratch_shapes=[pltpu.VMEM((8, 1024), jnp.float32)]),
        compiler_params=pltpu.CompilerParams(
            dimension_semantics=("parallel", "arbitrary"),
            vmem_limit_bytes=32 << 20),
    )(*inputs)

    out9 = out[:, 0, :9]
    # x = x + iden ; x.view(-1, 3, 3)   (glue in plain JAX)
    iden = jnp.eye(3, dtype=jnp.float32).reshape(1, 9)
    return (out9 + iden).reshape(B, 3, 3)


if __name__ == "__main__":
    key = jax.random.PRNGKey(0)
    kx, kp = jax.random.split(key)

    B, C, N = 2, 5, 16                       # batch=2, num_channal=5, 16 points
    x = jax.random.normal(kx, (B, C, N), jnp.float32)
    params = init_params(kp, num_channal=C)

    out = stn3d_forward(x, params)
    jax.block_until_ready(out)
    assert out.shape == (B, 3, 3) and out.dtype == jnp.float32
    print("KERNEL_OK")
</pallas_src>

<mosaic_0001>
module attributes {stable_mosaic.version = 11 : i64} {
  func.func @_stn3d_kernel(%arg0: i32, %arg1: i32, %arg2: memref<1x5x16xf32, #tpu.memory_space<vmem>>, %arg3: memref<5x64xbf16, #tpu.memory_space<vmem>>, %arg4: memref<1x64xf32, #tpu.memory_space<vmem>>, %arg5: memref<1x64xf32, #tpu.memory_space<vmem>>, %arg6: memref<1x64xf32, #tpu.memory_space<vmem>>, %arg7: memref<64x128xbf16, #tpu.memory_space<vmem>>, %arg8: memref<1x128xf32, #tpu.memory_space<vmem>>, %arg9: memref<1x128xf32, #tpu.memory_space<vmem>>, %arg10: memref<1x128xf32, #tpu.memory_space<vmem>>, %arg11: memref<128x1024xbf16, #tpu.memory_space<vmem>>, %arg12: memref<1x1024xf32, #tpu.memory_space<vmem>>, %arg13: memref<1x1024xf32, #tpu.memory_space<vmem>>, %arg14: memref<1x1024xf32, #tpu.memory_space<vmem>>, %arg15: memref<1024x512xbf16, #tpu.memory_space<vmem>>, %arg16: memref<1x512xf32, #tpu.memory_space<vmem>>, %arg17: memref<1x512xf32, #tpu.memory_space<vmem>>, %arg18: memref<1x512xf32, #tpu.memory_space<vmem>>, %arg19: memref<512x256xbf16, #tpu.memory_space<vmem>>, %arg20: memref<1x256xf32, #tpu.memory_space<vmem>>, %arg21: memref<1x256xf32, #tpu.memory_space<vmem>>, %arg22: memref<1x256xf32, #tpu.memory_space<vmem>>, %arg23: memref<256x128xbf16, #tpu.memory_space<vmem>>, %arg24: memref<1x128xf32, #tpu.memory_space<vmem>>, %arg25: memref<1x8x128xf32, #tpu.memory_space<vmem>>, %arg26: memref<8x1024xf32, #tpu.memory_space<vmem>>) attributes {dimension_semantics = [#tpu.dimension_semantics<parallel>, #tpu.dimension_semantics<arbitrary>], iteration_bounds = array<i64: 2, 1>, scalar_prefetch = 0 : i64, scratch_operands = 1 : i64, tpu.core_type = #tpu.core_type<tc>, window_params = [{transform_indices = @transform_0, window_bounds = array<i64: 1, 5, 16>}, {pipeline_mode = #tpu.pipeline_mode<synchronous>, transform_indices = @transform_1, window_bounds = array<i64: 5, 64>}, {pipeline_mode = #tpu.pipeline_mode<synchronous>, transform_indices = @transform_2, window_bounds = array<i64: 1, 64>}, {pipeline_mode = #tpu.pipeline_mode<synchronous>, transform_indices = @transform_3, window_bounds = array<i64: 1, 64>}, {pipeline_mode = #tpu.pipeline_mode<synchronous>, transform_indices = @transform_4, window_bounds = array<i64: 1, 64>}, {pipeline_mode = #tpu.pipeline_mode<synchronous>, transform_indices = @transform_5, window_bounds = array<i64: 64, 128>}, {pipeline_mode = #tpu.pipeline_mode<synchronous>, transform_indices = @transform_6, window_bounds = array<i64: 1, 128>}, {pipeline_mode = #tpu.pipeline_mode<synchronous>, transform_indices = @transform_7, window_bounds = array<i64: 1, 128>}, {pipeline_mode = #tpu.pipeline_mode<synchronous>, transform_indices = @transform_8, window_bounds = array<i64: 1, 128>}, {pipeline_mode = #tpu.pipeline_mode<synchronous>, transform_indices = @transform_9, window_bounds = array<i64: 128, 1024>}, {pipeline_mode = #tpu.pipeline_mode<synchronous>, transform_indices = @transform_10, window_bounds = array<i64: 1, 1024>}, {pipeline_mode = #tpu.pipeline_mode<synchronous>, transform_indices = @transform_11, window_bounds = array<i64: 1, 1024>}, {pipeline_mode = #tpu.pipeline_mode<synchronous>, transform_indices = @transform_12, window_bounds = array<i64: 1, 1024>}, {pipeline_mode = #tpu.pipeline_mode<synchronous>, transform_indices = @transform_13, window_bounds = array<i64: 1024, 512>}, {pipeline_mode = #tpu.pipeline_mode<synchronous>, transform_indices = @transform_14, window_bounds = array<i64: 1, 512>}, {pipeline_mode = #tpu.pipeline_mode<synchronous>, transform_indices = @transform_15, window_bounds = array<i64: 1, 512>}, {pipeline_mode = #tpu.pipeline_mode<synchronous>, transform_indices = @transform_16, window_bounds = array<i64: 1, 512>}, {pipeline_mode = #tpu.pipeline_mode<synchronous>, transform_indices = @transform_17, window_bounds = array<i64: 512, 256>}, {pipeline_mode = #tpu.pipeline_mode<synchronous>, transform_indices = @transform_18, window_bounds = array<i64: 1, 256>}, {pipeline_mode = #tpu.pipeline_mode<synchronous>, transform_indices = @transform_19, window_bounds = array<i64: 1, 256>}, {pipeline_mode = #tpu.pipeline_mode<synchronous>, transform_indices = @transform_20, window_bounds = array<i64: 1, 256>}, {pipeline_mode = #tpu.pipeline_mode<synchronous>, transform_indices = @transform_21, window_bounds = array<i64: 256, 128>}, {pipeline_mode = #tpu.pipeline_mode<synchronous>, transform_indices = @transform_22, window_bounds = array<i64: 1, 128>}, {transform_indices = @transform_23, window_bounds = array<i64: 1, 8, 128>}]} {
    %c0_i32 = arith.constant 0 : i32
    %0 = arith.cmpi eq, %arg1, %c0_i32 : i32
    %1 = arith.extui %0 : i1 to i32
    %c0_i32_0 = arith.constant 0 : i32
    %2 = arith.cmpi ne, %1, %c0_i32_0 : i32
    scf.if %2 {
      %cst_41 = arith.constant 0xFF800000 : f32
      %66 = vector.broadcast %cst_41 : f32 to vector<8x1024xf32>
      %c0_42 = arith.constant 0 : index
      %c0_43 = arith.constant 0 : index
      %67 = vector.load %arg26[%c0_42, %c0_43] : memref<8x1024xf32, #tpu.memory_space<vmem>>, vector<8x1024xf32>
      tpu.vector_store %arg26[%c0_42, %c0_43], %66 {strides = array<i32>} : memref<8x1024xf32, #tpu.memory_space<vmem>>, vector<8x1024xf32>,
    } else {
    }
    %c0 = arith.constant 0 : index
    %c0_1 = arith.constant 0 : index
    %c0_2 = arith.constant 0 : index
    %3 = vector.load %arg2[%c0, %c0_1, %c0_2] : memref<1x5x16xf32, #tpu.memory_space<vmem>>, vector<1x5x16xf32>
    %4 = vector.shape_cast %3 : vector<1x5x16xf32> to vector<5x16xf32>
    %5 = arith.truncf %4 : vector<5x16xf32> to vector<5x16xbf16>
    %c0_3 = arith.constant 0 : index
    %c0_4 = arith.constant 0 : index
    %6 = vector.load %arg3[%c0_3, %c0_4] : memref<5x64xbf16, #tpu.memory_space<vmem>>, vector<5x64xbf16>
    %cst = arith.constant dense<0.000000e+00> : vector<16x64xf32>
    %7 = tpu.matmul %5, %6, %cst {dimension_numbers = #tpu.dot_dimension_numbers<[0], [0], [1], [1], [0, 1, 1, 1], [], []>} : vector<5x16xbf16>, vector<5x64xbf16>, vector<16x64xf32> -> vector<16x64xf32>
    %c0_5 = arith.constant 0 : index
    %c0_6 = arith.constant 0 : index
    %8 = vector.load %arg4[%c0_5, %c0_6] : memref<1x64xf32, #tpu.memory_space<vmem>>, vector<1x64xf32>
    %9 = vector.broadcast %8 : vector<1x64xf32> to vector<16x64xf32>
    %10 = arith.addf %7, %9 : vector<16x64xf32>
    %c0_7 = arith.constant 0 : index
    %c0_8 = arith.constant 0 : index
    %11 = vector.load %arg5[%c0_7, %c0_8] : memref<1x64xf32, #tpu.memory_space<vmem>>, vector<1x64xf32>
    %12 = vector.broadcast %11 : vector<1x64xf32> to vector<16x64xf32>
    %13 = arith.mulf %10, %12 : vector<16x64xf32>
    %c0_9 = arith.constant 0 : index
    %c0_10 = arith.constant 0 : index
    %14 = vector.load %arg6[%c0_9, %c0_10] : memref<1x64xf32, #tpu.memory_space<vmem>>, vector<1x64xf32>
    %15 = vector.broadcast %14 : vector<1x64xf32> to vector<16x64xf32>
    %16 = arith.addf %13, %15 : vector<16x64xf32>
    %cst_11 = arith.constant 0.000000e+00 : f32
    %17 = vector.broadcast %cst_11 : f32 to vector<16x64xf32>
    %18 = arith.maximumf %16, %17 : vector<16x64xf32>
    %19 = arith.truncf %18 : vector<16x64xf32> to vector<16x64xbf16>
    %c0_12 = arith.constant 0 : index
    %c0_13 = arith.constant 0 : index
    %20 = vector.load %arg7[%c0_12, %c0_13] : memref<64x128xbf16, #tpu.memory_space<vmem>>, vector<64x128xbf16>
    %cst_14 = arith.constant dense<0.000000e+00> : vector<16x128xf32>
    %21 = tpu.matmul %19, %20, %cst_14 {dimension_numbers = #tpu.dot_dimension_numbers<[1], [0], [0], [1], [0, 0, 1, 1], [], []>} : vector<16x64xbf16>, vector<64x128xbf16>, vector<16x128xf32> -> vector<16x128xf32>
    %c0_15 = arith.constant 0 : index
    %c0_16 = arith.constant 0 : index
    %22 = vector.load %arg8[%c0_15, %c0_16] : memref<1x128xf32, #tpu.memory_space<vmem>>, vector<1x128xf32>
    %23 = vector.broadcast %22 : vector<1x128xf32> to vector<16x128xf32>
    %24 = arith.addf %21, %23 : vector<16x128xf32>
    %c0_17 = arith.constant 0 : index
    %c0_18 = arith.constant 0 : index
    %25 = vector.load %arg9[%c0_17, %c0_18] : memref<1x128xf32, #tpu.memory_space<vmem>>, vector<1x128xf32>
    %26 = vector.broadcast %25 : vector<1x128xf32> to vector<16x128xf32>
    %27 = arith.mulf %24, %26 : vector<16x128xf32>
    %c0_19 = arith.constant 0 : index
    %c0_20 = arith.constant 0 : index
    %28 = vector.load %arg10[%c0_19, %c0_20] : memref<1x128xf32, #tpu.memory_space<vmem>>, vector<1x128xf32>
    %29 = vector.broadcast %28 : vector<1x128xf32> to vector<16x128xf32>
    %30 = arith.addf %27, %29 : vector<16x128xf32>
    %cst_21 = arith.constant 0.000000e+00 : f32
    %31 = vector.broadcast %cst_21 : f32 to vector<16x128xf32>
    %32 = arith.maximumf %30, %31 : vector<16x128xf32>
    %33 = arith.truncf %32 : vector<16x128xf32> to vector<16x128xbf16>
    %c0_22 = arith.constant 0 : index
    %c0_23 = arith.constant 0 : index
    %34 = vector.load %arg11[%c0_22, %c0_23] : memref<128x1024xbf16, #tpu.memory_space<vmem>>, vector<128x1024xbf16>
    %cst_24 = arith.constant dense<0.000000e+00> : vector<16x1024xf32>
    %35 = tpu.matmul %33, %34, %cst_24 {dimension_numbers = #tpu.dot_dimension_numbers<[1], [0], [0], [1], [0, 0, 1, 1], [], []>} : vector<16x128xbf16>, vector<128x1024xbf16>, vector<16x1024xf32> -> vector<16x1024xf32>
    %c0_25 = arith.constant 0 : index
    %c0_26 = arith.constant 0 : index
    %36 = vector.load %arg12[%c0_25, %c0_26] : memref<1x1024xf32, #tpu.memory_space<vmem>>, vector<1x1024xf32>
    %37 = vector.broadcast %36 : vector<1x1024xf32> to vector<16x1024xf32>
    %38 = arith.addf %35, %37 : vector<16x1024xf32>
    %c0_27 = arith.constant 0 : index
    %c0_28 = arith.constant 0 : index
    %39 = vector.load %arg13[%c0_27, %c0_28] : memref<1x1024xf32, #tpu.memory_space<vmem>>, vector<1x1024xf32>
    %40 = vector.broadcast %39 : vector<1x1024xf32> to vector<16x1024xf32>
    %41 = arith.mulf %38, %40 : vector<16x1024xf32>
    %c0_29 = arith.constant 0 : index
    %c0_30 = arith.constant 0 : index
    %42 = vector.load %arg14[%c0_29, %c0_30] : memref<1x1024xf32, #tpu.memory_space<vmem>>, vector<1x1024xf32>
    %43 = vector.broadcast %42 : vector<1x1024xf32> to vector<16x1024xf32>
    %44 = arith.addf %41, %43 : vector<16x1024xf32>
    %cst_31 = arith.constant 0.000000e+00 : f32
    %45 = vector.broadcast %cst_31 : f32 to vector<16x1024xf32>
    %46 = arith.maximumf %44, %45 : vector<16x1024xf32>
    %c16_i32 = arith.constant 16 : i32
    %47 = arith.muli %arg1, %c16_i32 : i32
    %48 = tpu.iota {dimensions = array<i32: 0>} : vector<16x1xi32>
    %49 = vector.broadcast %47 : i32 to vector<16x1xi32>
    %50 = arith.addi %49, %48 : vector<16x1xi32>
    %c16_i32_32 = arith.constant 16 : i32
    %51 = vector.broadcast %c16_i32_32 : i32 to vector<16x1xi32>
    %52 = arith.cmpi slt, %50, %51 : vector<16x1xi32>
    %cst_33 = arith.constant 0xFF800000 : f32
    %53 = vector.shape_cast %52 : vector<16x1xi1> to vector<16x1xi1>
    %54 = vector.broadcast %53 : vector<16x1xi1> to vector<16x1024xi1>
    %55 = vector.broadcast %cst_33 : f32 to vector<16x1024xf32>
    %56 = arith.select %54, %46, %55 : vector<16x1024xi1>, vector<16x1024xf32>
    %c0_34 = arith.constant 0 : index
    %c0_35 = arith.constant 0 : index
    %57 = vector.load %arg26[%c0_34, %c0_35] : memref<8x1024xf32, #tpu.memory_space<vmem>>, vector<8x1024xf32>
    %cst_36 = arith.constant dense<0xFF800000> : vector<1024xf32>
    %58 = vector.multi_reduction <maximumf>, %56, %cst_36 [0] : vector<16x1024xf32> to vector<1024xf32>
    %59 = vector.shape_cast %58 : vector<1024xf32> to vector<1x1024xf32>
    %60 = vector.broadcast %59 : vector<1x1024xf32> to vector<8x1024xf32>
    %61 = arith.maximumf %57, %60 : vector<8x1024xf32>
    %c0_37 = arith.constant 0 : index
    %c0_38 = arith.constant 0 : index
    %62 = vector.load %arg26[%c0_37, %c0_38] : memref<8x1024xf32, #tpu.memory_space<vmem>>, vector<8x1024xf32>
    tpu.vector_store %arg26[%c0_37, %c0_38], %61 {strides = array<i32>} : memref<8x1024xf32, #tpu.memory_space<vmem>>, vector<8x1024xf32>,
    %c0_i32_39 = arith.constant 0 : i32
    %63 = arith.cmpi eq, %arg1, %c0_i32_39 : i32
    %64 = arith.extui %63 : i1 to i32
    %c0_i32_40 = arith.constant 0 : i32
    %65 = arith.cmpi ne, %64, %c0_i32_40 : i32
    scf.if %65 {
      %c0_41 = arith.constant 0 : index
      %c0_42 = arith.constant 0 : index
      %66 = vector.load %arg26[%c0_41, %c0_42] : memref<8x1024xf32, #tpu.memory_space<vmem>>, vector<8x1024xf32>
      %67 = arith.truncf %66 : vector<8x1024xf32> to vector<8x1024xbf16>
      %c0_43 = arith.constant 0 : index
      %c0_44 = arith.constant 0 : index
      %68 = vector.load %arg15[%c0_43, %c0_44] : memref<1024x512xbf16, #tpu.memory_space<vmem>>, vector<1024x512xbf16>
      %cst_45 = arith.constant dense<0.000000e+00> : vector<8x512xf32>
      %69 = tpu.matmul %67, %68, %cst_45 {dimension_numbers = #tpu.dot_dimension_numbers<[1], [0], [0], [1], [0, 0, 1, 1], [], []>} : vector<8x1024xbf16>, vector<1024x512xbf16>, vector<8x512xf32> -> vector<8x512xf32>
      %c0_46 = arith.constant 0 : index
      %c0_47 = arith.constant 0 : index
      %70 = vector.load %arg16[%c0_46, %c0_47] : memref<1x512xf32, #tpu.memory_space<vmem>>, vector<1x512xf32>
      %71 = vector.broadcast %70 : vector<1x512xf32> to vector<8x512xf32>
      %72 = arith.addf %69, %71 : vector<8x512xf32>
      %c0_48 = arith.constant 0 : index
      %c0_49 = arith.constant 0 : index
      %73 = vector.load %arg17[%c0_48, %c0_49] : memref<1x512xf32, #tpu.memory_space<vmem>>, vector<1x512xf32>
      %74 = vector.broadcast %73 : vector<1x512xf32> to vector<8x512xf32>
      %75 = arith.mulf %72, %74 : vector<8x512xf32>
      %c0_50 = arith.constant 0 : index
      %c0_51 = arith.constant 0 : index
      %76 = vector.load %arg18[%c0_50, %c0_51] : memref<1x512xf32, #tpu.memory_space<vmem>>, vector<1x512xf32>
      %77 = vector.broadcast %76 : vector<1x512xf32> to vector<8x512xf32>
      %78 = arith.addf %75, %77 : vector<8x512xf32>
      %cst_52 = arith.constant 0.000000e+00 : f32
      %79 = vector.broadcast %cst_52 : f32 to vector<8x512xf32>
      %80 = arith.maximumf %78, %79 : vector<8x512xf32>
      %81 = arith.truncf %80 : vector<8x512xf32> to vector<8x512xbf16>
      %c0_53 = arith.constant 0 : index
      %c0_54 = arith.constant 0 : index
      %82 = vector.load %arg19[%c0_53, %c0_54] : memref<512x256xbf16, #tpu.memory_space<vmem>>, vector<512x256xbf16>
      %cst_55 = arith.constant dense<0.000000e+00> : vector<8x256xf32>
      %83 = tpu.matmul %81, %82, %cst_55 {dimension_numbers = #tpu.dot_dimension_numbers<[1], [0], [0], [1], [0, 0, 1, 1], [], []>} : vector<8x512xbf16>, vector<512x256xbf16>, vector<8x256xf32> -> vector<8x256xf32>
      %c0_56 = arith.constant 0 : index
      %c0_57 = arith.constant 0 : index
      %84 = vector.load %arg20[%c0_56, %c0_57] : memref<1x256xf32, #tpu.memory_space<vmem>>, vector<1x256xf32>
      %85 = vector.broadcast %84 : vector<1x256xf32> to vector<8x256xf32>
      %86 = arith.addf %83, %85 : vector<8x256xf32>
      %c0_58 = arith.constant 0 : index
      %c0_59 = arith.constant 0 : index
      %87 = vector.load %arg21[%c0_58, %c0_59] : memref<1x256xf32, #tpu.memory_space<vmem>>, vector<1x256xf32>
      %88 = vector.broadcast %87 : vector<1x256xf32> to vector<8x256xf32>
      %89 = arith.mulf %86, %88 : vector<8x256xf32>
      %c0_60 = arith.constant 0 : index
      %c0_61 = arith.constant 0 : index
      %90 = vector.load %arg22[%c0_60, %c0_61] : memref<1x256xf32, #tpu.memory_space<vmem>>, vector<1x256xf32>
      %91 = vector.broadcast %90 : vector<1x256xf32> to vector<8x256xf32>
      %92 = arith.addf %89, %91 : vector<8x256xf32>
      %cst_62 = arith.constant 0.000000e+00 : f32
      %93 = vector.broadcast %cst_62 : f32 to vector<8x256xf32>
      %94 = arith.maximumf %92, %93 : vector<8x256xf32>
      %95 = arith.truncf %94 : vector<8x256xf32> to vector<8x256xbf16>
      %c0_63 = arith.constant 0 : index
      %c0_64 = arith.constant 0 : index
      %96 = vector.load %arg23[%c0_63, %c0_64] : memref<256x128xbf16, #tpu.memory_space<vmem>>, vector<256x128xbf16>
      %cst_65 = arith.constant dense<0.000000e+00> : vector<8x128xf32>
      %97 = tpu.matmul %95, %96, %cst_65 {dimension_numbers = #tpu.dot_dimension_numbers<[1], [0], [0], [1], [0, 0, 1, 1], [], []>} : vector<8x256xbf16>, vector<256x128xbf16>, vector<8x128xf32> -> vector<8x128xf32>
      %c0_66 = arith.constant 0 : index
      %c0_67 = arith.constant 0 : index
      %98 = vector.load %arg24[%c0_66, %c0_67] : memref<1x128xf32, #tpu.memory_space<vmem>>, vector<1x128xf32>
      %99 = vector.broadcast %98 : vector<1x128xf32> to vector<8x128xf32>
      %100 = arith.addf %97, %99 : vector<8x128xf32>
      %c0_68 = arith.constant 0 : index
      %c0_69 = arith.constant 0 : index
      %c0_70 = arith.constant 0 : index
      %101 = vector.load %arg25[%c0_68, %c0_69, %c0_70] : memref<1x8x128xf32, #tpu.memory_space<vmem>>, vector<1x8x128xf32>
      %102 = vector.shape_cast %101 : vector<1x8x128xf32> to vector<8x128xf32>
      %103 = vector.shape_cast %100 : vector<8x128xf32> to vector<1x8x128xf32>
      tpu.vector_store %arg25[%c0_68, %c0_69, %c0_70], %103 {strides = array<i32>} : memref<1x8x128xf32, #tpu.memory_space<vmem>>, vector<1x8x128xf32>,
    } else {
    }
    return
  }
  func.func @transform_0(%arg0: i32, %arg1: i32) -> (i32, i32, i32) {
    %c0_i32 = arith.constant 0 : i32
    %c0_i32_0 = arith.constant 0 : i32
    return %arg0, %c0_i32, %arg1 : i32, i32, i32
  }
  func.func @transform_1(%arg0: i32, %arg1: i32) -> (i32, i32) {
    %c0_i32 = arith.constant 0 : i32
    %c0_i32_0 = arith.constant 0 : i32
    %c0_i32_1 = arith.constant 0 : i32
    return %c0_i32, %c0_i32_0 : i32, i32
  }
  func.func @transform_2(%arg0: i32, %arg1: i32) -> (i32, i32) {
    %c0_i32 = arith.constant 0 : i32
    %c0_i32_0 = arith.constant 0 : i32
    %c0_i32_1 = arith.constant 0 : i32
    return %c0_i32, %c0_i32_0 : i32, i32
  }
  func.func @transform_3(%arg0: i32, %arg1: i32) -> (i32, i32) {
    %c0_i32 = arith.constant 0 : i32
    %c0_i32_0 = arith.constant 0 : i32
    %c0_i32_1 = arith.constant 0 : i32
    return %c0_i32, %c0_i32_0 : i32, i32
  }
  func.func @transform_4(%arg0: i32, %arg1: i32) -> (i32, i32) {
    %c0_i32 = arith.constant 0 : i32
    %c0_i32_0 = arith.constant 0 : i32
    %c0_i32_1 = arith.constant 0 : i32
    return %c0_i32, %c0_i32_0 : i32, i32
  }
  func.func @transform_5(%arg0: i32, %arg1: i32) -> (i32, i32) {
    %c0_i32 = arith.constant 0 : i32
    %c0_i32_0 = arith.constant 0 : i32
    %c0_i32_1 = arith.constant 0 : i32
    return %c0_i32, %c0_i32_0 : i32, i32
  }
  func.func @transform_6(%arg0: i32, %arg1: i32) -> (i32, i32) {
    %c0_i32 = arith.constant 0 : i32
    %c0_i32_0 = arith.constant 0 : i32
    %c0_i32_1 = arith.constant 0 : i32
    return %c0_i32, %c0_i32_0 : i32, i32
  }
  func.func @transform_7(%arg0: i32, %arg1: i32) -> (i32, i32) {
    %c0_i32 = arith.constant 0 : i32
    %c0_i32_0 = arith.constant 0 : i32
    %c0_i32_1 = arith.constant 0 : i32
    return %c0_i32, %c0_i32_0 : i32, i32
  }
  func.func @transform_8(%arg0: i32, %arg1: i32) -> (i32, i32) {
    %c0_i32 = arith.constant 0 : i32
    %c0_i32_0 = arith.constant 0 : i32
    %c0_i32_1 = arith.constant 0 : i32
    return %c0_i32, %c0_i32_0 : i32, i32
  }
  func.func @transform_9(%arg0: i32, %arg1: i32) -> (i32, i32) {
    %c0_i32 = arith.constant 0 : i32
    %c0_i32_0 = arith.constant 0 : i32
    %c0_i32_1 = arith.constant 0 : i32
    return %c0_i32, %c0_i32_0 : i32, i32
  }
  func.func @transform_10(%arg0: i32, %arg1: i32) -> (i32, i32) {
    %c0_i32 = arith.constant 0 : i32
    %c0_i32_0 = arith.constant 0 : i32
    %c0_i32_1 = arith.constant 0 : i32
    return %c0_i32, %c0_i32_0 : i32, i32
  }
  func.func @transform_11(%arg0: i32, %arg1: i32) -> (i32, i32) {
    %c0_i32 = arith.constant 0 : i32
    %c0_i32_0 = arith.constant 0 : i32
    %c0_i32_1 = arith.constant 0 : i32
    return %c0_i32, %c0_i32_0 : i32, i32
  }
  func.func @transform_12(%arg0: i32, %arg1: i32) -> (i32, i32) {
    %c0_i32 = arith.constant 0 : i32
    %c0_i32_0 = arith.constant 0 : i32
    %c0_i32_1 = arith.constant 0 : i32
    return %c0_i32, %c0_i32_0 : i32, i32
  }
  func.func @transform_13(%arg0: i32, %arg1: i32) -> (i32, i32) {
    %c0_i32 = arith.constant 0 : i32
    %c0_i32_0 = arith.constant 0 : i32
    %c0_i32_1 = arith.constant 0 : i32
    return %c0_i32, %c0_i32_0 : i32, i32
  }
  func.func @transform_14(%arg0: i32, %arg1: i32) -> (i32, i32) {
    %c0_i32 = arith.constant 0 : i32
    %c0_i32_0 = arith.constant 0 : i32
    %c0_i32_1 = arith.constant 0 : i32
    return %c0_i32, %c0_i32_0 : i32, i32
  }
  func.func @transform_15(%arg0: i32, %arg1: i32) -> (i32, i32) {
    %c0_i32 = arith.constant 0 : i32
    %c0_i32_0 = arith.constant 0 : i32
    %c0_i32_1 = arith.constant 0 : i32
    return %c0_i32, %c0_i32_0 : i32, i32
  }
  func.func @transform_16(%arg0: i32, %arg1: i32) -> (i32, i32) {
    %c0_i32 = arith.constant 0 : i32
    %c0_i32_0 = arith.constant 0 : i32
    %c0_i32_1 = arith.constant 0 : i32
    return %c0_i32, %c0_i32_0 : i32, i32
  }
  func.func @transform_17(%arg0: i32, %arg1: i32) -> (i32, i32) {
    %c0_i32 = arith.constant 0 : i32
    %c0_i32_0 = arith.constant 0 : i32
    %c0_i32_1 = arith.constant 0 : i32
    return %c0_i32, %c0_i32_0 : i32, i32
  }
  func.func @transform_18(%arg0: i32, %arg1: i32) -> (i32, i32) {
    %c0_i32 = arith.constant 0 : i32
    %c0_i32_0 = arith.constant 0 : i32
    %c0_i32_1 = arith.constant 0 : i32
    return %c0_i32, %c0_i32_0 : i32, i32
  }
  func.func @transform_19(%arg0: i32, %arg1: i32) -> (i32, i32) {
    %c0_i32 = arith.constant 0 : i32
    %c0_i32_0 = arith.constant 0 : i32
    %c0_i32_1 = arith.constant 0 : i32
    return %c0_i32, %c0_i32_0 : i32, i32
  }
  func.func @transform_20(%arg0: i32, %arg1: i32) -> (i32, i32) {
    %c0_i32 = arith.constant 0 : i32
    %c0_i32_0 = arith.constant 0 : i32
    %c0_i32_1 = arith.constant 0 : i32
    return %c0_i32, %c0_i32_0 : i32, i32
  }
  func.func @transform_21(%arg0: i32, %arg1: i32) -> (i32, i32) {
    %c0_i32 = arith.constant 0 : i32
    %c0_i32_0 = arith.constant 0 : i32
    %c0_i32_1 = arith.constant 0 : i32
    return %c0_i32, %c0_i32_0 : i32, i32
  }
  func.func @transform_22(%arg0: i32, %arg1: i32) -> (i32, i32) {
    %c0_i32 = arith.constant 0 : i32
    %c0_i32_0 = arith.constant 0 : i32
    %c0_i32_1 = arith.constant 0 : i32
    return %c0_i32, %c0_i32_0 : i32, i32
  }
  func.func @transform_23(%arg0: i32, %arg1: i32) -> (i32, i32, i32) {
    %c0_i32 = arith.constant 0 : i32
    %c0_i32_0 = arith.constant 0 : i32
    %c0_i32_1 = arith.constant 0 : i32
    return %arg0, %c0_i32, %c0_i32_0 : i32, i32, i32
  }
}

</mosaic_0001>

<llo_original>
// kernel: tpu_custom_call.1
$region0: #{tpu_custom_call.1}
  #allocation0 [shape = 'u32[]', space=smem, size = 0x4, offset = 0x4, fixed_abs, tag = 'smem constant byte address 0x4 - core index']
  #allocation1 [shape = 'u32[144,128]{1,0:T(1,128)}', space=vmem, size = 0x12000, scoped, tag = 'internal scratch']
  #allocation2 [shape = 'f32[8,1024]{1,0:T(8,128)}', space=vmem, size = 0x8000, scoped, tag = 'scratch operand']
  %s0 = inlined_call_operand.vmem [shape: f32[2,5,16], index: 0, kind: input, shape index: {}]
  %s1 = inlined_call_operand.hbm [shape: bf16[5,64], index: 1, kind: input, shape index: {}]
  %s2 = inlined_call_operand.hbm [shape: f32[1,64], index: 2, kind: input, shape index: {}]
  %s3 = inlined_call_operand.hbm [shape: f32[1,64], index: 3, kind: input, shape index: {}]
  %s4 = inlined_call_operand.hbm [shape: f32[1,64], index: 4, kind: input, shape index: {}]
  %s5 = inlined_call_operand.vmem [shape: bf16[64,128], index: 5, kind: input, shape index: {}]
  %s6 = inlined_call_operand.hbm [shape: f32[1,128], index: 6, kind: input, shape index: {}]
  %s7 = inlined_call_operand.hbm [shape: f32[1,128], index: 7, kind: input, shape index: {}]
  %s8 = inlined_call_operand.hbm [shape: f32[1,128], index: 8, kind: input, shape index: {}]
  %s9 = inlined_call_operand.hbm [shape: bf16[128,1024], index: 9, kind: input, shape index: {}]
  %s10 = inlined_call_operand.vmem [shape: f32[1,1024], index: 10, kind: input, shape index: {}]
  %s11 = inlined_call_operand.vmem [shape: f32[1,1024], index: 11, kind: input, shape index: {}]
  %s12 = inlined_call_operand.vmem [shape: f32[1,1024], index: 12, kind: input, shape index: {}]
  %s13 = inlined_call_operand.hbm [shape: bf16[1024,512], index: 13, kind: input, shape index: {}]
  %s14 = inlined_call_operand.vmem [shape: f32[1,512], index: 14, kind: input, shape index: {}]
  %s15 = inlined_call_operand.vmem [shape: f32[1,512], index: 15, kind: input, shape index: {}]
  %s16 = inlined_call_operand.vmem [shape: f32[1,512], index: 16, kind: input, shape index: {}]
  %s17 = inlined_call_operand.hbm [shape: bf16[512,256], index: 17, kind: input, shape index: {}]
  %s18 = inlined_call_operand.vmem [shape: f32[1,256], index: 18, kind: input, shape index: {}]
  %s19 = inlined_call_operand.vmem [shape: f32[1,256], index: 19, kind: input, shape index: {}]
  %s20 = inlined_call_operand.vmem [shape: f32[1,256], index: 20, kind: input, shape index: {}]
  %s21 = inlined_call_operand.hbm [shape: bf16[256,128], index: 21, kind: input, shape index: {}]
  %s22 = inlined_call_operand.vmem [shape: f32[1,128], index: 22, kind: input, shape index: {}]
  %s23 = inlined_call_operand.hbm [shape: f32[2,8,128], index: 23, kind: output, shape index: {}]
  %s24 = sld [smem:[#allocation0]]
  $region177: #{tpu_custom_call.1} parent=0
    _
  %s26 = ssub.s32 1, %s24
  %s27 = scalar_select 0, %s26, %s24
  $region1: #{tpu_custom_call.1} parent=0
    #allocation3 [shape = 'u8[2048]{0}', space=vmem, size = 0x800, scoped, tag = 'input window, operand 1, single buffered']
    #allocation4 [shape = 's32[2]{0}', space=sflag, size = 0x8, scoped, tag = 'scoped memory for tpu_custom_call.1']
    #allocation5 [shape = 's32[2]{0}', space=sflag, size = 0x8, scoped, tag = 'scoped memory for tpu_custom_call.1']
    #allocation6 [shape = 'u8[512]{0}', space=vmem, size = 0x400, scoped, tag = 'input window, operand 2, single buffered']
    #allocation7 [shape = 's32[1]{0}', space=sflag, size = 0x4, scoped, tag = 'scoped memory for tpu_custom_call.1']
    #allocation8 [shape = 'u8[512]{0}', space=vmem, size = 0x400, scoped, tag = 'input window, operand 3, single buffered']
    #allocation9 [shape = 'u8[512]{0}', space=vmem, size = 0x400, scoped, tag = 'input window, operand 4, single buffered']
    #allocation10 [shape = 's32[1]{0}', space=sflag, size = 0x4, scoped, tag = 'scoped memory for tpu_custom_call.1']
    #allocation11 [shape = 'u8[512]{0}', space=vmem, size = 0x400, scoped, tag = 'input window, operand 6, single buffered']
    #allocation12 [shape = 'u8[512]{0}', space=vmem, size = 0x400, scoped, tag = 'input window, operand 7, single buffered']
    #allocation13 [shape = 's32[1]{0}', space=sflag, size = 0x4, scoped, tag = 'scoped memory for tpu_custom_call.1']
    #allocation14 [shape = 'u8[512]{0}', space=vmem, size = 0x400, scoped, tag = 'input window, operand 8, single buffered']
    #allocation15 [shape = 'u8[262144]{0}', space=vmem, size = 0x40000, scoped, tag = 'input window, operand 9, single buffered']
    #allocation16 [shape = 's32[1]{0}', space=sflag, size = 0x4, scoped, tag = 'scoped memory for tpu_custom_call.1']
    #allocation17 [shape = 'u8[1048576]{0}', space=vmem, size = 0x100000, scoped, tag = 'input window, operand 13, single buffered']
    #allocation18 [shape = 'u8[262144]{0}', space=vmem, size = 0x40000, scoped, tag = 'input window, operand 17, single buffered']
    #allocation19 [shape = 's32[1]{0}', space=sflag, size = 0x4, scoped, tag = 'scoped memory for tpu_custom_call.1']
    #allocation20 [shape = 'u8[65536]{0}', space=vmem, size = 0x10000, scoped, tag = 'input window, operand 21, single buffered']
    #allocation21 [shape = 'u8[8192]{0}', space=vmem, size = 0x2000, scoped, tag = 'output window, operand 0']
    %28 = vsyncpa [#allocation4], 0
    %29 = vsyncpa [#allocation7], 0
    %30 = vsyncpa [#allocation10], 0
    %31 = vsyncpa [#allocation13], 0
    %32 = vsyncpa [#allocation16], 0
    %33 = vsyncpa [#allocation19], 0
    %34 = vsyncpa [#allocation5], 0
    %s35 = scalar_lea.sflag [#allocation5], 1
    %36 = vsyncpa %s35, 0
    loop: start=0, step=1, limit=4
    $region2: #{tpu_custom_call.1} parent=1 // loop_pre_header
      _
    $region3: #{tpu_custom_call.1} parent=1 // loop_header
      %s38 = sphi 0, %s42
      %p39 = scmp.ge.s32.totalorder %s38, 4
      %s45 = sphi 0, %s57
      %s46 = sphi 0, %s53
      %s47 = sphi 0, %s45
      %s48 = sphi 0, %s46
      %s49 = sphi 0, %s47
      %s50 = sphi 0, %s48
      %s62 = sphi 0, %s64
      %s65 = sphi 0, %s62
      %s66 = sphi 0, %s65
      %s82 = sphi 0, %s66
      %s86 = sphi 0, %s86
      %s88 = sphi 0, %s86
      %s89 = sphi 0, %s88
      %s103 = sphi 0, %s89
      %s107 = sphi 0, %s107
      %s109 = sphi 0, %s107
      %s110 = sphi 0, %s109
      %s124 = sphi 0, %s110
      %s128 = sphi 0, %s128
      %s130 = sphi 0, %s128
      %s131 = sphi 0, %s130
      %s145 = sphi 0, %s131
      %s149 = sphi 0, %s149
      %s151 = sphi 0, %s149
      %s152 = sphi 0, %s151
      %s166 = sphi 0, %s152
      %s170 = sphi 0, %s170
      %s172 = sphi 0, %s170
      %s173 = sphi 0, %s172
      %s187 = sphi 0, %s173
      %s191 = sphi 0, %s191
      %s193 = sphi 0, %s191
      %s194 = sphi 0, %s193
      %s208 = sphi 0, %s194
      %s212 = sphi 0, %s212
      %s214 = sphi 0, %s212
      %s215 = sphi 0, %s214
      %s229 = sphi 0, %s215
      %s233 = sphi 0, %s233
      %s235 = sphi 0, %s233
      %s236 = sphi 0, %s235
      %s250 = sphi 0, %s236
      %s254 = sphi 0, %s254
      %s256 = sphi 0, %s254
      %s257 = sphi 0, %s256
      %s271 = sphi 0, %s257
      %s275 = sphi 0, %s275
      %s277 = sphi 0, %s275
      %s278 = sphi 0, %s277
      %s292 = sphi 0, %s278
      %s296 = sphi 0, %s296
      %s298 = sphi 0, %s296
      %s299 = sphi 0, %s298
      %s313 = sphi 0, %s299
      %s317 = sphi 0, %s317
      %s319 = sphi 0, %s317
      %s320 = sphi 0, %s319
      %s334 = sphi 0, %s320
      %s338 = sphi 0, %s338
      %s340 = sphi 0, %s338
      %s341 = sphi 0, %s340
      %s355 = sphi 0, %s341
      %s359 = sphi 0, %s359
      %s361 = sphi 0, %s359
      %s362 = sphi 0, %s361
      %s376 = sphi 0, %s362
      %s380 = sphi 0, %s380
      %s382 = sphi 0, %s380
      %s383 = sphi 0, %s382
      %s397 = sphi 0, %s383
      %s401 = sphi 0, %s401
      %s403 = sphi 0, %s401
      %s404 = sphi 0, %s403
      %s418 = sphi 0, %s404
      %s422 = sphi 0, %s422
      %s424 = sphi 0, %s422
      %s425 = sphi 0, %s424
      %s439 = sphi 0, %s425
      %s443 = sphi 0, %s443
      %s445 = sphi 0, %s443
      %s446 = sphi 0, %s445
      %s460 = sphi 0, %s446
      %s464 = sphi 0, %s464
      %s466 = sphi 0, %s464
      %s467 = sphi 0, %s466
      %s481 = sphi 0, %s467
      %s485 = sphi 0, %s485
      %s487 = sphi 0, %s485
      %s488 = sphi 0, %s487
      %s502 = sphi 0, %s488
      %s506 = sphi 0, %s506
      %s508 = sphi 0, %s506
      %s509 = sphi 0, %s508
      %s523 = sphi 0, %s509
      %s527 = sphi 0, %s527
      %s529 = sphi 0, %s527
      %s530 = sphi 0, %s529
      %s544 = sphi 0, %s530
      %s550 = sphi 0, %s552
      %s553 = sphi 0, %s550
      %s554 = sphi 0, %s553
      %s570 = sphi 0, %s554
    $region4: #{tpu_custom_call.1} parent=1 // loop_header_branch
      %41 = sbr.rel (%p39) target = $region8
    $region5: #{tpu_custom_call.1} parent=1 // loop_body
      %s43 = ssub.s32 %s38, 1
      %s44 = ssub.s32 %s38, 2
      %s51 = sadd.s32 1, %s46
      %p52 = scmp.ge.s32.totalorder %s51, 1
      %s53 = scalar_select %p52, 0, %s51
      %s54 = sadd.s32 1, %s45
      %s55 = scalar_select %p52, %s54, %s45
      %p56 = scmp.ge.s32.totalorder %s55, 2
      %s57 = scalar_select %p56, 0, %s55
      %s58 = ssub.s32 %s45, %s57
      %s59 = ssub.s32 %s46, %s53
      %s60 = sor.u32 %s58, %s59
      %p61 = scmp.eq.s32.totalorder %s60, 0
      %s63 = sadd.s32 %s62, 1
      %s64 = scalar_select %p61, %s62, %s63
      %p67 = pneg %p61
      %p68 = scmp.eq.s32.totalorder %s38, 1
      %p69 = por %p67, %p68
      %p70 = scmp.ne.s32.totalorder %s62, %s65
      %p71 = scmp.eq.s32.totalorder %s38, 0
      %p72 = por %p70, %p71
      %p73 = scmp.ne.s32.totalorder %s62, %s65
      %p74 = scmp.eq.s32.totalorder %s43, 1
      %p75 = por %p73, %p74
      %p76 = scmp.ne.s32.totalorder %s65, %s66
      %p77 = scmp.eq.s32.totalorder %s43, 0
      %p78 = por %p76, %p77
      %p79 = scmp.ne.s32.totalorder %s65, %s66
      %p80 = scmp.eq.s32.totalorder %s44, 1
      %p81 = por %p79, %p80
      %p83 = scmp.ne.s32.totalorder %s66, %s82
      %p84 = scmp.eq.s32.totalorder %s44, 0
      %p85 = por %p83, %p84
      %s87 = sadd.s32 %s86, 1
      %p90 = scmp.eq.s32.totalorder %s38, 1
      %p91 = scmp.ne.s32.totalorder %s86, %s88
      %p92 = scmp.eq.s32.totalorder %s38, 0
      %p93 = por %p91, %p92
      %p94 = scmp.ne.s32.totalorder %s86, %s88
      %p95 = scmp.eq.s32.totalorder %s43, 1
      %p96 = por %p94, %p95
      %p97 = scmp.ne.s32.totalorder %s88, %s89
      %p98 = scmp.eq.s32.totalorder %s43, 0
      %p99 = por %p97, %p98
      %p100 = scmp.ne.s32.totalorder %s88, %s89
      %p101 = scmp.eq.s32.totalorder %s44, 1
      %p102 = por %p100, %p101
      %p104 = scmp.ne.s32.totalorder %s89, %s103
      %p105 = scmp.eq.s32.totalorder %s44, 0
      %p106 = por %p104, %p105
      %s108 = sadd.s32 %s107, 1
      %p111 = scmp.eq.s32.totalorder %s38, 1
      %p112 = scmp.ne.s32.totalorder %s107, %s109
      %p113 = scmp.eq.s32.totalorder %s38, 0
      %p114 = por %p112, %p113
      %p115 = scmp.ne.s32.totalorder %s107, %s109
      %p116 = scmp.eq.s32.totalorder %s43, 1
      %p117 = por %p115, %p116
      %p118 = scmp.ne.s32.totalorder %s109, %s110
      %p119 = scmp.eq.s32.totalorder %s43, 0
      %p120 = por %p118, %p119
      %p121 = scmp.ne.s32.totalorder %s109, %s110
      %p122 = scmp.eq.s32.totalorder %s44, 1
      %p123 = por %p121, %p122
      %p125 = scmp.ne.s32.totalorder %s110, %s124
      %p126 = scmp.eq.s32.totalorder %s44, 0
      %p127 = por %p125, %p126
      %s129 = sadd.s32 %s128, 1
      %p132 = scmp.eq.s32.totalorder %s38, 1
      %p133 = scmp.ne.s32.totalorder %s128, %s130
      %p134 = scmp.eq.s32.totalorder %s38, 0
      %p135 = por %p133, %p134
      %p136 = scmp.ne.s32.totalorder %s128, %s130
      %p137 = scmp.eq.s32.totalorder %s43, 1
      %p138 = por %p136, %p137
      %p139 = scmp.ne.s32.totalorder %s130, %s131
      %p140 = scmp.eq.s32.totalorder %s43, 0
      %p141 = por %p139, %p140
      %p142 = scmp.ne.s32.totalorder %s130, %s131
      %p143 = scmp.eq.s32.totalorder %s44, 1
      %p144 = por %p142, %p143
      %p146 = scmp.ne.s32.totalorder %s131, %s145
      %p147 = scmp.eq.s32.totalorder %s44, 0
      %p148 = por %p146, %p147
      %s150 = sadd.s32 %s149, 1
      %p153 = scmp.eq.s32.totalorder %s38, 1
      %p154 = scmp.ne.s32.totalorder %s149, %s151
      %p155 = scmp.eq.s32.totalorder %s38, 0
      %p156 = por %p154, %p155
      %p157 = scmp.ne.s32.totalorder %s149, %s151
      %p158 = scmp.eq.s32.totalorder %s43, 1
      %p159 = por %p157, %p158
      %p160 = scmp.ne.s32.totalorder %s151, %s152
      %p161 = scmp.eq.s32.totalorder %s43, 0
      %p162 = por %p160, %p161
      %p163 = scmp.ne.s32.totalorder %s151, %s152
      %p164 = scmp.eq.s32.totalorder %s44, 1
      %p165 = por %p163, %p164
      %p167 = scmp.ne.s32.totalorder %s152, %s166
      %p168 = scmp.eq.s32.totalorder %s44, 0
      %p169 = por %p167, %p168
      %s171 = sadd.s32 %s170, 1
      %p174 = scmp.eq.s32.totalorder %s38, 1
      %p175 = scmp.ne.s32.totalorder %s170, %s172
      %p176 = scmp.eq.s32.totalorder %s38, 0
      %p177 = por %p175, %p176
      %p178 = scmp.ne.s32.totalorder %s170, %s172
      %p179 = scmp.eq.s32.totalorder %s43, 1
      %p180 = por %p178, %p179
      %p181 = scmp.ne.s32.totalorder %s172, %s173
      %p182 = scmp.eq.s32.totalorder %s43, 0
      %p183 = por %p181, %p182
      %p184 = scmp.ne.s32.totalorder %s172, %s173
      %p185 = scmp.eq.s32.totalorder %s44, 1
      %p186 = por %p184, %p185
      %p188 = scmp.ne.s32.totalorder %s173, %s187
      %p189 = scmp.eq.s32.totalorder %s44, 0
      %p190 = por %p188, %p189
      %s192 = sadd.s32 %s191, 1
      %p195 = scmp.eq.s32.totalorder %s38, 1
      %p196 = scmp.ne.s32.totalorder %s191, %s193
      %p197 = scmp.eq.s32.totalorder %s38, 0
      %p198 = por %p196, %p197
      %p199 = scmp.ne.s32.totalorder %s191, %s193
      %p200 = scmp.eq.s32.totalorder %s43, 1
      %p201 = por %p199, %p200
      %p202 = scmp.ne.s32.totalorder %s193, %s194
      %p203 = scmp.eq.s32.totalorder %s43, 0
      %p204 = por %p202, %p203
      %p205 = scmp.ne.s32.totalorder %s193, %s194
      %p206 = scmp.eq.s32.totalorder %s44, 1
      %p207 = por %p205, %p206
      %p209 = scmp.ne.s32.totalorder %s194, %s208
      %p210 = scmp.eq.s32.totalorder %s44, 0
      %p211 = por %p209, %p210
      %s213 = sadd.s32 %s212, 1
      %p216 = scmp.eq.s32.totalorder %s38, 1
      %p217 = scmp.ne.s32.totalorder %s212, %s214
      %p218 = scmp.eq.s32.totalorder %s38, 0
      %p219 = por %p217, %p218
      %p220 = scmp.ne.s32.totalorder %s212, %s214
      %p221 = scmp.eq.s32.totalorder %s43, 1
      %p222 = por %p220, %p221
      %p223 = scmp.ne.s32.totalorder %s214, %s215
      %p224 = scmp.eq.s32.totalorder %s43, 0
      %p225 = por %p223, %p224
      %p226 = scmp.ne.s32.totalorder %s214, %s215
      %p227 = scmp.eq.s32.totalorder %s44, 1
      %p228 = por %p226, %p227
      %p230 = scmp.ne.s32.totalorder %s215, %s229
      %p231 = scmp.eq.s32.totalorder %s44, 0
      %p232 = por %p230, %p231
      %s234 = sadd.s32 %s233, 1
      %p237 = scmp.eq.s32.totalorder %s38, 1
      %p238 = scmp.ne.s32.totalorder %s233, %s235
      %p239 = scmp.eq.s32.totalorder %s38, 0
      %p240 = por %p238, %p239
      %p241 = scmp.ne.s32.totalorder %s233, %s235
      %p242 = scmp.eq.s32.totalorder %s43, 1
      %p243 = por %p241, %p242
      %p244 = scmp.ne.s32.totalorder %s235, %s236
      %p245 = scmp.eq.s32.totalorder %s43, 0
      %p246 = por %p244, %p245
      %p247 = scmp.ne.s32.totalorder %s235, %s236
      %p248 = scmp.eq.s32.totalorder %s44, 1
      %p249 = por %p247, %p248
      %p251 = scmp.ne.s32.totalorder %s236, %s250
      %p252 = scmp.eq.s32.totalorder %s44, 0
      %p253 = por %p251, %p252
      %s255 = sadd.s32 %s254, 1
      %p258 = scmp.eq.s32.totalorder %s38, 1
      %p259 = scmp.ne.s32.totalorder %s254, %s256
      %p260 = scmp.eq.s32.totalorder %s38, 0
      %p261 = por %p259, %p260
      %p262 = scmp.ne.s32.totalorder %s254, %s256
      %p263 = scmp.eq.s32.totalorder %s43, 1
      %p264 = por %p262, %p263
      %p265 = scmp.ne.s32.totalorder %s256, %s257
      %p266 = scmp.eq.s32.totalorder %s43, 0
      %p267 = por %p265, %p266
      %p268 = scmp.ne.s32.totalorder %s256, %s257
      %p269 = scmp.eq.s32.totalorder %s44, 1
      %p270 = por %p268, %p269
      %p272 = scmp.ne.s32.totalorder %s257, %s271
      %p273 = scmp.eq.s32.totalorder %s44, 0
      %p274 = por %p272, %p273
      %s276 = sadd.s32 %s275, 1
      %p279 = scmp.eq.s32.totalorder %s38, 1
      %p280 = scmp.ne.s32.totalorder %s275, %s277
      %p281 = scmp.eq.s32.totalorder %s38, 0
      %p282 = por %p280, %p281
      %p283 = scmp.ne.s32.totalorder %s275, %s277
      %p284 = scmp.eq.s32.totalorder %s43, 1
      %p285 = por %p283, %p284
      %p286 = scmp.ne.s32.totalorder %s277, %s278
      %p287 = scmp.eq.s32.totalorder %s43, 0
      %p288 = por %p286, %p287
      %p289 = scmp.ne.s32.totalorder %s277, %s278
      %p290 = scmp.eq.s32.totalorder %s44, 1
      %p291 = por %p289, %p290
      %p293 = scmp.ne.s32.totalorder %s278, %s292
      %p294 = scmp.eq.s32.totalorder %s44, 0
      %p295 = por %p293, %p294
      %s297 = sadd.s32 %s296, 1
      %p300 = scmp.eq.s32.totalorder %s38, 1
      %p301 = scmp.ne.s32.totalorder %s296, %s298
      %p302 = scmp.eq.s32.totalorder %s38, 0
      %p303 = por %p301, %p302
      %p304 = scmp.ne.s32.totalorder %s296, %s298
      %p305 = scmp.eq.s32.totalorder %s43, 1
      %p306 = por %p304, %p305
      %p307 = scmp.ne.s32.totalorder %s298, %s299
      %p308 = scmp.eq.s32.totalorder %s43, 0
      %p309 = por %p307, %p308
      %p310 = scmp.ne.s32.totalorder %s298, %s299
      %p311 = scmp.eq.s32.totalorder %s44, 1
      %p312 = por %p310, %p311
      %p314 = scmp.ne.s32.totalorder %s299, %s313
      %p315 = scmp.eq.s32.totalorder %s44, 0
      %p316 = por %p314, %p315
      %s318 = sadd.s32 %s317, 1
      %p321 = scmp.eq.s32.totalorder %s38, 1
      %p322 = scmp.ne.s32.totalorder %s317, %s319
      %p323 = scmp.eq.s32.totalorder %s38, 0
      %p324 = por %p322, %p323
      %p325 = scmp.ne.s32.totalorder %s317, %s319
      %p326 = scmp.eq.s32.totalorder %s43, 1
      %p327 = por %p325, %p326
      %p328 = scmp.ne.s32.totalorder %s319, %s320
      %p329 = scmp.eq.s32.totalorder %s43, 0
      %p330 = por %p328, %p329
      %p331 = scmp.ne.s32.totalorder %s319, %s320
      %p332 = scmp.eq.s32.totalorder %s44, 1
      %p333 = por %p331, %p332
      %p335 = scmp.ne.s32.totalorder %s320, %s334
      %p336 = scmp.eq.s32.totalorder %s44, 0
      %p337 = por %p335, %p336
      %s339 = sadd.s32 %s338, 1
      %p342 = scmp.eq.s32.totalorder %s38, 1
      %p343 = scmp.ne.s32.totalorder %s338, %s340
      %p344 = scmp.eq.s32.totalorder %s38, 0
      %p345 = por %p343, %p344
      %p346 = scmp.ne.s32.totalorder %s338, %s340
      %p347 = scmp.eq.s32.totalorder %s43, 1
      %p348 = por %p346, %p347
      %p349 = scmp.ne.s32.totalorder %s340, %s341
      %p350 = scmp.eq.s32.totalorder %s43, 0
      %p351 = por %p349, %p350
      %p352 = scmp.ne.s32.totalorder %s340, %s341
      %p353 = scmp.eq.s32.totalorder %s44, 1
      %p354 = por %p352, %p353
      %p356 = scmp.ne.s32.totalorder %s341, %s355
      %p357 = scmp.eq.s32.totalorder %s44, 0
      %p358 = por %p356, %p357
      %s360 = sadd.s32 %s359, 1
      %p363 = scmp.eq.s32.totalorder %s38, 1
      %p364 = scmp.ne.s32.totalorder %s359, %s361
      %p365 = scmp.eq.s32.totalorder %s38, 0
      %p366 = por %p364, %p365
      %p367 = scmp.ne.s32.totalorder %s359, %s361
      %p368 = scmp.eq.s32.totalorder %s43, 1
      %p369 = por %p367, %p368
      %p370 = scmp.ne.s32.totalorder %s361, %s362
      %p371 = scmp.eq.s32.totalorder %s43, 0
      %p372 = por %p370, %p371
      %p373 = scmp.ne.s32.totalorder %s361, %s362
      %p374 = scmp.eq.s32.totalorder %s44, 1
      %p375 = por %p373, %p374
      %p377 = scmp.ne.s32.totalorder %s362, %s376
      %p378 = scmp.eq.s32.totalorder %s44, 0
      %p379 = por %p377, %p378
      %s381 = sadd.s32 %s380, 1
      %p384 = scmp.eq.s32.totalorder %s38, 1
      %p385 = scmp.ne.s32.totalorder %s380, %s382
      %p386 = scmp.eq.s32.totalorder %s38, 0
      %p387 = por %p385, %p386
      %p388 = scmp.ne.s32.totalorder %s380, %s382
      %p389 = scmp.eq.s32.totalorder %s43, 1
      %p390 = por %p388, %p389
      %p391 = scmp.ne.s32.totalorder %s382, %s383
      %p392 = scmp.eq.s32.totalorder %s43, 0
      %p393 = por %p391, %p392
      %p394 = scmp.ne.s32.totalorder %s382, %s383
      %p395 = scmp.eq.s32.totalorder %s44, 1
      %p396 = por %p394, %p395
      %p398 = scmp.ne.s32.totalorder %s383, %s397
      %p399 = scmp.eq.s32.totalorder %s44, 0
      %p400 = por %p398, %p399
      %s402 = sadd.s32 %s401, 1
      %p405 = scmp.eq.s32.totalorder %s38, 1
      %p406 = scmp.ne.s32.totalorder %s401, %s403
      %p407 = scmp.eq.s32.totalorder %s38, 0
      %p408 = por %p406, %p407
      %p409 = scmp.ne.s32.totalorder %s401, %s403
      %p410 = scmp.eq.s32.totalorder %s43, 1
      %p411 = por %p409, %p410
      %p412 = scmp.ne.s32.totalorder %s403, %s404
      %p413 = scmp.eq.s32.totalorder %s43, 0
      %p414 = por %p412, %p413
      %p415 = scmp.ne.s32.totalorder %s403, %s404
      %p416 = scmp.eq.s32.totalorder %s44, 1
      %p417 = por %p415, %p416
      %p419 = scmp.ne.s32.totalorder %s404, %s418
      %p420 = scmp.eq.s32.totalorder %s44, 0
      %p421 = por %p419, %p420
      %s423 = sadd.s32 %s422, 1
      %p426 = scmp.eq.s32.totalorder %s38, 1
      %p427 = scmp.ne.s32.totalorder %s422, %s424
      %p428 = scmp.eq.s32.totalorder %s38, 0
      %p429 = por %p427, %p428
      %p430 = scmp.ne.s32.totalorder %s422, %s424
      %p431 = scmp.eq.s32.totalorder %s43, 1
      %p432 = por %p430, %p431
      %p433 = scmp.ne.s32.totalorder %s424, %s425
      %p434 = scmp.eq.s32.totalorder %s43, 0
      %p435 = por %p433, %p434
      %p436 = scmp.ne.s32.totalorder %s424, %s425
      %p437 = scmp.eq.s32.totalorder %s44, 1
      %p438 = por %p436, %p437
      %p440 = scmp.ne.s32.totalorder %s425, %s439
      %p441 = scmp.eq.s32.totalorder %s44, 0
      %p442 = por %p440, %p441
      %s444 = sadd.s32 %s443, 1
      %p447 = scmp.eq.s32.totalorder %s38, 1
      %p448 = scmp.ne.s32.totalorder %s443, %s445
      %p449 = scmp.eq.s32.totalorder %s38, 0
      %p450 = por %p448, %p449
      %p451 = scmp.ne.s32.totalorder %s443, %s445
      %p452 = scmp.eq.s32.totalorder %s43, 1
      %p453 = por %p451, %p452
      %p454 = scmp.ne.s32.totalorder %s445, %s446
      %p455 = scmp.eq.s32.totalorder %s43, 0
      %p456 = por %p454, %p455
      %p457 = scmp.ne.s32.totalorder %s445, %s446
      %p458 = scmp.eq.s32.totalorder %s44, 1
      %p459 = por %p457, %p458
      %p461 = scmp.ne.s32.totalorder %s446, %s460
      %p462 = scmp.eq.s32.totalorder %s44, 0
      %p463 = por %p461, %p462
      %s465 = sadd.s32 %s464, 1
      %p468 = scmp.eq.s32.totalorder %s38, 1
      %p469 = scmp.ne.s32.totalorder %s464, %s466
      %p470 = scmp.eq.s32.totalorder %s38, 0
      %p471 = por %p469, %p470
      %p472 = scmp.ne.s32.totalorder %s464, %s466
      %p473 = scmp.eq.s32.totalorder %s43, 1
      %p474 = por %p472, %p473
      %p475 = scmp.ne.s32.totalorder %s466, %s467
      %p476 = scmp.eq.s32.totalorder %s43, 0
      %p477 = por %p475, %p476
      %p478 = scmp.ne.s32.totalorder %s466, %s467
      %p479 = scmp.eq.s32.totalorder %s44, 1
      %p480 = por %p478, %p479
      %p482 = scmp.ne.s32.totalorder %s467, %s481
      %p483 = scmp.eq.s32.totalorder %s44, 0
      %p484 = por %p482, %p483
      %s486 = sadd.s32 %s485, 1
      %p489 = scmp.eq.s32.totalorder %s38, 1
      %p490 = scmp.ne.s32.totalorder %s485, %s487
      %p491 = scmp.eq.s32.totalorder %s38, 0
      %p492 = por %p490, %p491
      %p493 = scmp.ne.s32.totalorder %s485, %s487
      %p494 = scmp.eq.s32.totalorder %s43, 1
      %p495 = por %p493, %p494
      %p496 = scmp.ne.s32.totalorder %s487, %s488
      %p497 = scmp.eq.s32.totalorder %s43, 0
      %p498 = por %p496, %p497
      %p499 = scmp.ne.s32.totalorder %s487, %s488
      %p500 = scmp.eq.s32.totalorder %s44, 1
      %p501 = por %p499, %p500
      %p503 = scmp.ne.s32.totalorder %s488, %s502
      %p504 = scmp.eq.s32.totalorder %s44, 0
      %p505 = por %p503, %p504
      %s507 = sadd.s32 %s506, 1
      %p510 = scmp.eq.s32.totalorder %s38, 1
      %p511 = scmp.ne.s32.totalorder %s506, %s508
      %p512 = scmp.eq.s32.totalorder %s38, 0
      %p513 = por %p511, %p512
      %p514 = scmp.ne.s32.totalorder %s506, %s508
      %p515 = scmp.eq.s32.totalorder %s43, 1
      %p516 = por %p514, %p515
      %p517 = scmp.ne.s32.totalorder %s508, %s509
      %p518 = scmp.eq.s32.totalorder %s43, 0
      %p519 = por %p517, %p518
      %p520 = scmp.ne.s32.totalorder %s508, %s509
      %p521 = scmp.eq.s32.totalorder %s44, 1
      %p522 = por %p520, %p521
      %p524 = scmp.ne.s32.totalorder %s509, %s523
      %p525 = scmp.eq.s32.totalorder %s44, 0
      %p526 = por %p524, %p525
      %s528 = sadd.s32 %s527, 1
      %p531 = scmp.eq.s32.totalorder %s38, 1
      %p532 = scmp.ne.s32.totalorder %s527, %s529
      %p533 = scmp.eq.s32.totalorder %s38, 0
      %p534 = por %p532, %p533
      %p535 = scmp.ne.s32.totalorder %s527, %s529
      %p536 = scmp.eq.s32.totalorder %s43, 1
      %p537 = por %p535, %p536
      %p538 = scmp.ne.s32.totalorder %s529, %s530
      %p539 = scmp.eq.s32.totalorder %s43, 0
      %p540 = por %p538, %p539
      %p541 = scmp.ne.s32.totalorder %s529, %s530
      %p542 = scmp.eq.s32.totalorder %s44, 1
      %p543 = por %p541, %p542
      %p545 = scmp.ne.s32.totalorder %s530, %s544
      %p546 = scmp.eq.s32.totalorder %s44, 0
      %p547 = por %p545, %p546
      %s548 = ssub.s32 %s45, %s57
      %p549 = scmp.eq.s32.totalorder %s548, 0
      %s551 = sadd.s32 %s550, 1
      %s552 = scalar_select %p549, %s550, %s551
      %p555 = pneg %p549
      %p556 = scmp.eq.s32.totalorder %s38, 1
      %p557 = por %p555, %p556
      %p558 = scmp.ne.s32.totalorder %s550, %s553
      %p559 = scmp.eq.s32.totalorder %s38, 0
      %p560 = por %p558, %p559
      %p561 = scmp.ne.s32.totalorder %s550, %s553
      %p562 = scmp.eq.s32.totalorder %s43, 1
      %p563 = por %p561, %p562
      %p564 = scmp.ne.s32.totalorder %s553, %s554
      %p565 = scmp.eq.s32.totalorder %s43, 0
      %p566 = por %p564, %p565
      %p567 = scmp.ne.s32.totalorder %s553, %s554
      %p568 = scmp.eq.s32.totalorder %s44, 1
      %p569 = por %p567, %p568
      %p571 = scmp.ne.s32.totalorder %s554, %s570
      %p572 = scmp.eq.s32.totalorder %s44, 0
      %p573 = por %p571, %p572
      %p574 = scmp.le.s32.totalorder 1, %s38
      %p575 = scmp.lt.s32.totalorder %s38, 3
      %p576 = pnand %p574, %p575
      %p577 = pneg %p576
      // Predicated region
      $region9: #{tpu_custom_call.1} parent=5 // pred_check
        _
      $region10: #{tpu_custom_call.1} parent=5 // pred_check_branch
        %579 = sbr.rel (%p576) target = $region12
      $region11: #{tpu_custom_call.1} parent=5 // pred_region
        %s580 = ssub.s32 %s38, 1
        // Predicated region
        $region13: #{tpu_custom_call.1} parent=11 // pred_check
          %p581 = pneg %p99
        $region14: #{tpu_custom_call.1} parent=11 // pred_check_branch
          %583 = sbr.rel (%p581) target = $region16
        $region15: #{tpu_custom_call.1} parent=11 // pred_region
          %s585 = ssub.s32 64, 64
          %586 = vsyncadd [#allocation4], %s585
          %s588 = sshll.u32 [#allocation3], 4
          %s589 = int_to_ptr.vmem [resolvable:$true] %s588
          %591 = dma.hbm_to_vmem [thread:$0]  %s1, 64, %s589, [#allocation4]
        $region16: #{tpu_custom_call.1} parent=11 // pred_fallthru
          _
        // Predicated region
        $region17: #{tpu_custom_call.1} parent=11 // pred_check
          %p592 = pneg %p120
        $region18: #{tpu_custom_call.1} parent=11 // pred_check_branch
          %594 = sbr.rel (%p592) target = $region20
        $region19: #{tpu_custom_call.1} parent=11 // pred_region
          %s596 = ssub.s32 16, 16
          %597 = vsyncadd [#allocation7], %s596
          %s599 = sshll.u32 [#allocation6], 4
          %s600 = int_to_ptr.vmem [resolvable:$true] %s599
          %602 = dma.hbm_to_vmem [thread:$0]  %s2, 16, %s600, [#allocation7]
        $region20: #{tpu_custom_call.1} parent=11 // pred_fallthru
          _
        // Predicated region
        $region21: #{tpu_custom_call.1} parent=11 // pred_check
          %p603 = pneg %p141
        $region22: #{tpu_custom_call.1} parent=11 // pred_check_branch
          %605 = sbr.rel (%p603) target = $region24
        $region23: #{tpu_custom_call.1} parent=11 // pred_region
          %s607 = ssub.s32 16, 16
          %608 = vsyncadd [#allocation7], %s607
          %s610 = sshll.u32 [#allocation8], 4
          %s611 = int_to_ptr.vmem [resolvable:$true] %s610
          %613 = dma.hbm_to_vmem [thread:$0]  %s3, 16, %s611, [#allocation7]
        $region24: #{tpu_custom_call.1} parent=11 // pred_fallthru
          _
        // Predicated region
        $region25: #{tpu_custom_call.1} parent=11 // pred_check
          %p614 = pneg %p162
        $region26: #{tpu_custom_call.1} parent=11 // pred_check_branch
          %616 = sbr.rel (%p614) target = $region28
        $region27: #{tpu_custom_call.1} parent=11 // pred_region
          %s618 = ssub.s32 16, 16
          %619 = vsyncadd [#allocation10], %s618
          %s621 = sshll.u32 [#allocation9], 4
          %s622 = int_to_ptr.vmem [resolvable:$true] %s621
          %624 = dma.hbm_to_vmem [thread:$0]  %s4, 16, %s622, [#allocation10]
        $region28: #{tpu_custom_call.1} parent=11 // pred_fallthru
          _
        // Predicated region
        $region29: #{tpu_custom_call.1} parent=11 // pred_check
          %p625 = pneg %p183
        $region30: #{tpu_custom_call.1} parent=11 // pred_check_branch
          %627 = sbr.rel (%p625) target = $region32
        $region31: #{tpu_custom_call.1} parent=11 // pred_region
          _
        $region32: #{tpu_custom_call.1} parent=11 // pred_fallthru
          _
        // Predicated region
        $region33: #{tpu_custom_call.1} parent=11 // pred_check
          %p628 = pneg %p204
        $region34: #{tpu_custom_call.1} parent=11 // pred_check_branch
          %630 = sbr.rel (%p628) target = $region36
        $region35: #{tpu_custom_call.1} parent=11 // pred_region
          %s632 = ssub.s32 16, 16
          %633 = vsyncadd [#allocation10], %s632
          %s635 = sshll.u32 [#allocation11], 4
          %s636 = int_to_ptr.vmem [resolvable:$true] %s635
          %638 = dma.hbm_to_vmem [thread:$0]  %s6, 16, %s636, [#allocation10]
        $region36: #{tpu_custom_call.1} parent=11 // pred_fallthru
          _
        // Predicated region
        $region37: #{tpu_custom_call.1} parent=11 // pred_check
          %p639 = pneg %p225
        $region38: #{tpu_custom_call.1} parent=11 // pred_check_branch
          %641 = sbr.rel (%p639) target = $region40
        $region39: #{tpu_custom_call.1} parent=11 // pred_region
          %s643 = ssub.s32 16, 16
          %644 = vsyncadd [#allocation13], %s643
          %s646 = sshll.u32 [#allocation12], 4
          %s647 = int_to_ptr.vmem [resolvable:$true] %s646
          %649 = dma.hbm_to_vmem [thread:$0]  %s7, 16, %s647, [#allocation13]
        $region40: #{tpu_custom_call.1} parent=11 // pred_fallthru
          _
        // Predicated region
        $region41: #{tpu_custom_call.1} parent=11 // pred_check
          %p650 = pneg %p246
        $region42: #{tpu_custom_call.1} parent=11 // pred_check_branch
          %652 = sbr.rel (%p650) target = $region44
        $region43: #{tpu_custom_call.1} parent=11 // pred_region
          %s654 = ssub.s32 16, 16
          %655 = vsyncadd [#allocation13], %s654
          %s657 = sshll.u32 [#allocation14], 4
          %s658 = int_to_ptr.vmem [resolvable:$true] %s657
          %660 = dma.hbm_to_vmem [thread:$0]  %s8, 16, %s658, [#allocation13]
        $region44: #{tpu_custom_call.1} parent=11 // pred_fallthru
          _
        // Predicated region
        $region45: #{tpu_custom_call.1} parent=11 // pred_check
          %p661 = pneg %p267
        $region46: #{tpu_custom_call.1} parent=11 // pred_check_branch
          %663 = sbr.rel (%p661) target = $region48
        $region47: #{tpu_custom_call.1} parent=11 // pred_region
          %s665 = ssub.s32 8192, 8192
          %666 = vsyncadd [#allocation16], %s665
          %s667 = sshll.u32 [#allocation15], 4
          %s668 = int_to_ptr.vmem [resolvable:$true] %s667
          %673 = dma.hbm_to_vmem [thread:$0]  %s9, 8192, %s668, [#allocation16], 512, 512, 32
        $region48: #{tpu_custom_call.1} parent=11 // pred_fallthru
          _
        // Predicated region
        $region49: #{tpu_custom_call.1} parent=11 // pred_check
          %p674 = pneg %p288
        $region50: #{tpu_custom_call.1} parent=11 // pred_check_branch
          %676 = sbr.rel (%p674) target = $region52
        $region51: #{tpu_custom_call.1} parent=11 // pred_region
          _
        $region52: #{tpu_custom_call.1} parent=11 // pred_fallthru
          _
        // Predicated region
        $region53: #{tpu_custom_call.1} parent=11 // pred_check
          %p677 = pneg %p309
        $region54: #{tpu_custom_call.1} parent=11 // pred_check_branch
          %679 = sbr.rel (%p677) target = $region56
        $region55: #{tpu_custom_call.1} parent=11 // pred_region
          _
        $region56: #{tpu_custom_call.1} parent=11 // pred_fallthru
          _
        // Predicated region
        $region57: #{tpu_custom_call.1} parent=11 // pred_check
          %p680 = pneg %p330
        $region58: #{tpu_custom_call.1} parent=11 // pred_check_branch
          %682 = sbr.rel (%p680) target = $region60
        $region59: #{tpu_custom_call.1} parent=11 // pred_region
          _
        $region60: #{tpu_custom_call.1} parent=11 // pred_fallthru
          _
        // Predicated region
        $region61: #{tpu_custom_call.1} parent=11 // pred_check
          %p683 = pneg %p351
        $region62: #{tpu_custom_call.1} parent=11 // pred_check_branch
          %685 = sbr.rel (%p683) target = $region64
        $region63: #{tpu_custom_call.1} parent=11 // pred_region
          %s687 = ssub.s32 32768, 32768
          %688 = vsyncadd [#allocation16], %s687
          %s689 = sshll.u32 [#allocation17], 4
          %s690 = int_to_ptr.vmem [resolvable:$true] %s689
          %695 = dma.hbm_to_vmem [thread:$0]  %s13, 32768, %s690, [#allocation16], 256, 256, 16
        $region64: #{tpu_custom_call.1} parent=11 // pred_fallthru
          _
        // Predicated region
        $region65: #{tpu_custom_call.1} parent=11 // pred_check
          %p696 = pneg %p372
        $region66: #{tpu_custom_call.1} parent=11 // pred_check_branch
          %698 = sbr.rel (%p696) target = $region68
        $region67: #{tpu_custom_call.1} parent=11 // pred_region
          _
        $region68: #{tpu_custom_call.1} parent=11 // pred_fallthru
          _
        // Predicated region
        $region69: #{tpu_custom_call.1} parent=11 // pred_check
          %p699 = pneg %p393
        $region70: #{tpu_custom_call.1} parent=11 // pred_check_branch
          %701 = sbr.rel (%p699) target = $region72
        $region71: #{tpu_custom_call.1} parent=11 // pred_region
          _
        $region72: #{tpu_custom_call.1} parent=11 // pred_fallthru
          _
        // Predicated region
        $region73: #{tpu_custom_call.1} parent=11 // pred_check
          %p702 = pneg %p414
        $region74: #{tpu_custom_call.1} parent=11 // pred_check_branch
          %704 = sbr.rel (%p702) target = $region76
        $region75: #{tpu_custom_call.1} parent=11 // pred_region
          _
        $region76: #{tpu_custom_call.1} parent=11 // pred_fallthru
          _
        // Predicated region
        $region77: #{tpu_custom_call.1} parent=11 // pred_check
          %p705 = pneg %p435
        $region78: #{tpu_custom_call.1} parent=11 // pred_check_branch
          %707 = sbr.rel (%p705) target = $region80
        $region79: #{tpu_custom_call.1} parent=11 // pred_region
          %s709 = ssub.s32 8192, 8192
          %710 = vsyncadd [#allocation19], %s709
          %s711 = sshll.u32 [#allocation18], 4
          %s712 = int_to_ptr.vmem [resolvable:$true] %s711
          %717 = dma.hbm_to_vmem [thread:$0]  %s17, 8192, %s712, [#allocation19], 128, 128, 8
        $region80: #{tpu_custom_call.1} parent=11 // pred_fallthru
          _
        // Predicated region
        $region81: #{tpu_custom_call.1} parent=11 // pred_check
          %p718 = pneg %p456
        $region82: #{tpu_custom_call.1} parent=11 // pred_check_branch
          %720 = sbr.rel (%p718) target = $region84
        $region83: #{tpu_custom_call.1} parent=11 // pred_region
          _
        $region84: #{tpu_custom_call.1} parent=11 // pred_fallthru
          _
        // Predicated region
        $region85: #{tpu_custom_call.1} parent=11 // pred_check
          %p721 = pneg %p477
        $region86: #{tpu_custom_call.1} parent=11 // pred_check_branch
          %723 = sbr.rel (%p721) target = $region88
        $region87: #{tpu_custom_call.1} parent=11 // pred_region
          _
        $region88: #{tpu_custom_call.1} parent=11 // pred_fallthru
          _
        // Predicated region
        $region89: #{tpu_custom_call.1} parent=11 // pred_check
          %p724 = pneg %p498
        $region90: #{tpu_custom_call.1} parent=11 // pred_check_branch
          %726 = sbr.rel (%p724) target = $region92
        $region91: #{tpu_custom_call.1} parent=11 // pred_region
          _
        $region92: #{tpu_custom_call.1} parent=11 // pred_fallthru
          _
        // Predicated region
        $region93: #{tpu_custom_call.1} parent=11 // pred_check
          %p727 = pneg %p519
        $region94: #{tpu_custom_call.1} parent=11 // pred_check_branch
          %729 = sbr.rel (%p727) target = $region96
        $region95: #{tpu_custom_call.1} parent=11 // pred_region
          %s731 = ssub.s32 2048, 2048
          %732 = vsyncadd [#allocation19], %s731
          %s733 = sshll.u32 [#allocation20], 4
          %s734 = int_to_ptr.vmem [resolvable:$true] %s733
          %739 = dma.hbm_to_vmem [thread:$0]  %s21, 2048, %s734, [#allocation19], 64, 64, 4
        $region96: #{tpu_custom_call.1} parent=11 // pred_fallthru
          _
        // Predicated region
        $region97: #{tpu_custom_call.1} parent=11 // pred_check
          %p740 = pneg %p540
        $region98: #{tpu_custom_call.1} parent=11 // pred_check_branch
          %742 = sbr.rel (%p740) target = $region100
        $region99: #{tpu_custom_call.1} parent=11 // pred_region
          _
        $region100: #{tpu_custom_call.1} parent=11 // pred_fallthru
          _
      $region12: #{tpu_custom_call.1} parent=5 // pred_fallthru
        _
      %p743 = scmp.lt.s32.totalorder %s38, 2
      // Predicated region
      $region101: #{tpu_custom_call.1} parent=5 // pred_check
        %p744 = pneg %p743
      $region102: #{tpu_custom_call.1} parent=5 // pred_check_branch
        %746 = sbr.rel (%p744) target = $region104
      $region103: #{tpu_custom_call.1} parent=5 // pred_region
        // Predicated region
        $region105: #{tpu_custom_call.1} parent=103 // pred_check
          %p747 = pneg %p72
        $region106: #{tpu_custom_call.1} parent=103 // pred_check_branch
          %749 = sbr.rel (%p747) target = $region108
        $region107: #{tpu_custom_call.1} parent=103 // pred_region
          %p750 = scmp.lt.s32.totalorder %s45, 1
          %s751 = scalar_select %p750, %s45, 1
          %p752 = scmp.lt.s32.totalorder %s46, 0
          %s753 = scalar_select %p752, %s46, 0
          %s754 = sadd.s32 %s753, %s751
          %s755 = smul.addr %s754, 8
          %s756 = scalar_lea.vmem %s0, %s755
        $region108: #{tpu_custom_call.1} parent=103 // pred_fallthru
          _
      $region104: #{tpu_custom_call.1} parent=5 // pred_fallthru
        _
      %p757 = scmp.le.s32.totalorder 1, %s38
      %p758 = scmp.lt.s32.totalorder %s38, 3
      %p759 = pnand %p757, %p758
      %p760 = pneg %p759
      // Predicated region
      $region109: #{tpu_custom_call.1} parent=5 // pred_check
        _
      $region110: #{tpu_custom_call.1} parent=5 // pred_check_branch
        %762 = sbr.rel (%p759) target = $region112
      $region111: #{tpu_custom_call.1} parent=5 // pred_region
        %s763 = ssub.s32 %s38, 1
        // Predicated region
        $region113: #{tpu_custom_call.1} parent=111 // pred_check
          %p764 = pneg %p99
        $region114: #{tpu_custom_call.1} parent=111 // pred_check_branch
          %766 = sbr.rel (%p764) target = $region116
        $region115: #{tpu_custom_call.1} parent=111 // pred_region
          %767 = dma.done [#allocation4], 64
        $region116: #{tpu_custom_call.1} parent=111 // pred_fallthru
          _
        // Predicated region
        $region117: #{tpu_custom_call.1} parent=111 // pred_check
          %p768 = pneg %p120
        $region118: #{tpu_custom_call.1} parent=111 // pred_check_branch
          %770 = sbr.rel (%p768) target = $region120
        $region119: #{tpu_custom_call.1} parent=111 // pred_region
          %771 = dma.done [#allocation7], 16
        $region120: #{tpu_custom_call.1} parent=111 // pred_fallthru
          _
        // Predicated region
        $region121: #{tpu_custom_call.1} parent=111 // pred_check
          %p772 = pneg %p141
        $region122: #{tpu_custom_call.1} parent=111 // pred_check_branch
          %774 = sbr.rel (%p772) target = $region124
        $region123: #{tpu_custom_call.1} parent=111 // pred_region
          %775 = dma.done [#allocation7], 16
        $region124: #{tpu_custom_call.1} parent=111 // pred_fallthru
          _
        // Predicated region
        $region125: #{tpu_custom_call.1} parent=111 // pred_check
          %p776 = pneg %p162
        $region126: #{tpu_custom_call.1} parent=111 // pred_check_branch
          %778 = sbr.rel (%p776) target = $region128
        $region127: #{tpu_custom_call.1} parent=111 // pred_region
          %779 = dma.done [#allocation10], 16
        $region128: #{tpu_custom_call.1} parent=111 // pred_fallthru
          _
        // Predicated region
        $region129: #{tpu_custom_call.1} parent=111 // pred_check
          %p780 = pneg %p204
        $region130: #{tpu_custom_call.1} parent=111 // pred_check_branch
          %782 = sbr.rel (%p780) target = $region132
        $region131: #{tpu_custom_call.1} parent=111 // pred_region
          %783 = dma.done [#allocation10], 16
        $region132: #{tpu_custom_call.1} parent=111 // pred_fallthru
          _
        // Predicated region
        $region133: #{tpu_custom_call.1} parent=111 // pred_check
          %p784 = pneg %p225
        $region134: #{tpu_custom_call.1} parent=111 // pred_check_branch
          %786 = sbr.rel (%p784) target = $region136
        $region135: #{tpu_custom_call.1} parent=111 // pred_region
          %787 = dma.done [#allocation13], 16
        $region136: #{tpu_custom_call.1} parent=111 // pred_fallthru
          _
        // Predicated region
        $region137: #{tpu_custom_call.1} parent=111 // pred_check
          %p788 = pneg %p246
        $region138: #{tpu_custom_call.1} parent=111 // pred_check_branch
          %790 = sbr.rel (%p788) target = $region140
        $region139: #{tpu_custom_call.1} parent=111 // pred_region
          %791 = dma.done [#allocation13], 16
        $region140: #{tpu_custom_call.1} parent=111 // pred_fallthru
          _
        // Predicated region
        $region141: #{tpu_custom_call.1} parent=111 // pred_check
          %p792 = pneg %p267
        $region142: #{tpu_custom_call.1} parent=111 // pred_check_branch
          %794 = sbr.rel (%p792) target = $region144
        $region143: #{tpu_custom_call.1} parent=111 // pred_region
          %795 = dma.done [#allocation16], 8192
        $region144: #{tpu_custom_call.1} parent=111 // pred_fallthru
          _
        // Predicated region
        $region145: #{tpu_custom_call.1} parent=111 // pred_check
          %p796 = pneg %p351
        $region146: #{tpu_custom_call.1} parent=111 // pred_check_branch
          %798 = sbr.rel (%p796) target = $region148
        $region147: #{tpu_custom_call.1} parent=111 // pred_region
          %799 = dma.done [#allocation16], 32768
        $region148: #{tpu_custom_call.1} parent=111 // pred_fallthru
          _
        // Predicated region
        $region149: #{tpu_custom_call.1} parent=111 // pred_check
          %p800 = pneg %p435
        $region150: #{tpu_custom_call.1} parent=111 // pred_check_branch
          %802 = sbr.rel (%p800) target = $region152
        $region151: #{tpu_custom_call.1} parent=111 // pred_region
          %803 = dma.done [#allocation19], 8192
        $region152: #{tpu_custom_call.1} parent=111 // pred_fallthru
          _
        // Predicated region
        $region153: #{tpu_custom_call.1} parent=111 // pred_check
          %p804 = pneg %p519
        $region154: #{tpu_custom_call.1} parent=111 // pred_check_branch
          %806 = sbr.rel (%p804) target = $region156
        $region155: #{tpu_custom_call.1} parent=111 // pred_region
          %807 = dma.done [#allocation19], 2048
        $region156: #{tpu_custom_call.1} parent=111 // pred_fallthru
          _
        %p808 = scmp.lt.s32.totalorder %s47, 1
        %s809 = scalar_select %p808, %s47, 1
        %p810 = scmp.lt.s32.totalorder %s48, 0
        %s811 = scalar_select %p810, %s48, 0
        %s812 = sadd.s32 %s811, %s809
        %s813 = smul.addr %s812, 8
        %s814 = scalar_lea.vmem %s0, %s813
        %p815 = pneg %p78
        %p816 = pneg %p75
        %p817 = pneg %p99
        %p818 = pneg %p96
        %p819 = pneg %p120
        %p820 = pneg %p117
        %p821 = pneg %p141
        %p822 = pneg %p138
        %p823 = pneg %p162
        %p824 = pneg %p159
        %p825 = pneg %p183
        %p826 = pneg %p180
        %p827 = pneg %p204
        %p828 = pneg %p201
        %p829 = pneg %p225
        %p830 = pneg %p222
        %p831 = pneg %p246
        %p832 = pneg %p243
        %p833 = pneg %p267
        %p834 = pneg %p264
        %p835 = pneg %p288
        %p836 = pneg %p285
        %p837 = pneg %p309
        %p838 = pneg %p306
        %p839 = pneg %p330
        %p840 = pneg %p327
        %p841 = pneg %p351
        %p842 = pneg %p348
        %p843 = pneg %p372
        %p844 = pneg %p369
        %p845 = pneg %p393
        %p846 = pneg %p390
        %p847 = pneg %p414
        %p848 = pneg %p411
        %p849 = pneg %p435
        %p850 = pneg %p432
        %p851 = pneg %p456
        %p852 = pneg %p453
        %p853 = pneg %p477
        %p854 = pneg %p474
        %p855 = pneg %p498
        %p856 = pneg %p495
        %p857 = pneg %p519
        %p858 = pneg %p516
        %p859 = pneg %p540
        %p860 = pneg %p537
        %p861 = pneg %p566
        %p862 = pneg %p563
        %s863 = sand.u32 %s553, 1
        %s864 = scalar_lea.sflag [#allocation5], %s863
        %s865 = sand.u32 %s553, 1
        %s866 = smul.addr %s865, 8
        %s867 = scalar_lea.vmem [#allocation21], %s866
        %p868 = scmp.lt.s32.totalorder %s47, 1
        %s869 = scalar_select %p868, %s47, 1
        %p870 = scmp.lt.s32.totalorder %s48, 0
        %s871 = scalar_select %p870, %s48, 0
        %s872 = sadd.s32 %s871, %s869
        %s873 = smul.addr %s872, 8
        %s874 = scalar_lea.vmem %s0, %s873
        %p876 = scmp.eq.s32.totalorder %s48, 0
        // Predicated region
        $region157: #{tpu_custom_call.1} parent=111 // pred_check
          %p877 = pneg %p876
        $region158: #{tpu_custom_call.1} parent=111 // pred_check_branch
          %879 = sbr.rel (%p877) target = $region160
        $region159: #{tpu_custom_call.1} parent=111 // pred_region
          %880 = vst [vmem:[#allocation2] sm:$0xff] -inf
          %881 = vst [vmem:[#allocation2 + $0x8] sm:$0xff] -inf
          %882 = vst [vmem:[#allocation2 + $0x10] sm:$0xff] -inf
          %883 = vst [vmem:[#allocation2 + $0x18] sm:$0xff] -inf
          %884 = vst [vmem:[#allocation2 + $0x20] sm:$0xff] -inf
          %885 = vst [vmem:[#allocation2 + $0x28] sm:$0xff] -inf
          %886 = vst [vmem:[#allocation2 + $0x30] sm:$0xff] -inf
          %887 = vst [vmem:[#allocation2 + $0x38] sm:$0xff] -inf
        $region160: #{tpu_custom_call.1} parent=111 // pred_fallthru
          _
        %v888 = vld [vmem:[%s874] sm:$0x1f]
        %v889 = vpack.c.bf16 %v888, %v888
        %v890 = vld [vmem:[#allocation3] sm:$0x7]
        %v891 = vld [vmem:[#allocation6] sm:$0x1]
        %v893 = vlaneseq
        %v894 = vshrl.u32 %v893, 7
        %v895 = vsub.s32 0, %v894
        %v896 = vrot.slane %v891, %v895
        %898 = vxpose.xlu0.c.b16.start [1/8] %v889, 128
        %899 = vxpose.xlu0.c.b16.cont [2/8] 0, 128
        %900 = vxpose.xlu0.c.b16.cont [3/8] 0, 128
        %901 = vxpose.xlu0.c.b16.cont [4/8] 0, 128
        %902 = vxpose.xlu0.c.b16.cont [5/8] 0, 128
        %903 = vxpose.xlu0.c.b16.cont [6/8] 0, 128
        %904 = vxpose.xlu0.c.b16.cont [7/8] 0, 128
        %905 = vxpose.xlu0.c.b16.end [8/8] 0, 128
        %v906 = vpop.trf.xlu0
        %v907 = vpop.trf.xlu0
        %v908 = vpop.trf.xlu0
        %v909 = vpop.trf.xlu0
        %v910 = vpop.trf.xlu0
        %v911 = vpop.trf.xlu0
        %v912 = vpop.trf.xlu0
        %v913 = vpop.trf.xlu0
        %vm914 = vcmask 39936
        %v916 = vsel %vm914, %v906, 0
        %vm918 = vcmask 1041408
        %vm919 = vcmask 1042432
        %v920 = vsel %vm918, 4294967295, 65535
        %v921 = vsel %vm919, %v920, 0
        %v923 = vand.u32 %v890, %v921
        %925 = vmatprep.subr.bf16.mxu0 0
        %926 = vmatpush1.bf16.msra.mxu0 %v923
        %927 = vmatprep.subr.bf16.mxu0 0
        %928 = vmatpush1.bf16.msra.mxu0 0
        %929 = vmatprep.subr.bf16.mxu0 0
        %930 = vmatpush1.bf16.msra.mxu0 0
        %931 = vmatprep.subr.bf16.mxu0 0
        %932 = vmatpush1.bf16.msra.mxu0 0
        %933 = vmatprep.subr.bf16.mxu0 0
        %934 = vmatpush1.bf16.msra.mxu0 0
        %935 = vmatprep.subr.bf16.mxu0 0
        %936 = vmatpush1.bf16.msra.mxu0 0
        %937 = vmatprep.subr.bf16.mxu0 0
        %938 = vmatpush1.bf16.msra.mxu0 0
        %939 = vmatprep.subr.bf16.mxu0 0
        %940 = vmatpush1.bf16.msra.mxu0 0
        %941 = vmatprep.subr.bf16.mxu0 0
        %942 = vmatpush1.bf16.msra.mxu0 0
        %943 = vmatprep.subr.bf16.mxu0 0
        %944 = vmatpush1.bf16.msra.mxu0 0
        %945 = vmatprep.subr.bf16.mxu0 0
        %946 = vmatpush1.bf16.msra.mxu0 0
        %947 = vmatprep.subr.bf16.mxu0 0
        %948 = vmatpush1.bf16.msra.mxu0 0
        %949 = vmatprep.subr.bf16.mxu0 0
        %950 = vmatpush1.bf16.msra.mxu0 0
        %951 = vmatprep.subr.bf16.mxu0 0
        %952 = vmatpush1.bf16.msra.mxu0 0
        %953 = vmatprep.subr.bf16.mxu0 0
        %954 = vmatpush1.bf16.msra.mxu0 0
        %955 = vmatprep.subr.bf16.mxu0 0
        %956 = vmatpush1.bf16.msra.mxu0 0
        %957 = vmatprep.mubr.bf16.mxu0 0
        %958 = vmatmul.mubr.bf16.gmra.mrb[0].mxu0 %v916
        %v959 = vpop.f32.mrb[0].mxu0
        %v960 = vadd.f32 %v896, %v959
        %v961 = vpop.f32.mrb[0].mxu0
        %v962 = vpop.f32.mrb[0].mxu0
        %v963 = vadd.f32 %v896, %v962
        %v964 = vpop.f32.mrb[0].mxu0
        %965 = vdwg.mxu0
        %v966 = vld [vmem:[#allocation8] sm:$0x1]
        %v968 = vlaneseq
        %v969 = vshrl.u32 %v968, 7
        %v970 = vsub.s32 0, %v969
        %v971 = vrot.slane %v966, %v970
        %v973 = vmul.f32 %v960, %v971
        %v974 = vmul.f32 %v963, %v971
        %v975 = vld [vmem:[#allocation9] sm:$0x1]
        %v977 = vlaneseq
        %v978 = vshrl.u32 %v977, 7
        %v979 = vsub.s32 0, %v978
        %v980 = vrot.slane %v975, %v979
        %v982 = vadd.f32 %v973, %v980
        %v983 = vadd.f32 %v974, %v980
        %v984 = vmax.f32 %v982, 0.0
        %v985 = vmax.f32 %v983, 0.0
        %v986 = vpack.c.bf16 %v985, %v984
        %v987 = vld [vmem:[%s5] sm:$0xf]
        %v988 = vld [vmem:[%s5 + $0x4] sm:$0xf]
        %v989 = vld [vmem:[%s5 + $0x8] sm:$0xf]
        %v990 = vld [vmem:[%s5 + $0xc] sm:$0xf]
        %v991 = vld [vmem:[%s5 + $0x10] sm:$0xf]
        %v992 = vld [vmem:[%s5 + $0x14] sm:$0xf]
        %v993 = vld [vmem:[%s5 + $0x18] sm:$0xf]
        %v994 = vld [vmem:[%s5 + $0x1c] sm:$0xf]
        %v995 = vld [vmem:[#allocation11] sm:$0x1]
        %v997 = vlaneseq
        %v998 = vshrl.u32 %v997, 7
        %v999 = vsub.s32 0, %v998
        %v1000 = vrot.slane %v995, %v999
        %v1010 = vunpack.c.l.b16 %v987
        %v1011 = vunpack.c.l.b16 %v988
        %v1012 = vunpack.c.l.b16 %v989
        %v1013 = vunpack.c.l.b16 %v990
        %v1014 = vunpack.c.l.b16 %v991
        %v1015 = vunpack.c.l.b16 %v992
        %v1016 = vunpack.c.l.b16 %v993
        %v1017 = vunpack.c.l.b16 %v994
        %v1018 = vpack.c.b16 %v1011, %v1010
        %v1019 = vpack.c.b16 %v1013, %v1012
        %v1020 = vpack.c.b16 %v1015, %v1014
        %v1021 = vpack.c.b16 %v1017, %v1016
        %vm1026 = vcmask 523264
        %v1028 = vsel %vm1026, %v986, 0
        %1030 = vmatprep.subr.bf16.mxu0 0
        %1031 = vmatpush1.bf16.msra.mxu0 %v1018
        %1032 = vmatprep.subr.bf16.mxu0 0
        %1033 = vmatpush1.bf16.msra.mxu0 %v1019
        %1034 = vmatprep.subr.bf16.mxu0 0
        %1035 = vmatpush1.bf16.msra.mxu0 %v1020
        %1036 = vmatprep.subr.bf16.mxu0 0
        %1037 = vmatpush1.bf16.msra.mxu0 %v1021
        %1038 = vmatprep.subr.bf16.mxu0 0
        %1039 = vmatpush1.bf16.msra.mxu0 0
        %1040 = vmatprep.subr.bf16.mxu0 0
        %1041 = vmatpush1.bf16.msra.mxu0 0
        %1042 = vmatprep.subr.bf16.mxu0 0
        %1043 = vmatpush1.bf16.msra.mxu0 0
        %1044 = vmatprep.subr.bf16.mxu0 0
        %1045 = vmatpush1.bf16.msra.mxu0 0
        %1046 = vmatprep.subr.bf16.mxu0 0
        %1047 = vmatpush1.bf16.msra.mxu0 0
        %1048 = vmatprep.subr.bf16.mxu0 0
        %1049 = vmatpush1.bf16.msra.mxu0 0
        %1050 = vmatprep.subr.bf16.mxu0 0
        %1051 = vmatpush1.bf16.msra.mxu0 0
        %1052 = vmatprep.subr.bf16.mxu0 0
        %1053 = vmatpush1.bf16.msra.mxu0 0
        %1054 = vmatprep.subr.bf16.mxu0 0
        %1055 = vmatpush1.bf16.msra.mxu0 0
        %1056 = vmatprep.subr.bf16.mxu0 0
        %1057 = vmatpush1.bf16.msra.mxu0 0
        %1058 = vmatprep.subr.bf16.mxu0 0
        %1059 = vmatpush1.bf16.msra.mxu0 0
        %1060 = vmatprep.subr.bf16.mxu0 0
        %1061 = vmatpush1.bf16.msra.mxu0 0
        %1062 = vmatprep.mubr.bf16.mxu0 0
        %1063 = vmatmul.mubr.bf16.gmra.mrb[0].mxu0 %v1028
        %v1064 = vpop.f32.mrb[0].mxu0
        %v1065 = vadd.f32 %v1000, %v1064
        %v1066 = vpop.f32.mrb[0].mxu0
        %v1067 = vpop.f32.mrb[0].mxu0
        %v1068 = vadd.f32 %v1000, %v1067
        %v1069 = vpop.f32.mrb[0].mxu0
        %1070 = vdwg.mxu0
        %v1071 = vld [vmem:[#allocation12] sm:$0x1]
        %v1073 = vlaneseq
        %v1074 = vshrl.u32 %v1073, 7
        %v1075 = vsub.s32 0, %v1074
        %v1076 = vrot.slane %v1071, %v1075
        %v1078 = vmul.f32 %v1065, %v1076
        %v1079 = vmul.f32 %v1068, %v1076
        %v1080 = vld [vmem:[#allocation14] sm:$0x1]
        %v1082 = vlaneseq
        %v1083 = vshrl.u32 %v1082, 7
        %v1084 = vsub.s32 0, %v1083
        %v1085 = vrot.slane %v1080, %v1084
        %v1087 = vadd.f32 %v1078, %v1085
        %v1088 = vadd.f32 %v1079, %v1085
        %v1089 = vmax.f32 %v1087, 0.0
        %v1090 = vmax.f32 %v1088, 0.0
        %v1091 = vpack.c.bf16 %v1090, %v1089
        %v1092 = vld [vmem:[#allocation15] sm:$0xff]
        %v1093 = vld [vmem:[#allocation15 + $0x8] sm:$0xff]
        %v1094 = vld [vmem:[#allocation15 + $0x10] sm:$0xff]
        %v1095 = vld [vmem:[#allocation15 + $0x18] sm:$0xff]
        %v1096 = vld [vmem:[#allocation15 + $0x20] sm:$0xff]
        %v1097 = vld [vmem:[#allocation15 + $0x28] sm:$0xff]
        %v1098 = vld [vmem:[#allocation15 + $0x30] sm:$0xff]
        %v1099 = vld [vmem:[#allocation15 + $0x38] sm:$0xff]
        %v1100 = vld [vmem:[#allocation15 + $0x40] sm:$0xff]
        %v1101 = vld [vmem:[#allocation15 + $0x48] sm:$0xff]
        %v1102 = vld [vmem:[#allocation15 + $0x50] sm:$0xff]
        %v1103 = vld [vmem:[#allocation15 + $0x58] sm:$0xff]
        %v1104 = vld [vmem:[#allocation15 + $0x60] sm:$0xff]
        %v1105 = vld [vmem:[#allocation15 + $0x68] sm:$0xff]
        %v1106 = vld [vmem:[#allocation15 + $0x70] sm:$0xff]
        %v1107 = vld [vmem:[#allocation15 + $0x78] sm:$0xff]
        %v1108 = vld [vmem:[#allocation15 + $0x80] sm:$0xff]
        %v1109 = vld [vmem:[#allocation15 + $0x88] sm:$0xff]
        %v1110 = vld [vmem:[#allocation15 + $0x90] sm:$0xff]
        %v1111 = vld [vmem:[#allocation15 + $0x98] sm:$0xff]
        %v1112 = vld [vmem:[#allocation15 + $0xa0] sm:$0xff]
        %v1113 = vld [vmem:[#allocation15 + $0xa8] sm:$0xff]
        %v1114 = vld [vmem:[#allocation15 + $0xb0] sm:$0xff]
        %v1115 = vld [vmem:[#allocation15 + $0xb8] sm:$0xff]
        %v1116 = vld [vmem:[#allocation15 + $0xc0] sm:$0xff]
        %v1117 = vld [vmem:[#allocation15 + $0xc8] sm:$0xff]
        %v1118 = vld [vmem:[#allocation15 + $0xd0] sm:$0xff]
        %v1119 = vld [vmem:[#allocation15 + $0xd8] sm:$0xff]
        %v1120 = vld [vmem:[#allocation15 + $0xe0] sm:$0xff]
        %v1121 = vld [vmem:[#allocation15 + $0xe8] sm:$0xff]
        %v1122 = vld [vmem:[#allocation15 + $0xf0] sm:$0xff]
        %v1123 = vld [vmem:[#allocation15 + $0xf8] sm:$0xff]
        %v1124 = vld [vmem:[#allocation15 + $0x100] sm:$0xff]
        %v1125 = vld [vmem:[#allocation15 + $0x108] sm:$0xff]
        %v1126 = vld [vmem:[#allocation15 + $0x110] sm:$0xff]
        %v1127 = vld [vmem:[#allocation15 + $0x118] sm:$0xff]
        %v1128 = vld [vmem:[#allocation15 + $0x120] sm:$0xff]
        %v1129 = vld [vmem:[#allocation15 + $0x128] sm:$0xff]
        %v1130 = vld [vmem:[#allocation15 + $0x130] sm:$0xff]
        %v1131 = vld [vmem:[#allocation15 + $0x138] sm:$0xff]
        %v1132 = vld [vmem:[#allocation15 + $0x140] sm:$0xff]
        %v1133 = vld [vmem:[#allocation15 + $0x148] sm:$0xff]
        %v1134 = vld [vmem:[#allocation15 + $0x150] sm:$0xff]
        %v1135 = vld [vmem:[#allocation15 + $0x158] sm:$0xff]
        %v1136 = vld [vmem:[#allocation15 + $0x160] sm:$0xff]
        %v1137 = vld [vmem:[#allocation15 + $0x168] sm:$0xff]
        %v1138 = vld [vmem:[#allocation15 + $0x170] sm:$0xff]
        %v1139 = vld [vmem:[#allocation15 + $0x178] sm:$0xff]
        %v1140 = vld [vmem:[#allocation15 + $0x180] sm:$0xff]
        %v1141 = vld [vmem:[#allocation15 + $0x188] sm:$0xff]
        %v1142 = vld [vmem:[#allocation15 + $0x190] sm:$0xff]
        %v1143 = vld [vmem:[#allocation15 + $0x198] sm:$0xff]
        %v1144 = vld [vmem:[#allocation15 + $0x1a0] sm:$0xff]
        %v1145 = vld [vmem:[#allocation15 + $0x1a8] sm:$0xff]
        %v1146 = vld [vmem:[#allocation15 + $0x1b0] sm:$0xff]
        %v1147 = vld [vmem:[#allocation15 + $0x1b8] sm:$0xff]
        %v1148 = vld [vmem:[#allocation15 + $0x1c0] sm:$0xff]
        %v1149 = vld [vmem:[#allocation15 + $0x1c8] sm:$0xff]
        %v1150 = vld [vmem:[#allocation15 + $0x1d0] sm:$0xff]
        %v1151 = vld [vmem:[#allocation15 + $0x1d8] sm:$0xff]
        %v1152 = vld [vmem:[#allocation15 + $0x1e0] sm:$0xff]
        %v1153 = vld [vmem:[#allocation15 + $0x1e8] sm:$0xff]
        %v1154 = vld [vmem:[#allocation15 + $0x1f0] sm:$0xff]
        %v1155 = vld [vmem:[#allocation15 + $0x1f8] sm:$0xff]
        %v1156 = vld [vmem:[%s10] sm:$0xff]
        %v1158 = vlaneseq
        %v1159 = vshrl.u32 %v1158, 7
        %v1160 = vsub.s32 0, %v1159
        %v1161 = vrot.slane %v1156, %v1160
        %v1162 = vlaneseq
        %v1163 = vshrl.u32 %v1162, 7
        %v1164 = vsub.s32 1, %v1163
        %v1165 = vrot.slane %v1156, %v1164
        %v1166 = vlaneseq
        %v1167 = vshrl.u32 %v1166, 7
        %v1168 = vsub.s32 2, %v1167
        %v1169 = vrot.slane %v1156, %v1168
        %v1170 = vlaneseq
        %v1171 = vshrl.u32 %v1170, 7
        %v1172 = vsub.s32 3, %v1171
        %v1173 = vrot.slane %v1156, %v1172
        %v1174 = vlaneseq
        %v1175 = vshrl.u32 %v1174, 7
        %v1176 = vsub.s32 4, %v1175
        %v1177 = vrot.slane %v1156, %v1176
        %v1178 = vlaneseq
        %v1179 = vshrl.u32 %v1178, 7
        %v1180 = vsub.s32 5, %v1179
        %v1181 = vrot.slane %v1156, %v1180
        %v1182 = vlaneseq
        %v1183 = vshrl.u32 %v1182, 7
        %v1184 = vsub.s32 6, %v1183
        %v1185 = vrot.slane %v1156, %v1184
        %v1186 = vlaneseq
        %v1187 = vshrl.u32 %v1186, 7
        %v1188 = vsub.s32 7, %v1187
        %v1189 = vrot.slane %v1156, %v1188
        %v1262 = vunpack.c.l.b16 %v1092
        %v1263 = vunpack.c.h.b16 %v1092
        %v1264 = vunpack.c.l.b16 %v1093
        %v1265 = vunpack.c.h.b16 %v1093
        %v1266 = vunpack.c.l.b16 %v1094
        %v1267 = vunpack.c.h.b16 %v1094
        %v1268 = vunpack.c.l.b16 %v1095
        %v1269 = vunpack.c.h.b16 %v1095
        %v1270 = vunpack.c.l.b16 %v1096
        %v1271 = vunpack.c.h.b16 %v1096
        %v1272 = vunpack.c.l.b16 %v1097
        %v1273 = vunpack.c.h.b16 %v1097
        %v1274 = vunpack.c.l.b16 %v1098
        %v1275 = vunpack.c.h.b16 %v1098
        %v1276 = vunpack.c.l.b16 %v1099
        %v1277 = vunpack.c.h.b16 %v1099
        %v1278 = vunpack.c.l.b16 %v1100
        %v1279 = vunpack.c.h.b16 %v1100
        %v1280 = vunpack.c.l.b16 %v1101
        %v1281 = vunpack.c.h.b16 %v1101
        %v1282 = vunpack.c.l.b16 %v1102
        %v1283 = vunpack.c.h.b16 %v1102
        %v1284 = vunpack.c.l.b16 %v1103
        %v1285 = vunpack.c.h.b16 %v1103
        %v1286 = vunpack.c.l.b16 %v1104
        %v1287 = vunpack.c.h.b16 %v1104
        %v1288 = vunpack.c.l.b16 %v1105
        %v1289 = vunpack.c.h.b16 %v1105
        %v1290 = vunpack.c.l.b16 %v1106
        %v1291 = vunpack.c.h.b16 %v1106
        %v1292 = vunpack.c.l.b16 %v1107
        %v1293 = vunpack.c.h.b16 %v1107
        %v1294 = vunpack.c.l.b16 %v1108
        %v1295 = vunpack.c.h.b16 %v1108
        %v1296 = vunpack.c.l.b16 %v1109
        %v1297 = vunpack.c.h.b16 %v1109
        %v1298 = vunpack.c.l.b16 %v1110
        %v1299 = vunpack.c.h.b16 %v1110
        %v1300 = vunpack.c.l.b16 %v1111
        %v1301 = vunpack.c.h.b16 %v1111
        %v1302 = vunpack.c.l.b16 %v1112
        %v1303 = vunpack.c.h.b16 %v1112
        %v1304 = vunpack.c.l.b16 %v1113
        %v1305 = vunpack.c.h.b16 %v1113
        %v1306 = vunpack.c.l.b16 %v1114
        %v1307 = vunpack.c.h.b16 %v1114
        %v1308 = vunpack.c.l.b16 %v1115
        %v1309 = vunpack.c.h.b16 %v1115
        %v1310 = vunpack.c.l.b16 %v1116
        %v1311 = vunpack.c.h.b16 %v1116
        %v1312 = vunpack.c.l.b16 %v1117
        %v1313 = vunpack.c.h.b16 %v1117
        %v1314 = vunpack.c.l.b16 %v1118
        %v1315 = vunpack.c.h.b16 %v1118
        %v1316 = vunpack.c.l.b16 %v1119
        %v1317 = vunpack.c.h.b16 %v1119
        %v1318 = vunpack.c.l.b16 %v1120
        %v1319 = vunpack.c.h.b16 %v1120
        %v1320 = vunpack.c.l.b16 %v1121
        %v1321 = vunpack.c.h.b16 %v1121
        %v1322 = vunpack.c.l.b16 %v1122
        %v1323 = vunpack.c.h.b16 %v1122
        %v1324 = vunpack.c.l.b16 %v1123
        %v1325 = vunpack.c.h.b16 %v1123
        %v1326 = vunpack.c.l.b16 %v1124
        %v1327 = vunpack.c.h.b16 %v1124
        %v1328 = vunpack.c.l.b16 %v1125
        %v1329 = vunpack.c.h.b16 %v1125
        %v1330 = vunpack.c.l.b16 %v1126
        %v1331 = vunpack.c.h.b16 %v1126
        %v1332 = vunpack.c.l.b16 %v1127
        %v1333 = vunpack.c.h.b16 %v1127
        %v1334 = vunpack.c.l.b16 %v1128
        %v1335 = vunpack.c.h.b16 %v1128
        %v1336 = vunpack.c.l.b16 %v1129
        %v1337 = vunpack.c.h.b16 %v1129
        %v1338 = vunpack.c.l.b16 %v1130
        %v1339 = vunpack.c.h.b16 %v1130
        %v1340 = vunpack.c.l.b16 %v1131
        %v1341 = vunpack.c.h.b16 %v1131
        %v1342 = vunpack.c.l.b16 %v1132
        %v1343 = vunpack.c.h.b16 %v1132
        %v1344 = vunpack.c.l.b16 %v1133
        %v1345 = vunpack.c.h.b16 %v1133
        %v1346 = vunpack.c.l.b16 %v1134
        %v1347 = vunpack.c.h.b16 %v1134
        %v1348 = vunpack.c.l.b16 %v1135
        %v1349 = vunpack.c.h.b16 %v1135
        %v1350 = vunpack.c.l.b16 %v1136
        %v1351 = vunpack.c.h.b16 %v1136
        %v1352 = vunpack.c.l.b16 %v1137
        %v1353 = vunpack.c.h.b16 %v1137
        %v1354 = vunpack.c.l.b16 %v1138
        %v1355 = vunpack.c.h.b16 %v1138
        %v1356 = vunpack.c.l.b16 %v1139
        %v1357 = vunpack.c.h.b16 %v1139
        %v1358 = vunpack.c.l.b16 %v1140
        %v1359 = vunpack.c.h.b16 %v1140
        %v1360 = vunpack.c.l.b16 %v1141
        %v1361 = vunpack.c.h.b16 %v1141
        %v1362 = vunpack.c.l.b16 %v1142
        %v1363 = vunpack.c.h.b16 %v1142
        %v1364 = vunpack.c.l.b16 %v1143
        %v1365 = vunpack.c.h.b16 %v1143
        %v1366 = vunpack.c.l.b16 %v1144
        %v1367 = vunpack.c.h.b16 %v1144
        %v1368 = vunpack.c.l.b16 %v1145
        %v1369 = vunpack.c.h.b16 %v1145
        %v1370 = vunpack.c.l.b16 %v1146
        %v1371 = vunpack.c.h.b16 %v1146
        %v1372 = vunpack.c.l.b16 %v1147
        %v1373 = vunpack.c.h.b16 %v1147
        %v1374 = vunpack.c.l.b16 %v1148
        %v1375 = vunpack.c.h.b16 %v1148
        %v1376 = vunpack.c.l.b16 %v1149
        %v1377 = vunpack.c.h.b16 %v1149
        %v1378 = vunpack.c.l.b16 %v1150
        %v1379 = vunpack.c.h.b16 %v1150
        %v1380 = vunpack.c.l.b16 %v1151
        %v1381 = vunpack.c.h.b16 %v1151
        %v1382 = vunpack.c.l.b16 %v1152
        %v1383 = vunpack.c.h.b16 %v1152
        %v1384 = vunpack.c.l.b16 %v1153
        %v1385 = vunpack.c.h.b16 %v1153
        %v1386 = vunpack.c.l.b16 %v1154
        %v1387 = vunpack.c.h.b16 %v1154
        %v1388 = vunpack.c.l.b16 %v1155
        %v1389 = vunpack.c.h.b16 %v1155
        %v1390 = vpack.c.b16 %v1270, %v1262
        %v1391 = vpack.c.b16 %v1271, %v1263
        %v1392 = vpack.c.b16 %v1272, %v1264
        %v1393 = vpack.c.b16 %v1273, %v1265
        %v1394 = vpack.c.b16 %v1274, %v1266
        %v1395 = vpack.c.b16 %v1275, %v1267
        %v1396 = vpack.c.b16 %v1276, %v1268
        %v1397 = vpack.c.b16 %v1277, %v1269
        %v1398 = vpack.c.b16 %v1286, %v1278
        %v1399 = vpack.c.b16 %v1287, %v1279
        %v1400 = vpack.c.b16 %v1288, %v1280
        %v1401 = vpack.c.b16 %v1289, %v1281
        %v1402 = vpack.c.b16 %v1290, %v1282
        %v1403 = vpack.c.b16 %v1291, %v1283
        %v1404 = vpack.c.b16 %v1292, %v1284
        %v1405 = vpack.c.b16 %v1293, %v1285
        %v1406 = vpack.c.b16 %v1302, %v1294
        %v1407 = vpack.c.b16 %v1303, %v1295
        %v1408 = vpack.c.b16 %v1304, %v1296
        %v1409 = vpack.c.b16 %v1305, %v1297
        %v1410 = vpack.c.b16 %v1306, %v1298
        %v1411 = vpack.c.b16 %v1307, %v1299
        %v1412 = vpack.c.b16 %v1308, %v1300
        %v1413 = vpack.c.b16 %v1309, %v1301
        %v1414 = vpack.c.b16 %v1318, %v1310
        %v1415 = vpack.c.b16 %v1319, %v1311
        %v1416 = vpack.c.b16 %v1320, %v1312
        %v1417 = vpack.c.b16 %v1321, %v1313
        %v1418 = vpack.c.b16 %v1322, %v1314
        %v1419 = vpack.c.b16 %v1323, %v1315
        %v1420 = vpack.c.b16 %v1324, %v1316
        %v1421 = vpack.c.b16 %v1325, %v1317
        %v1422 = vpack.c.b16 %v1334, %v1326
        %v1423 = vpack.c.b16 %v1335, %v1327
        %v1424 = vpack.c.b16 %v1336, %v1328
        %v1425 = vpack.c.b16 %v1337, %v1329
        %v1426 = vpack.c.b16 %v1338, %v1330
        %v1427 = vpack.c.b16 %v1339, %v1331
        %v1428 = vpack.c.b16 %v1340, %v1332
        %v1429 = vpack.c.b16 %v1341, %v1333
        %v1430 = vpack.c.b16 %v1350, %v1342
        %v1431 = vpack.c.b16 %v1351, %v1343
        %v1432 = vpack.c.b16 %v1352, %v1344
        %v1433 = vpack.c.b16 %v1353, %v1345
        %v1434 = vpack.c.b16 %v1354, %v1346
        %v1435 = vpack.c.b16 %v1355, %v1347
        %v1436 = vpack.c.b16 %v1356, %v1348
        %v1437 = vpack.c.b16 %v1357, %v1349
        %v1438 = vpack.c.b16 %v1366, %v1358
        %v1439 = vpack.c.b16 %v1367, %v1359
        %v1440 = vpack.c.b16 %v1368, %v1360
        %v1441 = vpack.c.b16 %v1369, %v1361
        %v1442 = vpack.c.b16 %v1370, %v1362
        %v1443 = vpack.c.b16 %v1371, %v1363
        %v1444 = vpack.c.b16 %v1372, %v1364
        %v1445 = vpack.c.b16 %v1373, %v1365
        %v1446 = vpack.c.b16 %v1382, %v1374
        %v1447 = vpack.c.b16 %v1383, %v1375
        %v1448 = vpack.c.b16 %v1384, %v1376
        %v1449 = vpack.c.b16 %v1385, %v1377
        %v1450 = vpack.c.b16 %v1386, %v1378
        %v1451 = vpack.c.b16 %v1387, %v1379
        %v1452 = vpack.c.b16 %v1388, %v1380
        %v1453 = vpack.c.b16 %v1389, %v1381
        %1518 = vmatprep.subr.bf16.mxu0 %v1391
        %1519 = vmatpush1.bf16.msra.mxu0 %v1390
        %1520 = vmatprep.subr.bf16.mxu0 %v1399
        %1521 = vmatpush1.bf16.msra.mxu0 %v1398
        %1522 = vmatprep.subr.bf16.mxu0 %v1407
        %1523 = vmatpush1.bf16.msra.mxu0 %v1406
        %1524 = vmatprep.subr.bf16.mxu0 %v1415
        %1525 = vmatpush1.bf16.msra.mxu0 %v1414
        %1526 = vmatprep.subr.bf16.mxu0 %v1423
        %1527 = vmatpush1.bf16.msra.mxu0 %v1422
        %1528 = vmatprep.subr.bf16.mxu0 %v1431
        %1529 = vmatpush1.bf16.msra.mxu0 %v1430
        %1530 = vmatprep.subr.bf16.mxu0 %v1439
        %1531 = vmatpush1.bf16.msra.mxu0 %v1438
        %1532 = vmatprep.subr.bf16.mxu0 %v1447
        %1533 = vmatpush1.bf16.msra.mxu0 %v1446
        %1534 = vmatprep.subr.bf16.mxu0 0
        %1535 = vmatpush1.bf16.msra.mxu0 0
        %1536 = vmatprep.subr.bf16.mxu0 0
        %1537 = vmatpush1.bf16.msra.mxu0 0
        %1538 = vmatprep.subr.bf16.mxu0 0
        %1539 = vmatpush1.bf16.msra.mxu0 0
        %1540 = vmatprep.subr.bf16.mxu0 0
        %1541 = vmatpush1.bf16.msra.mxu0 0
        %1542 = vmatprep.subr.bf16.mxu0 0
        %1543 = vmatpush1.bf16.msra.mxu0 0
        %1544 = vmatprep.subr.bf16.mxu0 0
        %1545 = vmatpush1.bf16.msra.mxu0 0
        %1546 = vmatprep.subr.bf16.mxu0 0
        %1547 = vmatpush1.bf16.msra.mxu0 0
        %1548 = vmatprep.subr.bf16.mxu0 0
        %1549 = vmatpush1.bf16.msra.mxu0 0
        %1550 = vmatprep.mubr.bf16.mxu0 0
        %1551 = vmatmul.mubr.bf16.gmra.mrb[0].mxu0 %v1091
        %v1552 = vpop.f32.mrb[0].mxu0
        %v1553 = vadd.f32 %v1161, %v1552
        %v1554 = vpop.f32.mrb[0].mxu0
        %v1555 = vadd.f32 %v1165, %v1554
        %v1556 = vpop.f32.mrb[0].mxu0
        %v1557 = vadd.f32 %v1161, %v1556
        %v1558 = vpop.f32.mrb[0].mxu0
        %v1559 = vadd.f32 %v1165, %v1558
        %1560 = vdwg.mxu0
        %1561 = vmatprep.subr.bf16.mxu0 %v1393
        %1562 = vmatpush1.bf16.msra.mxu0 %v1392
        %1563 = vmatprep.subr.bf16.mxu0 %v1401
        %1564 = vmatpush1.bf16.msra.mxu0 %v1400
        %1565 = vmatprep.subr.bf16.mxu0 %v1409
        %1566 = vmatpush1.bf16.msra.mxu0 %v1408
        %1567 = vmatprep.subr.bf16.mxu0 %v1417
        %1568 = vmatpush1.bf16.msra.mxu0 %v1416
        %1569 = vmatprep.subr.bf16.mxu0 %v1425
        %1570 = vmatpush1.bf16.msra.mxu0 %v1424
        %1571 = vmatprep.subr.bf16.mxu0 %v1433
        %1572 = vmatpush1.bf16.msra.mxu0 %v1432
        %1573 = vmatprep.subr.bf16.mxu0 %v1441
        %1574 = vmatpush1.bf16.msra.mxu0 %v1440
        %1575 = vmatprep.subr.bf16.mxu0 %v1449
        %1576 = vmatpush1.bf16.msra.mxu0 %v1448
        %1577 = vmatprep.subr.bf16.mxu0 0
        %1578 = vmatpush1.bf16.msra.mxu0 0
        %1579 = vmatprep.subr.bf16.mxu0 0
        %1580 = vmatpush1.bf16.msra.mxu0 0
        %1581 = vmatprep.subr.bf16.mxu0 0
        %1582 = vmatpush1.bf16.msra.mxu0 0
        %1583 = vmatprep.subr.bf16.mxu0 0
        %1584 = vmatpush1.bf16.msra.mxu0 0
        %1585 = vmatprep.subr.bf16.mxu0 0
        %1586 = vmatpush1.bf16.msra.mxu0 0
        %1587 = vmatprep.subr.bf16.mxu0 0
        %1588 = vmatpush1.bf16.msra.mxu0 0
        %1589 = vmatprep.subr.bf16.mxu0 0
        %1590 = vmatpush1.bf16.msra.mxu0 0
        %1591 = vmatprep.subr.bf16.mxu0 0
        %1592 = vmatpush1.bf16.msra.mxu0 0
        %1593 = vmatprep.mubr.bf16.mxu0 0
        %1594 = vmatmul.mubr.bf16.gmra.mrb[0].mxu0 %v1091
        %v1595 = vpop.f32.mrb[0].mxu0
        %v1596 = vadd.f32 %v1169, %v1595
        %v1597 = vpop.f32.mrb[0].mxu0
        %v1598 = vadd.f32 %v1173, %v1597
        %v1599 = vpop.f32.mrb[0].mxu0
        %v1600 = vadd.f32 %v1169, %v1599
        %v1601 = vpop.f32.mrb[0].mxu0
        %v1602 = vadd.f32 %v1173, %v1601
        %1603 = vdwg.mxu0
        %1604 = vmatprep.subr.bf16.mxu0 %v1395
        %1605 = vmatpush1.bf16.msra.mxu0 %v1394
        %1606 = vmatprep.subr.bf16.mxu0 %v1403
        %1607 = vmatpush1.bf16.msra.mxu0 %v1402
        %1608 = vmatprep.subr.bf16.mxu0 %v1411
        %1609 = vmatpush1.bf16.msra.mxu0 %v1410
        %1610 = vmatprep.subr.bf16.mxu0 %v1419
        %1611 = vmatpush1.bf16.msra.mxu0 %v1418
        %1612 = vmatprep.subr.bf16.mxu0 %v1427
        %1613 = vmatpush1.bf16.msra.mxu0 %v1426
        %1614 = vmatprep.subr.bf16.mxu0 %v1435
        %1615 = vmatpush1.bf16.msra.mxu0 %v1434
        %1616 = vmatprep.subr.bf16.mxu0 %v1443
        %1617 = vmatpush1.bf16.msra.mxu0 %v1442
        %1618 = vmatprep.subr.bf16.mxu0 %v1451
        %1619 = vmatpush1.bf16.msra.mxu0 %v1450
        %1620 = vmatprep.subr.bf16.mxu0 0
        %1621 = vmatpush1.bf16.msra.mxu0 0
        %1622 = vmatprep.subr.bf16.mxu0 0
        %1623 = vmatpush1.bf16.msra.mxu0 0
        %1624 = vmatprep.subr.bf16.mxu0 0
        %1625 = vmatpush1.bf16.msra.mxu0 0
        %1626 = vmatprep.subr.bf16.mxu0 0
        %1627 = vmatpush1.bf16.msra.mxu0 0
        %1628 = vmatprep.subr.bf16.mxu0 0
        %1629 = vmatpush1.bf16.msra.mxu0 0
        %1630 = vmatprep.subr.bf16.mxu0 0
        %1631 = vmatpush1.bf16.msra.mxu0 0
        %1632 = vmatprep.subr.bf16.mxu0 0
        %1633 = vmatpush1.bf16.msra.mxu0 0
        %1634 = vmatprep.subr.bf16.mxu0 0
        %1635 = vmatpush1.bf16.msra.mxu0 0
        %1636 = vmatprep.mubr.bf16.mxu0 0
        %1637 = vmatmul.mubr.bf16.gmra.mrb[0].mxu0 %v1091
        %v1638 = vpop.f32.mrb[0].mxu0
        %v1639 = vadd.f32 %v1177, %v1638
        %v1640 = vpop.f32.mrb[0].mxu0
        %v1641 = vadd.f32 %v1181, %v1640
        %v1642 = vpop.f32.mrb[0].mxu0
        %v1643 = vadd.f32 %v1177, %v1642
        %v1644 = vpop.f32.mrb[0].mxu0
        %v1645 = vadd.f32 %v1181, %v1644
        %1646 = vdwg.mxu0
        %1647 = vmatprep.subr.bf16.mxu0 %v1397
        %1648 = vmatpush1.bf16.msra.mxu0 %v1396
        %1649 = vmatprep.subr.bf16.mxu0 %v1405
        %1650 = vmatpush1.bf16.msra.mxu0 %v1404
        %1651 = vmatprep.subr.bf16.mxu0 %v1413
        %1652 = vmatpush1.bf16.msra.mxu0 %v1412
        %1653 = vmatprep.subr.bf16.mxu0 %v1421
        %1654 = vmatpush1.bf16.msra.mxu0 %v1420
        %1655 = vmatprep.subr.bf16.mxu0 %v1429
        %1656 = vmatpush1.bf16.msra.mxu0 %v1428
        %1657 = vmatprep.subr.bf16.mxu0 %v1437
        %1658 = vmatpush1.bf16.msra.mxu0 %v1436
        %1659 = vmatprep.subr.bf16.mxu0 %v1445
        %1660 = vmatpush1.bf16.msra.mxu0 %v1444
        %1661 = vmatprep.subr.bf16.mxu0 %v1453
        %1662 = vmatpush1.bf16.msra.mxu0 %v1452
        %1663 = vmatprep.subr.bf16.mxu0 0
        %1664 = vmatpush1.bf16.msra.mxu0 0
        %1665 = vmatprep.subr.bf16.mxu0 0
        %1666 = vmatpush1.bf16.msra.mxu0 0
        %1667 = vmatprep.subr.bf16.mxu0 0
        %1668 = vmatpush1.bf16.msra.mxu0 0
        %1669 = vmatprep.subr.bf16.mxu0 0
        %1670 = vmatpush1.bf16.msra.mxu0 0
        %1671 = vmatprep.subr.bf16.mxu0 0
        %1672 = vmatpush1.bf16.msra.mxu0 0
        %1673 = vmatprep.subr.bf16.mxu0 0
        %1674 = vmatpush1.bf16.msra.mxu0 0
        %1675 = vmatprep.subr.bf16.mxu0 0
        %1676 = vmatpush1.bf16.msra.mxu0 0
        %1677 = vmatprep.subr.bf16.mxu0 0
        %1678 = vmatpush1.bf16.msra.mxu0 0
        %1679 = vmatprep.mubr.bf16.mxu0 0
        %1680 = vmatmul.mubr.bf16.gmra.mrb[0].mxu0 %v1091
        %v1681 = vpop.f32.mrb[0].mxu0
        %v1682 = vadd.f32 %v1185, %v1681
        %v1683 = vpop.f32.mrb[0].mxu0
        %v1684 = vadd.f32 %v1189, %v1683
        %v1685 = vpop.f32.mrb[0].mxu0
        %v1686 = vadd.f32 %v1185, %v1685
        %v1687 = vpop.f32.mrb[0].mxu0
        %v1688 = vadd.f32 %v1189, %v1687
        %1689 = vdwg.mxu0
        %v1690 = vld [vmem:[%s11] sm:$0xff]
        %v1692 = vlaneseq
        %v1693 = vshrl.u32 %v1692, 7
        %v1694 = vsub.s32 0, %v1693
        %v1695 = vrot.slane %v1690, %v1694
        %v1696 = vlaneseq
        %v1697 = vshrl.u32 %v1696, 7
        %v1698 = vsub.s32 1, %v1697
        %v1699 = vrot.slane %v1690, %v1698
        %v1700 = vlaneseq
        %v1701 = vshrl.u32 %v1700, 7
        %v1702 = vsub.s32 2, %v1701
        %v1703 = vrot.slane %v1690, %v1702
        %v1704 = vlaneseq
        %v1705 = vshrl.u32 %v1704, 7
        %v1706 = vsub.s32 3, %v1705
        %v1707 = vrot.slane %v1690, %v1706
        %v1708 = vlaneseq
        %v1709 = vshrl.u32 %v1708, 7
        %v1710 = vsub.s32 4, %v1709
        %v1711 = vrot.slane %v1690, %v1710
        %v1712 = vlaneseq
        %v1713 = vshrl.u32 %v1712, 7
        %v1714 = vsub.s32 5, %v1713
        %v1715 = vrot.slane %v1690, %v1714
        %v1716 = vlaneseq
        %v1717 = vshrl.u32 %v1716, 7
        %v1718 = vsub.s32 6, %v1717
        %v1719 = vrot.slane %v1690, %v1718
        %v1720 = vlaneseq
        %v1721 = vshrl.u32 %v1720, 7
        %v1722 = vsub.s32 7, %v1721
        %v1723 = vrot.slane %v1690, %v1722
        %v1732 = vmul.f32 %v1553, %v1695
        %v1733 = vmul.f32 %v1555, %v1699
        %v1734 = vmul.f32 %v1596, %v1703
        %v1735 = vmul.f32 %v1598, %v1707
        %v1736 = vmul.f32 %v1639, %v1711
        %v1737 = vmul.f32 %v1641, %v1715
        %v1738 = vmul.f32 %v1682, %v1719
        %v1739 = vmul.f32 %v1684, %v1723
        %v1740 = vmul.f32 %v1557, %v1695
        %v1741 = vmul.f32 %v1559, %v1699
        %v1742 = vmul.f32 %v1600, %v1703
        %v1743 = vmul.f32 %v1602, %v1707
        %v1744 = vmul.f32 %v1643, %v1711
        %v1745 = vmul.f32 %v1645, %v1715
        %v1746 = vmul.f32 %v1686, %v1719
        %v1747 = vmul.f32 %v1688, %v1723
        %v1748 = vld [vmem:[%s12] sm:$0xff]
        %v1750 = vlaneseq
        %v1751 = vshrl.u32 %v1750, 7
        %v1752 = vsub.s32 0, %v1751
        %v1753 = vrot.slane %v1748, %v1752
        %v1754 = vlaneseq
        %v1755 = vshrl.u32 %v1754, 7
        %v1756 = vsub.s32 1, %v1755
        %v1757 = vrot.slane %v1748, %v1756
        %v1758 = vlaneseq
        %v1759 = vshrl.u32 %v1758, 7
        %v1760 = vsub.s32 2, %v1759
        %v1761 = vrot.slane %v1748, %v1760
        %v1762 = vlaneseq
        %v1763 = vshrl.u32 %v1762, 7
        %v1764 = vsub.s32 3, %v1763
        %v1765 = vrot.slane %v1748, %v1764
        %v1766 = vlaneseq
        %v1767 = vshrl.u32 %v1766, 7
        %v1768 = vsub.s32 4, %v1767
        %v1769 = vrot.slane %v1748, %v1768
        %v1770 = vlaneseq
        %v1771 = vshrl.u32 %v1770, 7
        %v1772 = vsub.s32 5, %v1771
        %v1773 = vrot.slane %v1748, %v1772
        %v1774 = vlaneseq
        %v1775 = vshrl.u32 %v1774, 7
        %v1776 = vsub.s32 6, %v1775
        %v1777 = vrot.slane %v1748, %v1776
        %v1778 = vlaneseq
        %v1779 = vshrl.u32 %v1778, 7
        %v1780 = vsub.s32 7, %v1779
        %v1781 = vrot.slane %v1748, %v1780
        %v1790 = vadd.f32 %v1732, %v1753
        %v1791 = vadd.f32 %v1733, %v1757
        %v1792 = vadd.f32 %v1734, %v1761
        %v1793 = vadd.f32 %v1735, %v1765
        %v1794 = vadd.f32 %v1736, %v1769
        %v1795 = vadd.f32 %v1737, %v1773
        %v1796 = vadd.f32 %v1738, %v1777
        %v1797 = vadd.f32 %v1739, %v1781
        %v1798 = vadd.f32 %v1740, %v1753
        %v1799 = vadd.f32 %v1741, %v1757
        %v1800 = vadd.f32 %v1742, %v1761
        %v1801 = vadd.f32 %v1743, %v1765
        %v1802 = vadd.f32 %v1744, %v1769
        %v1803 = vadd.f32 %v1745, %v1773
        %v1804 = vadd.f32 %v1746, %v1777
        %v1805 = vadd.f32 %v1747, %v1781
        %v1806 = vmax.f32 %v1790, 0.0
        %v1807 = vmax.f32 %v1791, 0.0
        %v1808 = vmax.f32 %v1792, 0.0
        %v1809 = vmax.f32 %v1793, 0.0
        %v1810 = vmax.f32 %v1794, 0.0
        %v1811 = vmax.f32 %v1795, 0.0
        %v1812 = vmax.f32 %v1796, 0.0
        %v1813 = vmax.f32 %v1797, 0.0
        %v1814 = vmax.f32 %v1798, 0.0
        %v1815 = vmax.f32 %v1799, 0.0
        %v1816 = vmax.f32 %v1800, 0.0
        %v1817 = vmax.f32 %v1801, 0.0
        %v1818 = vmax.f32 %v1802, 0.0
        %v1819 = vmax.f32 %v1803, 0.0
        %v1820 = vmax.f32 %v1804, 0.0
        %v1821 = vmax.f32 %v1805, 0.0
        %s1822 = smul.u32 %s48, 16
        %v1823 = vlaneseq
        %v1824 = vshrl.u32 %v1823, 7
        %v1825 = vadd.s32 %v1824, 8
        %v1826 = vstv %s1822
        %v1827 = vadd.s32 %v1826, %v1824
        %v1828 = vadd.s32 %v1826, %v1825
        %vm1829 = vcmp.lt.s32.totalorder %v1827, 16
        %vm1830 = vcmp.lt.s32.totalorder %v1828, 16
        %v1831 = vsel %vm1829, 1, 0
        %v1832 = vsel %vm1830, 1, 0
        %vm1833 = vcmp.eq.s32.totalorder %v1831, 1
        %vm1834 = vcmp.eq.s32.totalorder %v1832, 1
        %v1835 = vsel %vm1833, %v1806, -inf
        %v1836 = vsel %vm1833, %v1807, -inf
        %v1837 = vsel %vm1833, %v1808, -inf
        %v1838 = vsel %vm1833, %v1809, -inf
        %v1839 = vsel %vm1833, %v1810, -inf
        %v1840 = vsel %vm1833, %v1811, -inf
        %v1841 = vsel %vm1833, %v1812, -inf
        %v1842 = vsel %vm1833, %v1813, -inf
        %v1843 = vsel %vm1834, %v1814, -inf
        %v1844 = vsel %vm1834, %v1815, -inf
        %v1845 = vsel %vm1834, %v1816, -inf
        %v1846 = vsel %vm1834, %v1817, -inf
        %v1847 = vsel %vm1834, %v1818, -inf
        %v1848 = vsel %vm1834, %v1819, -inf
        %v1849 = vsel %vm1834, %v1820, -inf
        %v1850 = vsel %vm1834, %v1821, -inf
        %v1851 = vld [vmem:[#allocation2] sm:$0xff]
        %v1852 = vld [vmem:[#allocation2 + $0x8] sm:$0xff]
        %v1853 = vld [vmem:[#allocation2 + $0x10] sm:$0xff]
        %v1854 = vld [vmem:[#allocation2 + $0x18] sm:$0xff]
        %v1855 = vld [vmem:[#allocation2 + $0x20] sm:$0xff]
        %v1856 = vld [vmem:[#allocation2 + $0x28] sm:$0xff]
        %v1857 = vld [vmem:[#allocation2 + $0x30] sm:$0xff]
        %v1858 = vld [vmem:[#allocation2 + $0x38] sm:$0xff]
        %v1859 = vmax.f32 %v1835, %v1843
        %v1860 = vrot.slane %v1859, 4
        %v1861 = vmax.f32 %v1859, %v1860
        %v1862 = vrot.slane %v1861, 2
        %v1863 = vmax.f32 %v1861, %v1862
        %v1864 = vrot.slane %v1863, 1
        %v1865 = vmax.f32 %v1863, %v1864
        %v1866 = vmax.f32 %v1836, %v1844
        %v1867 = vrot.slane %v1866, 4
        %v1868 = vmax.f32 %v1866, %v1867
        %v1869 = vrot.slane %v1868, 2
        %v1870 = vmax.f32 %v1868, %v1869
        %v1871 = vrot.slane %v1870, 1
        %v1872 = vmax.f32 %v1870, %v1871
        %v1873 = vmax.f32 %v1837, %v1845
        %v1874 = vrot.slane %v1873, 4
        %v1875 = vmax.f32 %v1873, %v1874
        %v1876 = vrot.slane %v1875, 2
        %v1877 = vmax.f32 %v1875, %v1876
        %v1878 = vrot.slane %v1877, 1
        %v1879 = vmax.f32 %v1877, %v1878
        %v1880 = vmax.f32 %v1838, %v1846
        %v1881 = vrot.slane %v1880, 4
        %v1882 = vmax.f32 %v1880, %v1881
        %v1883 = vrot.slane %v1882, 2
        %v1884 = vmax.f32 %v1882, %v1883
        %v1885 = vrot.slane %v1884, 1
        %v1886 = vmax.f32 %v1884, %v1885
        %v1887 = vmax.f32 %v1839, %v1847
        %v1888 = vrot.slane %v1887, 4
        %v1889 = vmax.f32 %v1887, %v1888
        %v1890 = vrot.slane %v1889, 2
        %v1891 = vmax.f32 %v1889, %v1890
        %v1892 = vrot.slane %v1891, 1
        %v1893 = vmax.f32 %v1891, %v1892
        %v1894 = vmax.f32 %v1840, %v1848
        %v1895 = vrot.slane %v1894, 4
        %v1896 = vmax.f32 %v1894, %v1895
        %v1897 = vrot.slane %v1896, 2
        %v1898 = vmax.f32 %v1896, %v1897
        %v1899 = vrot.slane %v1898, 1
        %v1900 = vmax.f32 %v1898, %v1899
        %v1901 = vmax.f32 %v1841, %v1849
        %v1902 = vrot.slane %v1901, 4
        %v1903 = vmax.f32 %v1901, %v1902
        %v1904 = vrot.slane %v1903, 2
        %v1905 = vmax.f32 %v1903, %v1904
        %v1906 = vrot.slane %v1905, 1
        %v1907 = vmax.f32 %v1905, %v1906
        %v1908 = vmax.f32 %v1842, %v1850
        %v1909 = vrot.slane %v1908, 4
        %v1910 = vmax.f32 %v1908, %v1909
        %v1911 = vrot.slane %v1910, 2
        %v1912 = vmax.f32 %v1910, %v1911
        %v1913 = vrot.slane %v1912, 1
        %v1914 = vmax.f32 %v1912, %v1913
        %v1915 = vmax.f32 %v1851, %v1865
        %v1916 = vmax.f32 %v1852, %v1872
        %v1917 = vmax.f32 %v1853, %v1879
        %v1918 = vmax.f32 %v1854, %v1886
        %v1919 = vmax.f32 %v1855, %v1893
        %v1920 = vmax.f32 %v1856, %v1900
        %v1921 = vmax.f32 %v1857, %v1907
        %v1922 = vmax.f32 %v1858, %v1914
        %1923 = vst [vmem:[#allocation2] sm:$0xff] %v1915
        %1924 = vst [vmem:[#allocation2 + $0x8] sm:$0xff] %v1916
        %1925 = vst [vmem:[#allocation2 + $0x10] sm:$0xff] %v1917
        %1926 = vst [vmem:[#allocation2 + $0x18] sm:$0xff] %v1918
        %1927 = vst [vmem:[#allocation2 + $0x20] sm:$0xff] %v1919
        %1928 = vst [vmem:[#allocation2 + $0x28] sm:$0xff] %v1920
        %1929 = vst [vmem:[#allocation2 + $0x30] sm:$0xff] %v1921
        %1930 = vst [vmem:[#allocation2 + $0x38] sm:$0xff] %v1922
        // Predicated region
        $region161: #{tpu_custom_call.1} parent=111 // pred_check
          %p1931 = pneg %p876
        $region162: #{tpu_custom_call.1} parent=111 // pred_check_branch
          %1933 = sbr.rel (%p1931) target = $region164
        $region163: #{tpu_custom_call.1} parent=111 // pred_region
          %v1934 = vld [vmem:[#allocation2] sm:$0xff]
          %v1935 = vld [vmem:[#allocation2 + $0x8] sm:$0xff]
          %v1936 = vld [vmem:[#allocation2 + $0x10] sm:$0xff]
          %v1937 = vld [vmem:[#allocation2 + $0x18] sm:$0xff]
          %v1938 = vld [vmem:[#allocation2 + $0x20] sm:$0xff]
          %v1939 = vld [vmem:[#allocation2 + $0x28] sm:$0xff]
          %v1940 = vld [vmem:[#allocation2 + $0x30] sm:$0xff]
          %v1941 = vld [vmem:[#allocation2 + $0x38] sm:$0xff]
          %v1942 = vpack.c.bf16 %v1934, %v1934
          %v1943 = vpack.c.bf16 %v1935, %v1935
          %v1944 = vpack.c.bf16 %v1936, %v1936
          %v1945 = vpack.c.bf16 %v1937, %v1937
          %v1946 = vpack.c.bf16 %v1938, %v1938
          %v1947 = vpack.c.bf16 %v1939, %v1939
          %v1948 = vpack.c.bf16 %v1940, %v1940
          %v1949 = vpack.c.bf16 %v1941, %v1941
          %v1950 = vld [vmem:[#allocation17] sm:$0xff]
          %v1951 = vld [vmem:[#allocation17 + $0x8] sm:$0xff]
          %v1952 = vld [vmem:[#allocation17 + $0x10] sm:$0xff]
          %v1953 = vld [vmem:[#allocation17 + $0x18] sm:$0xff]
          %v1954 = vld [vmem:[#allocation17 + $0x20] sm:$0xff]
          %v1955 = vld [vmem:[#allocation17 + $0x28] sm:$0xff]
          %v1956 = vld [vmem:[#allocation17 + $0x30] sm:$0xff]
          %v1957 = vld [vmem:[#allocation17 + $0x38] sm:$0xff]
          %v1958 = vld [vmem:[#allocation17 + $0x40] sm:$0xff]
          %v1959 = vld [vmem:[#allocation17 + $0x48] sm:$0xff]
          %v1960 = vld [vmem:[#allocation17 + $0x50] sm:$0xff]
          %v1961 = vld [vmem:[#allocation17 + $0x58] sm:$0xff]
          %v1962 = vld [vmem:[#allocation17 + $0x60] sm:$0xff]
          %v1963 = vld [vmem:[#allocation17 + $0x68] sm:$0xff]
          %v1964 = vld [vmem:[#allocation17 + $0x70] sm:$0xff]
          %v1965 = vld [vmem:[#allocation17 + $0x78] sm:$0xff]
          %v1966 = vld [vmem:[#allocation17 + $0x80] sm:$0xff]
          %v1967 = vld [vmem:[#allocation17 + $0x88] sm:$0xff]
          %v1968 = vld [vmem:[#allocation17 + $0x90] sm:$0xff]
          %v1969 = vld [vmem:[#allocation17 + $0x98] sm:$0xff]
          %v1970 = vld [vmem:[#allocation17 + $0xa0] sm:$0xff]
          %v1971 = vld [vmem:[#allocation17 + $0xa8] sm:$0xff]
          %v1972 = vld [vmem:[#allocation17 + $0xb0] sm:$0xff]
          %v1973 = vld [vmem:[#allocation17 + $0xb8] sm:$0xff]
          %v1974 = vld [vmem:[#allocation17 + $0xc0] sm:$0xff]
          %v1975 = vld [vmem:[#allocation17 + $0xc8] sm:$0xff]
          %v1976 = vld [vmem:[#allocation17 + $0xd0] sm:$0xff]
          %v1977 = vld [vmem:[#allocation17 + $0xd8] sm:$0xff]
          %v1978 = vld [vmem:[#allocation17 + $0xe0] sm:$0xff]
          %v1979 = vld [vmem:[#allocation17 + $0xe8] sm:$0xff]
          %v1980 = vld [vmem:[#allocation17 + $0xf0] sm:$0xff]
          %v1981 = vld [vmem:[#allocation17 + $0xf8] sm:$0xff]
          %v1982 = vld [vmem:[#allocation17 + $0x100] sm:$0xff]
          %v1983 = vld [vmem:[#allocation17 + $0x108] sm:$0xff]
          %v1984 = vld [vmem:[#allocation17 + $0x110] sm:$0xff]
          %v1985 = vld [vmem:[#allocation17 + $0x118] sm:$0xff]
          %v1986 = vld [vmem:[#allocation17 + $0x120] sm:$0xff]
          %v1987 = vld [vmem:[#allocation17 + $0x128] sm:$0xff]
          %v1988 = vld [vmem:[#allocation17 + $0x130] sm:$0xff]
          %v1989 = vld [vmem:[#allocation17 + $0x138] sm:$0xff]
          %v1990 = vld [vmem:[#allocation17 + $0x140] sm:$0xff]
          %v1991 = vld [vmem:[#allocation17 + $0x148] sm:$0xff]
          %v1992 = vld [vmem:[#allocation17 + $0x150] sm:$0xff]
          %v1993 = vld [vmem:[#allocation17 + $0x158] sm:$0xff]
          %v1994 = vld [vmem:[#allocation17 + $0x160] sm:$0xff]
          %v1995 = vld [vmem:[#allocation17 + $0x168] sm:$0xff]
          %v1996 = vld [vmem:[#allocation17 + $0x170] sm:$0xff]
          %v1997 = vld [vmem:[#allocation17 + $0x178] sm:$0xff]
          %v1998 = vld [vmem:[#allocation17 + $0x180] sm:$0xff]
          %v1999 = vld [vmem:[#allocation17 + $0x188] sm:$0xff]
          %v2000 = vld [vmem:[#allocation17 + $0x190] sm:$0xff]
          %v2001 = vld [vmem:[#allocation17 + $0x198] sm:$0xff]
          %v2002 = vld [vmem:[#allocation17 + $0x1a0] sm:$0xff]
          %v2003 = vld [vmem:[#allocation17 + $0x1a8] sm:$0xff]
          %v2004 = vld [vmem:[#allocation17 + $0x1b0] sm:$0xff]
          %v2005 = vld [vmem:[#allocation17 + $0x1b8] sm:$0xff]
          %v2006 = vld [vmem:[#allocation17 + $0x1c0] sm:$0xff]
          %v2007 = vld [vmem:[#allocation17 + $0x1c8] sm:$0xff]
          %v2008 = vld [vmem:[#allocation17 + $0x1d0] sm:$0xff]
          %v2009 = vld [vmem:[#allocation17 + $0x1d8] sm:$0xff]
          %v2010 = vld [vmem:[#allocation17 + $0x1e0] sm:$0xff]
          %v2011 = vld [vmem:[#allocation17 + $0x1e8] sm:$0xff]
          %v2012 = vld [vmem:[#allocation17 + $0x1f0] sm:$0xff]
          %v2013 = vld [vmem:[#allocation17 + $0x1f8] sm:$0xff]
          %v2014 = vld [vmem:[#allocation17 + $0x200] sm:$0xff]
          %v2015 = vld [vmem:[#allocation17 + $0x208] sm:$0xff]
          %v2016 = vld [vmem:[#allocation17 + $0x210] sm:$0xff]
          %v2017 = vld [vmem:[#allocation17 + $0x218] sm:$0xff]
          %v2018 = vld [vmem:[#allocation17 + $0x220] sm:$0xff]
          %v2019 = vld [vmem:[#allocation17 + $0x228] sm:$0xff]
          %v2020 = vld [vmem:[#allocation17 + $0x230] sm:$0xff]
          %v2021 = vld [vmem:[#allocation17 + $0x238] sm:$0xff]
          %v2022 = vld [vmem:[#allocation17 + $0x240] sm:$0xff]
          %v2023 = vld [vmem:[#allocation17 + $0x248] sm:$0xff]
          %v2024 = vld [vmem:[#allocation17 + $0x250] sm:$0xff]
          %v2025 = vld [vmem:[#allocation17 + $0x258] sm:$0xff]
          %v2026 = vld [vmem:[#allocation17 + $0x260] sm:$0xff]
          %v2027 = vld [vmem:[#allocation17 + $0x268] sm:$0xff]
          %v2028 = vld [vmem:[#allocation17 + $0x270] sm:$0xff]
          %v2029 = vld [vmem:[#allocation17 + $0x278] sm:$0xff]
          %v2030 = vld [vmem:[#allocation17 + $0x280] sm:$0xff]
          %v2031 = vld [vmem:[#allocation17 + $0x288] sm:$0xff]
          %v2032 = vld [vmem:[#allocation17 + $0x290] sm:$0xff]
          %v2033 = vld [vmem:[#allocation17 + $0x298] sm:$0xff]
          %v2034 = vld [vmem:[#allocation17 + $0x2a0] sm:$0xff]
          %v2035 = vld [vmem:[#allocation17 + $0x2a8] sm:$0xff]
          %v2036 = vld [vmem:[#allocation17 + $0x2b0] sm:$0xff]
          %v2037 = vld [vmem:[#allocation17 + $0x2b8] sm:$0xff]
          %v2038 = vld [vmem:[#allocation17 + $0x2c0] sm:$0xff]
          %v2039 = vld [vmem:[#allocation17 + $0x2c8] sm:$0xff]
          %v2040 = vld [vmem:[#allocation17 + $0x2d0] sm:$0xff]
          %v2041 = vld [vmem:[#allocation17 + $0x2d8] sm:$0xff]
          %v2042 = vld [vmem:[#allocation17 + $0x2e0] sm:$0xff]
          %v2043 = vld [vmem:[#allocation17 + $0x2e8] sm:$0xff]
          %v2044 = vld [vmem:[#allocation17 + $0x2f0] sm:$0xff]
          %v2045 = vld [vmem:[#allocation17 + $0x2f8] sm:$0xff]
          %v2046 = vld [vmem:[#allocation17 + $0x300] sm:$0xff]
          %v2047 = vld [vmem:[#allocation17 + $0x308] sm:$0xff]
          %v2048 = vld [vmem:[#allocation17 + $0x310] sm:$0xff]
          %v2049 = vld [vmem:[#allocation17 + $0x318] sm:$0xff]
          %v2050 = vld [vmem:[#allocation17 + $0x320] sm:$0xff]
          %v2051 = vld [vmem:[#allocation17 + $0x328] sm:$0xff]
          %v2052 = vld [vmem:[#allocation17 + $0x330] sm:$0xff]
          %v2053 = vld [vmem:[#allocation17 + $0x338] sm:$0xff]
          %v2054 = vld [vmem:[#allocation17 + $0x340] sm:$0xff]
          %v2055 = vld [vmem:[#allocation17 + $0x348] sm:$0xff]
          %v2056 = vld [vmem:[#allocation17 + $0x350] sm:$0xff]
          %v2057 = vld [vmem:[#allocation17 + $0x358] sm:$0xff]
          %v2058 = vld [vmem:[#allocation17 + $0x360] sm:$0xff]
          %v2059 = vld [vmem:[#allocation17 + $0x368] sm:$0xff]
          %v2060 = vld [vmem:[#allocation17 + $0x370] sm:$0xff]
          %v2061 = vld [vmem:[#allocation17 + $0x378] sm:$0xff]
          %v2062 = vld [vmem:[#allocation17 + $0x380] sm:$0xff]
          %v2063 = vld [vmem:[#allocation17 + $0x388] sm:$0xff]
          %v2064 = vld [vmem:[#allocation17 + $0x390] sm:$0xff]
          %v2065 = vld [vmem:[#allocation17 + $0x398] sm:$0xff]
          %v2066 = vld [vmem:[#allocation17 + $0x3a0] sm:$0xff]
          %v2067 = vld [vmem:[#allocation17 + $0x3a8] sm:$0xff]
          %v2068 = vld [vmem:[#allocation17 + $0x3b0] sm:$0xff]
          %v2069 = vld [vmem:[#allocation17 + $0x3b8] sm:$0xff]
          %v2070 = vld [vmem:[#allocation17 + $0x3c0] sm:$0xff]
          %v2071 = vld [vmem:[#allocation17 + $0x3c8] sm:$0xff]
          %v2072 = vld [vmem:[#allocation17 + $0x3d0] sm:$0xff]
          %v2073 = vld [vmem:[#allocation17 + $0x3d8] sm:$0xff]
          %v2074 = vld [vmem:[#allocation17 + $0x3e0] sm:$0xff]
          %v2075 = vld [vmem:[#allocation17 + $0x3e8] sm:$0xff]
          %v2076 = vld [vmem:[#allocation17 + $0x3f0] sm:$0xff]
          %v2077 = vld [vmem:[#allocation17 + $0x3f8] sm:$0xff]
          %v2078 = vld [vmem:[#allocation17 + $0x400] sm:$0xff]
          %v2079 = vld [vmem:[#allocation17 + $0x408] sm:$0xff]
          %v2080 = vld [vmem:[#allocation17 + $0x410] sm:$0xff]
          %v2081 = vld [vmem:[#allocation17 + $0x418] sm:$0xff]
          %v2082 = vld [vmem:[#allocation17 + $0x420] sm:$0xff]
          %v2083 = vld [vmem:[#allocation17 + $0x428] sm:$0xff]
          %v2084 = vld [vmem:[#allocation17 + $0x430] sm:$0xff]
          %v2085 = vld [vmem:[#allocation17 + $0x438] sm:$0xff]
          %v2086 = vld [vmem:[#allocation17 + $0x440] sm:$0xff]
          %v2087 = vld [vmem:[#allocation17 + $0x448] sm:$0xff]
          %v2088 = vld [vmem:[#allocation17 + $0x450] sm:$0xff]
          %v2089 = vld [vmem:[#allocation17 + $0x458] sm:$0xff]
          %v2090 = vld [vmem:[#allocation17 + $0x460] sm:$0xff]
          %v2091 = vld [vmem:[#allocation17 + $0x468] sm:$0xff]
          %v2092 = vld [vmem:[#allocation17 + $0x470] sm:$0xff]
          %v2093 = vld [vmem:[#allocation17 + $0x478] sm:$0xff]
          %v2094 = vld [vmem:[#allocation17 + $0x480] sm:$0xff]
          %v2095 = vld [vmem:[#allocation17 + $0x488] sm:$0xff]
          %v2096 = vld [vmem:[#allocation17 + $0x490] sm:$0xff]
          %v2097 = vld [vmem:[#allocation17 + $0x498] sm:$0xff]
          %v2098 = vld [vmem:[#allocation17 + $0x4a0] sm:$0xff]
          %v2099 = vld [vmem:[#allocation17 + $0x4a8] sm:$0xff]
          %v2100 = vld [vmem:[#allocation17 + $0x4b0] sm:$0xff]
          %v2101 = vld [vmem:[#allocation17 + $0x4b8] sm:$0xff]
          %v2102 = vld [vmem:[#allocation17 + $0x4c0] sm:$0xff]
          %v2103 = vld [vmem:[#allocation17 + $0x4c8] sm:$0xff]
          %v2104 = vld [vmem:[#allocation17 + $0x4d0] sm:$0xff]
          %v2105 = vld [vmem:[#allocation17 + $0x4d8] sm:$0xff]
          %v2106 = vld [vmem:[#allocation17 + $0x4e0] sm:$0xff]
          %v2107 = vld [vmem:[#allocation17 + $0x4e8] sm:$0xff]
          %v2108 = vld [vmem:[#allocation17 + $0x4f0] sm:$0xff]
          %v2109 = vld [vmem:[#allocation17 + $0x4f8] sm:$0xff]
          %v2110 = vld [vmem:[#allocation17 + $0x500] sm:$0xff]
          %v2111 = vld [vmem:[#allocation17 + $0x508] sm:$0xff]
          %v2112 = vld [vmem:[#allocation17 + $0x510] sm:$0xff]
          %v2113 = vld [vmem:[#allocation17 + $0x518] sm:$0xff]
          %v2114 = vld [vmem:[#allocation17 + $0x520] sm:$0xff]
          %v2115 = vld [vmem:[#allocation17 + $0x528] sm:$0xff]
          %v2116 = vld [vmem:[#allocation17 + $0x530] sm:$0xff]
          %v2117 = vld [vmem:[#allocation17 + $0x538] sm:$0xff]
          %v2118 = vld [vmem:[#allocation17 + $0x540] sm:$0xff]
          %v2119 = vld [vmem:[#allocation17 + $0x548] sm:$0xff]
          %v2120 = vld [vmem:[#allocation17 + $0x550] sm:$0xff]
          %v2121 = vld [vmem:[#allocation17 + $0x558] sm:$0xff]
          %v2122 = vld [vmem:[#allocation17 + $0x560] sm:$0xff]
          %v2123 = vld [vmem:[#allocation17 + $0x568] sm:$0xff]
          %v2124 = vld [vmem:[#allocation17 + $0x570] sm:$0xff]
          %v2125 = vld [vmem:[#allocation17 + $0x578] sm:$0xff]
          %v2126 = vld [vmem:[#allocation17 + $0x580] sm:$0xff]
          %v2127 = vld [vmem:[#allocation17 + $0x588] sm:$0xff]
          %v2128 = vld [vmem:[#allocation17 + $0x590] sm:$0xff]
          %v2129 = vld [vmem:[#allocation17 + $0x598] sm:$0xff]
          %v2130 = vld [vmem:[#allocation17 + $0x5a0] sm:$0xff]
          %v2131 = vld [vmem:[#allocation17 + $0x5a8] sm:$0xff]
          %v2132 = vld [vmem:[#allocation17 + $0x5b0] sm:$0xff]
          %v2133 = vld [vmem:[#allocation17 + $0x5b8] sm:$0xff]
          %v2134 = vld [vmem:[#allocation17 + $0x5c0] sm:$0xff]
          %v2135 = vld [vmem:[#allocation17 + $0x5c8] sm:$0xff]
          %v2136 = vld [vmem:[#allocation17 + $0x5d0] sm:$0xff]
          %v2137 = vld [vmem:[#allocation17 + $0x5d8] sm:$0xff]
          %v2138 = vld [vmem:[#allocation17 + $0x5e0] sm:$0xff]
          %v2139 = vld [vmem:[#allocation17 + $0x5e8] sm:$0xff]
          %v2140 = vld [vmem:[#allocation17 + $0x5f0] sm:$0xff]
          %v2141 = vld [vmem:[#allocation17 + $0x5f8] sm:$0xff]
          %v2142 = vld [vmem:[#allocation17 + $0x600] sm:$0xff]
          %v2143 = vld [vmem:[#allocation17 + $0x608] sm:$0xff]
          %v2144 = vld [vmem:[#allocation17 + $0x610] sm:$0xff]
          %v2145 = vld [vmem:[#allocation17 + $0x618] sm:$0xff]
          %v2146 = vld [vmem:[#allocation17 + $0x620] sm:$0xff]
          %v2147 = vld [vmem:[#allocation17 + $0x628] sm:$0xff]
          %v2148 = vld [vmem:[#allocation17 + $0x630] sm:$0xff]
          %v2149 = vld [vmem:[#allocation17 + $0x638] sm:$0xff]
          %v2150 = vld [vmem:[#allocation17 + $0x640] sm:$0xff]
          %v2151 = vld [vmem:[#allocation17 + $0x648] sm:$0xff]
          %v2152 = vld [vmem:[#allocation17 + $0x650] sm:$0xff]
          %v2153 = vld [vmem:[#allocation17 + $0x658] sm:$0xff]
          %v2154 = vld [vmem:[#allocation17 + $0x660] sm:$0xff]
          %v2155 = vld [vmem:[#allocation17 + $0x668] sm:$0xff]
          %v2156 = vld [vmem:[#allocation17 + $0x670] sm:$0xff]
          %v2157 = vld [vmem:[#allocation17 + $0x678] sm:$0xff]
          %v2158 = vld [vmem:[#allocation17 + $0x680] sm:$0xff]
          %v2159 = vld [vmem:[#allocation17 + $0x688] sm:$0xff]
          %v2160 = vld [vmem:[#allocation17 + $0x690] sm:$0xff]
          %v2161 = vld [vmem:[#allocation17 + $0x698] sm:$0xff]
          %v2162 = vld [vmem:[#allocation17 + $0x6a0] sm:$0xff]
          %v2163 = vld [vmem:[#allocation17 + $0x6a8] sm:$0xff]
          %v2164 = vld [vmem:[#allocation17 + $0x6b0] sm:$0xff]
          %v2165 = vld [vmem:[#allocation17 + $0x6b8] sm:$0xff]
          %v2166 = vld [vmem:[#allocation17 + $0x6c0] sm:$0xff]
          %v2167 = vld [vmem:[#allocation17 + $0x6c8] sm:$0xff]
          %v2168 = vld [vmem:[#allocation17 + $0x6d0] sm:$0xff]
          %v2169 = vld [vmem:[#allocation17 + $0x6d8] sm:$0xff]
          %v2170 = vld [vmem:[#allocation17 + $0x6e0] sm:$0xff]
          %v2171 = vld [vmem:[#allocation17 + $0x6e8] sm:$0xff]
          %v2172 = vld [vmem:[#allocation17 + $0x6f0] sm:$0xff]
          %v2173 = vld [vmem:[#allocation17 + $0x6f8] sm:$0xff]
          %v2174 = vld [vmem:[#allocation17 + $0x700] sm:$0xff]
          %v2175 = vld [vmem:[#allocation17 + $0x708] sm:$0xff]
          %v2176 = vld [vmem:[#allocation17 + $0x710] sm:$0xff]
          %v2177 = vld [vmem:[#allocation17 + $0x718] sm:$0xff]
          %v2178 = vld [vmem:[#allocation17 + $0x720] sm:$0xff]
          %v2179 = vld [vmem:[#allocation17 + $0x728] sm:$0xff]
          %v2180 = vld [vmem:[#allocation17 + $0x730] sm:$0xff]
          %v2181 = vld [vmem:[#allocation17 + $0x738] sm:$0xff]
          %v2182 = vld [vmem:[#allocation17 + $0x740] sm:$0xff]
          %v2183 = vld [vmem:[#allocation17 + $0x748] sm:$0xff]
          %v2184 = vld [vmem:[#allocation17 + $0x750] sm:$0xff]
          %v2185 = vld [vmem:[#allocation17 + $0x758] sm:$0xff]
          %v2186 = vld [vmem:[#allocation17 + $0x760] sm:$0xff]
          %v2187 = vld [vmem:[#allocation17 + $0x768] sm:$0xff]
          %v2188 = vld [vmem:[#allocation17 + $0x770] sm:$0xff]
          %v2189 = vld [vmem:[#allocation17 + $0x778] sm:$0xff]
          %v2190 = vld [vmem:[#allocation17 + $0x780] sm:$0xff]
          %v2191 = vld [vmem:[#allocation17 + $0x788] sm:$0xff]
          %v2192 = vld [vmem:[#allocation17 + $0x790] sm:$0xff]
          %v2193 = vld [vmem:[#allocation17 + $0x798] sm:$0xff]
          %v2194 = vld [vmem:[#allocation17 + $0x7a0] sm:$0xff]
          %v2195 = vld [vmem:[#allocation17 + $0x7a8] sm:$0xff]
          %v2196 = vld [vmem:[#allocation17 + $0x7b0] sm:$0xff]
          %v2197 = vld [vmem:[#allocation17 + $0x7b8] sm:$0xff]
          %v2198 = vld [vmem:[#allocation17 + $0x7c0] sm:$0xff]
          %v2199 = vld [vmem:[#allocation17 + $0x7c8] sm:$0xff]
          %v2200 = vld [vmem:[#allocation17 + $0x7d0] sm:$0xff]
          %v2201 = vld [vmem:[#allocation17 + $0x7d8] sm:$0xff]
          %v2202 = vld [vmem:[#allocation17 + $0x7e0] sm:$0xff]
          %v2203 = vld [vmem:[#allocation17 + $0x7e8] sm:$0xff]
          %v2204 = vld [vmem:[#allocation17 + $0x7f0] sm:$0xff]
          %v2205 = vld [vmem:[#allocation17 + $0x7f8] sm:$0xff]
          %v2206 = vld [vmem:[%s14] sm:$0xf]
          %v2208 = vlaneseq
          %v2209 = vshrl.u32 %v2208, 7
          %v2210 = vsub.s32 0, %v2209
          %v2211 = vrot.slane %v2206, %v2210
          %v2212 = vlaneseq
          %v2213 = vshrl.u32 %v2212, 7
          %v2214 = vsub.s32 1, %v2213
          %v2215 = vrot.slane %v2206, %v2214
          %v2216 = vlaneseq
          %v2217 = vshrl.u32 %v2216, 7
          %v2218 = vsub.s32 2, %v2217
          %v2219 = vrot.slane %v2206, %v2218
          %v2220 = vlaneseq
          %v2221 = vshrl.u32 %v2220, 7
          %v2222 = vsub.s32 3, %v2221
          %v2223 = vrot.slane %v2206, %v2222
          %v2484 = vunpack.c.l.b16 %v1950
          %v2485 = vunpack.c.h.b16 %v1950
          %v2486 = vunpack.c.l.b16 %v1951
          %v2487 = vunpack.c.h.b16 %v1951
          %v2488 = vunpack.c.l.b16 %v1952
          %v2489 = vunpack.c.h.b16 %v1952
          %v2490 = vunpack.c.l.b16 %v1953
          %v2491 = vunpack.c.h.b16 %v1953
          %v2492 = vunpack.c.l.b16 %v1954
          %v2493 = vunpack.c.h.b16 %v1954
          %v2494 = vunpack.c.l.b16 %v1955
          %v2495 = vunpack.c.h.b16 %v1955
          %v2496 = vunpack.c.l.b16 %v1956
          %v2497 = vunpack.c.h.b16 %v1956
          %v2498 = vunpack.c.l.b16 %v1957
          %v2499 = vunpack.c.h.b16 %v1957
          %v2500 = vunpack.c.l.b16 %v1958
          %v2501 = vunpack.c.h.b16 %v1958
          %v2502 = vunpack.c.l.b16 %v1959
          %v2503 = vunpack.c.h.b16 %v1959
          %v2504 = vunpack.c.l.b16 %v1960
          %v2505 = vunpack.c.h.b16 %v1960
          %v2506 = vunpack.c.l.b16 %v1961
          %v2507 = vunpack.c.h.b16 %v1961
          %v2508 = vunpack.c.l.b16 %v1962
          %v2509 = vunpack.c.h.b16 %v1962
          %v2510 = vunpack.c.l.b16 %v1963
          %v2511 = vunpack.c.h.b16 %v1963
          %v2512 = vunpack.c.l.b16 %v1964
          %v2513 = vunpack.c.h.b16 %v1964
          %v2514 = vunpack.c.l.b16 %v1965
          %v2515 = vunpack.c.h.b16 %v1965
          %v2516 = vunpack.c.l.b16 %v1966
          %v2517 = vunpack.c.h.b16 %v1966
          %v2518 = vunpack.c.l.b16 %v1967
          %v2519 = vunpack.c.h.b16 %v1967
          %v2520 = vunpack.c.l.b16 %v1968
          %v2521 = vunpack.c.h.b16 %v1968
          %v2522 = vunpack.c.l.b16 %v1969
          %v2523 = vunpack.c.h.b16 %v1969
          %v2524 = vunpack.c.l.b16 %v1970
          %v2525 = vunpack.c.h.b16 %v1970
          %v2526 = vunpack.c.l.b16 %v1971
          %v2527 = vunpack.c.h.b16 %v1971
          %v2528 = vunpack.c.l.b16 %v1972
          %v2529 = vunpack.c.h.b16 %v1972
          %v2530 = vunpack.c.l.b16 %v1973
          %v2531 = vunpack.c.h.b16 %v1973
          %v2532 = vunpack.c.l.b16 %v1974
          %v2533 = vunpack.c.h.b16 %v1974
          %v2534 = vunpack.c.l.b16 %v1975
          %v2535 = vunpack.c.h.b16 %v1975
          %v2536 = vunpack.c.l.b16 %v1976
          %v2537 = vunpack.c.h.b16 %v1976
          %v2538 = vunpack.c.l.b16 %v1977
          %v2539 = vunpack.c.h.b16 %v1977
          %v2540 = vunpack.c.l.b16 %v1978
          %v2541 = vunpack.c.h.b16 %v1978
          %v2542 = vunpack.c.l.b16 %v1979
          %v2543 = vunpack.c.h.b16 %v1979
          %v2544 = vunpack.c.l.b16 %v1980
          %v2545 = vunpack.c.h.b16 %v1980
          %v2546 = vunpack.c.l.b16 %v1981
          %v2547 = vunpack.c.h.b16 %v1981
          %v2548 = vunpack.c.l.b16 %v1982
          %v2549 = vunpack.c.h.b16 %v1982
          %v2550 = vunpack.c.l.b16 %v1983
          %v2551 = vunpack.c.h.b16 %v1983
          %v2552 = vunpack.c.l.b16 %v1984
          %v2553 = vunpack.c.h.b16 %v1984
          %v2554 = vunpack.c.l.b16 %v1985
          %v2555 = vunpack.c.h.b16 %v1985
          %v2556 = vunpack.c.l.b16 %v1986
          %v2557 = vunpack.c.h.b16 %v1986
          %v2558 = vunpack.c.l.b16 %v1987
          %v2559 = vunpack.c.h.b16 %v1987
          %v2560 = vunpack.c.l.b16 %v1988
          %v2561 = vunpack.c.h.b16 %v1988
          %v2562 = vunpack.c.l.b16 %v1989
          %v2563 = vunpack.c.h.b16 %v1989
          %v2564 = vunpack.c.l.b16 %v1990
          %v2565 = vunpack.c.h.b16 %v1990
          %v2566 = vunpack.c.l.b16 %v1991
          %v2567 = vunpack.c.h.b16 %v1991
          %v2568 = vunpack.c.l.b16 %v1992
          %v2569 = vunpack.c.h.b16 %v1992
          %v2570 = vunpack.c.l.b16 %v1993
          %v2571 = vunpack.c.h.b16 %v1993
          %v2572 = vunpack.c.l.b16 %v1994
          %v2573 = vunpack.c.h.b16 %v1994
          %v2574 = vunpack.c.l.b16 %v1995
          %v2575 = vunpack.c.h.b16 %v1995
          %v2576 = vunpack.c.l.b16 %v1996
          %v2577 = vunpack.c.h.b16 %v1996
          %v2578 = vunpack.c.l.b16 %v1997
          %v2579 = vunpack.c.h.b16 %v1997
          %v2580 = vunpack.c.l.b16 %v1998
          %v2581 = vunpack.c.h.b16 %v1998
          %v2582 = vunpack.c.l.b16 %v1999
          %v2583 = vunpack.c.h.b16 %v1999
          %v2584 = vunpack.c.l.b16 %v2000
          %v2585 = vunpack.c.h.b16 %v2000
          %v2586 = vunpack.c.l.b16 %v2001
          %v2587 = vunpack.c.h.b16 %v2001
          %v2588 = vunpack.c.l.b16 %v2002
          %v2589 = vunpack.c.h.b16 %v2002
          %v2590 = vunpack.c.l.b16 %v2003
          %v2591 = vunpack.c.h.b16 %v2003
          %v2592 = vunpack.c.l.b16 %v2004
          %v2593 = vunpack.c.h.b16 %v2004
          %v2594 = vunpack.c.l.b16 %v2005
          %v2595 = vunpack.c.h.b16 %v2005
          %v2596 = vunpack.c.l.b16 %v2006
          %v2597 = vunpack.c.h.b16 %v2006
          %v2598 = vunpack.c.l.b16 %v2007
          %v2599 = vunpack.c.h.b16 %v2007
          %v2600 = vunpack.c.l.b16 %v2008
          %v2601 = vunpack.c.h.b16 %v2008
          %v2602 = vunpack.c.l.b16 %v2009
          %v2603 = vunpack.c.h.b16 %v2009
          %v2604 = vunpack.c.l.b16 %v2010
          %v2605 = vunpack.c.h.b16 %v2010
          %v2606 = vunpack.c.l.b16 %v2011
          %v2607 = vunpack.c.h.b16 %v2011
          %v2608 = vunpack.c.l.b16 %v2012
          %v2609 = vunpack.c.h.b16 %v2012
          %v2610 = vunpack.c.l.b16 %v2013
          %v2611 = vunpack.c.h.b16 %v2013
          %v2612 = vunpack.c.l.b16 %v2014
          %v2613 = vunpack.c.h.b16 %v2014
          %v2614 = vunpack.c.l.b16 %v2015
          %v2615 = vunpack.c.h.b16 %v2015
          %v2616 = vunpack.c.l.b16 %v2016
          %v2617 = vunpack.c.h.b16 %v2016
          %v2618 = vunpack.c.l.b16 %v2017
          %v2619 = vunpack.c.h.b16 %v2017
          %v2620 = vunpack.c.l.b16 %v2018
          %v2621 = vunpack.c.h.b16 %v2018
          %v2622 = vunpack.c.l.b16 %v2019
          %v2623 = vunpack.c.h.b16 %v2019
          %v2624 = vunpack.c.l.b16 %v2020
          %v2625 = vunpack.c.h.b16 %v2020
          %v2626 = vunpack.c.l.b16 %v2021
          %v2627 = vunpack.c.h.b16 %v2021
          %v2628 = vunpack.c.l.b16 %v2022
          %v2629 = vunpack.c.h.b16 %v2022
          %v2630 = vunpack.c.l.b16 %v2023
          %v2631 = vunpack.c.h.b16 %v2023
          %v2632 = vunpack.c.l.b16 %v2024
          %v2633 = vunpack.c.h.b16 %v2024
          %v2634 = vunpack.c.l.b16 %v2025
          %v2635 = vunpack.c.h.b16 %v2025
          %v2636 = vunpack.c.l.b16 %v2026
          %v2637 = vunpack.c.h.b16 %v2026
          %v2638 = vunpack.c.l.b16 %v2027
          %v2639 = vunpack.c.h.b16 %v2027
          %v2640 = vunpack.c.l.b16 %v2028
          %v2641 = vunpack.c.h.b16 %v2028
          %v2642 = vunpack.c.l.b16 %v2029
          %v2643 = vunpack.c.h.b16 %v2029
          %v2644 = vunpack.c.l.b16 %v2030
          %v2645 = vunpack.c.h.b16 %v2030
          %v2646 = vunpack.c.l.b16 %v2031
          %v2647 = vunpack.c.h.b16 %v2031
          %v2648 = vunpack.c.l.b16 %v2032
          %v2649 = vunpack.c.h.b16 %v2032
          %v2650 = vunpack.c.l.b16 %v2033
          %v2651 = vunpack.c.h.b16 %v2033
          %v2652 = vunpack.c.l.b16 %v2034
          %v2653 = vunpack.c.h.b16 %v2034
          %v2654 = vunpack.c.l.b16 %v2035
          %v2655 = vunpack.c.h.b16 %v2035
          %v2656 = vunpack.c.l.b16 %v2036
          %v2657 = vunpack.c.h.b16 %v2036
          %v2658 = vunpack.c.l.b16 %v2037
          %v2659 = vunpack.c.h.b16 %v2037
          %v2660 = vunpack.c.l.b16 %v2038
          %v2661 = vunpack.c.h.b16 %v2038
          %v2662 = vunpack.c.l.b16 %v2039
          %v2663 = vunpack.c.h.b16 %v2039
          %v2664 = vunpack.c.l.b16 %v2040
          %v2665 = vunpack.c.h.b16 %v2040
          %v2666 = vunpack.c.l.b16 %v2041
          %v2667 = vunpack.c.h.b16 %v2041
          %v2668 = vunpack.c.l.b16 %v2042
          %v2669 = vunpack.c.h.b16 %v2042
          %v2670 = vunpack.c.l.b16 %v2043
          %v2671 = vunpack.c.h.b16 %v2043
          %v2672 = vunpack.c.l.b16 %v2044
          %v2673 = vunpack.c.h.b16 %v2044
          %v2674 = vunpack.c.l.b16 %v2045
          %v2675 = vunpack.c.h.b16 %v2045
          %v2676 = vunpack.c.l.b16 %v2046
          %v2677 = vunpack.c.h.b16 %v2046
          %v2678 = vunpack.c.l.b16 %v2047
          %v2679 = vunpack.c.h.b16 %v2047
          %v2680 = vunpack.c.l.b16 %v2048
          %v2681 = vunpack.c.h.b16 %v2048
          %v2682 = vunpack.c.l.b16 %v2049
          %v2683 = vunpack.c.h.b16 %v2049
          %v2684 = vunpack.c.l.b16 %v2050
          %v2685 = vunpack.c.h.b16 %v2050
          %v2686 = vunpack.c.l.b16 %v2051
          %v2687 = vunpack.c.h.b16 %v2051
          %v2688 = vunpack.c.l.b16 %v2052
          %v2689 = vunpack.c.h.b16 %v2052
          %v2690 = vunpack.c.l.b16 %v2053
          %v2691 = vunpack.c.h.b16 %v2053
          %v2692 = vunpack.c.l.b16 %v2054
          %v2693 = vunpack.c.h.b16 %v2054
          %v2694 = vunpack.c.l.b16 %v2055
          %v2695 = vunpack.c.h.b16 %v2055
          %v2696 = vunpack.c.l.b16 %v2056
          %v2697 = vunpack.c.h.b16 %v2056
          %v2698 = vunpack.c.l.b16 %v2057
          %v2699 = vunpack.c.h.b16 %v2057
          %v2700 = vunpack.c.l.b16 %v2058
          %v2701 = vunpack.c.h.b16 %v2058
          %v2702 = vunpack.c.l.b16 %v2059
          %v2703 = vunpack.c.h.b16 %v2059
          %v2704 = vunpack.c.l.b16 %v2060
          %v2705 = vunpack.c.h.b16 %v2060
          %v2706 = vunpack.c.l.b16 %v2061
          %v2707 = vunpack.c.h.b16 %v2061
          %v2708 = vunpack.c.l.b16 %v2062
          %v2709 = vunpack.c.h.b16 %v2062
          %v2710 = vunpack.c.l.b16 %v2063
          %v2711 = vunpack.c.h.b16 %v2063
          %v2712 = vunpack.c.l.b16 %v2064
          %v2713 = vunpack.c.h.b16 %v2064
          %v2714 = vunpack.c.l.b16 %v2065
          %v2715 = vunpack.c.h.b16 %v2065
          %v2716 = vunpack.c.l.b16 %v2066
          %v2717 = vunpack.c.h.b16 %v2066
          %v2718 = vunpack.c.l.b16 %v2067
          %v2719 = vunpack.c.h.b16 %v2067
          %v2720 = vunpack.c.l.b16 %v2068
          %v2721 = vunpack.c.h.b16 %v2068
          %v2722 = vunpack.c.l.b16 %v2069
          %v2723 = vunpack.c.h.b16 %v2069
          %v2724 = vunpack.c.l.b16 %v2070
          %v2725 = vunpack.c.h.b16 %v2070
          %v2726 = vunpack.c.l.b16 %v2071
          %v2727 = vunpack.c.h.b16 %v2071
          %v2728 = vunpack.c.l.b16 %v2072
          %v2729 = vunpack.c.h.b16 %v2072
          %v2730 = vunpack.c.l.b16 %v2073
          %v2731 = vunpack.c.h.b16 %v2073
          %v2732 = vunpack.c.l.b16 %v2074
          %v2733 = vunpack.c.h.b16 %v2074
          %v2734 = vunpack.c.l.b16 %v2075
          %v2735 = vunpack.c.h.b16 %v2075
          %v2736 = vunpack.c.l.b16 %v2076
          %v2737 = vunpack.c.h.b16 %v2076
          %v2738 = vunpack.c.l.b16 %v2077
          %v2739 = vunpack.c.h.b16 %v2077
          %v2740 = vunpack.c.l.b16 %v2078
          %v2741 = vunpack.c.h.b16 %v2078
          %v2742 = vunpack.c.l.b16 %v2079
          %v2743 = vunpack.c.h.b16 %v2079
          %v2744 = vunpack.c.l.b16 %v2080
          %v2745 = vunpack.c.h.b16 %v2080
          %v2746 = vunpack.c.l.b16 %v2081
          %v2747 = vunpack.c.h.b16 %v2081
          %v2748 = vunpack.c.l.b16 %v2082
          %v2749 = vunpack.c.h.b16 %v2082
          %v2750 = vunpack.c.l.b16 %v2083
          %v2751 = vunpack.c.h.b16 %v2083
          %v2752 = vunpack.c.l.b16 %v2084
          %v2753 = vunpack.c.h.b16 %v2084
          %v2754 = vunpack.c.l.b16 %v2085
          %v2755 = vunpack.c.h.b16 %v2085
          %v2756 = vunpack.c.l.b16 %v2086
          %v2757 = vunpack.c.h.b16 %v2086
          %v2758 = vunpack.c.l.b16 %v2087
          %v2759 = vunpack.c.h.b16 %v2087
          %v2760 = vunpack.c.l.b16 %v2088
          %v2761 = vunpack.c.h.b16 %v2088
          %v2762 = vunpack.c.l.b16 %v2089
          %v2763 = vunpack.c.h.b16 %v2089
          %v2764 = vunpack.c.l.b16 %v2090
          %v2765 = vunpack.c.h.b16 %v2090
          %v2766 = vunpack.c.l.b16 %v2091
          %v2767 = vunpack.c.h.b16 %v2091
          %v2768 = vunpack.c.l.b16 %v2092
          %v2769 = vunpack.c.h.b16 %v2092
          %v2770 = vunpack.c.l.b16 %v2093
          %v2771 = vunpack.c.h.b16 %v2093
          %v2772 = vunpack.c.l.b16 %v2094
          %v2773 = vunpack.c.h.b16 %v2094
          %v2774 = vunpack.c.l.b16 %v2095
          %v2775 = vunpack.c.h.b16 %v2095
          %v2776 = vunpack.c.l.b16 %v2096
          %v2777 = vunpack.c.h.b16 %v2096
          %v2778 = vunpack.c.l.b16 %v2097
          %v2779 = vunpack.c.h.b16 %v2097
          %v2780 = vunpack.c.l.b16 %v2098
          %v2781 = vunpack.c.h.b16 %v2098
          %v2782 = vunpack.c.l.b16 %v2099
          %v2783 = vunpack.c.h.b16 %v2099
          %v2784 = vunpack.c.l.b16 %v2100
          %v2785 = vunpack.c.h.b16 %v2100
          %v2786 = vunpack.c.l.b16 %v2101
          %v2787 = vunpack.c.h.b16 %v2101
          %v2788 = vunpack.c.l.b16 %v2102
          %v2789 = vunpack.c.h.b16 %v2102
          %v2790 = vunpack.c.l.b16 %v2103
          %v2791 = vunpack.c.h.b16 %v2103
          %v2792 = vunpack.c.l.b16 %v2104
          %v2793 = vunpack.c.h.b16 %v2104
          %v2794 = vunpack.c.l.b16 %v2105
          %v2795 = vunpack.c.h.b16 %v2105
          %v2796 = vunpack.c.l.b16 %v2106
          %v2797 = vunpack.c.h.b16 %v2106
          %v2798 = vunpack.c.l.b16 %v2107
          %v2799 = vunpack.c.h.b16 %v2107
          %v2800 = vunpack.c.l.b16 %v2108
          %v2801 = vunpack.c.h.b16 %v2108
          %v2802 = vunpack.c.l.b16 %v2109
          %v2803 = vunpack.c.h.b16 %v2109
          %v2804 = vunpack.c.l.b16 %v2110
          %v2805 = vunpack.c.h.b16 %v2110
          %v2806 = vunpack.c.l.b16 %v2111
          %v2807 = vunpack.c.h.b16 %v2111
          %v2808 = vunpack.c.l.b16 %v2112
          %v2809 = vunpack.c.h.b16 %v2112
          %v2810 = vunpack.c.l.b16 %v2113
          %v2811 = vunpack.c.h.b16 %v2113
          %v2812 = vunpack.c.l.b16 %v2114
          %v2813 = vunpack.c.h.b16 %v2114
          %v2814 = vunpack.c.l.b16 %v2115
          %v2815 = vunpack.c.h.b16 %v2115
          %v2816 = vunpack.c.l.b16 %v2116
          %v2817 = vunpack.c.h.b16 %v2116
          %v2818 = vunpack.c.l.b16 %v2117
          %v2819 = vunpack.c.h.b16 %v2117
          %v2820 = vunpack.c.l.b16 %v2118
          %v2821 = vunpack.c.h.b16 %v2118
          %v2822 = vunpack.c.l.b16 %v2119
          %v2823 = vunpack.c.h.b16 %v2119
          %v2824 = vunpack.c.l.b16 %v2120
          %v2825 = vunpack.c.h.b16 %v2120
          %v2826 = vunpack.c.l.b16 %v2121
          %v2827 = vunpack.c.h.b16 %v2121
          %v2828 = vunpack.c.l.b16 %v2122
          %v2829 = vunpack.c.h.b16 %v2122
          %v2830 = vunpack.c.l.b16 %v2123
          %v2831 = vunpack.c.h.b16 %v2123
          %v2832 = vunpack.c.l.b16 %v2124
          %v2833 = vunpack.c.h.b16 %v2124
          %v2834 = vunpack.c.l.b16 %v2125
          %v2835 = vunpack.c.h.b16 %v2125
          %v2836 = vunpack.c.l.b16 %v2126
          %v2837 = vunpack.c.h.b16 %v2126
          %v2838 = vunpack.c.l.b16 %v2127
          %v2839 = vunpack.c.h.b16 %v2127
          %v2840 = vunpack.c.l.b16 %v2128
          %v2841 = vunpack.c.h.b16 %v2128
          %v2842 = vunpack.c.l.b16 %v2129
          %v2843 = vunpack.c.h.b16 %v2129
          %v2844 = vunpack.c.l.b16 %v2130
          %v2845 = vunpack.c.h.b16 %v2130
          %v2846 = vunpack.c.l.b16 %v2131
          %v2847 = vunpack.c.h.b16 %v2131
          %v2848 = vunpack.c.l.b16 %v2132
          %v2849 = vunpack.c.h.b16 %v2132
          %v2850 = vunpack.c.l.b16 %v2133
          %v2851 = vunpack.c.h.b16 %v2133
          %v2852 = vunpack.c.l.b16 %v2134
          %v2853 = vunpack.c.h.b16 %v2134
          %v2854 = vunpack.c.l.b16 %v2135
          %v2855 = vunpack.c.h.b16 %v2135
          %v2856 = vunpack.c.l.b16 %v2136
          %v2857 = vunpack.c.h.b16 %v2136
          %v2858 = vunpack.c.l.b16 %v2137
          %v2859 = vunpack.c.h.b16 %v2137
          %v2860 = vunpack.c.l.b16 %v2138
          %v2861 = vunpack.c.h.b16 %v2138
          %v2862 = vunpack.c.l.b16 %v2139
          %v2863 = vunpack.c.h.b16 %v2139
          %v2864 = vunpack.c.l.b16 %v2140
          %v2865 = vunpack.c.h.b16 %v2140
          %v2866 = vunpack.c.l.b16 %v2141
          %v2867 = vunpack.c.h.b16 %v2141
          %v2868 = vunpack.c.l.b16 %v2142
          %v2869 = vunpack.c.h.b16 %v2142
          %v2870 = vunpack.c.l.b16 %v2143
          %v2871 = vunpack.c.h.b16 %v2143
          %v2872 = vunpack.c.l.b16 %v2144
          %v2873 = vunpack.c.h.b16 %v2144
          %v2874 = vunpack.c.l.b16 %v2145
          %v2875 = vunpack.c.h.b16 %v2145
          %v2876 = vunpack.c.l.b16 %v2146
          %v2877 = vunpack.c.h.b16 %v2146
          %v2878 = vunpack.c.l.b16 %v2147
          %v2879 = vunpack.c.h.b16 %v2147
          %v2880 = vunpack.c.l.b16 %v2148
          %v2881 = vunpack.c.h.b16 %v2148
          %v2882 = vunpack.c.l.b16 %v2149
          %v2883 = vunpack.c.h.b16 %v2149
          %v2884 = vunpack.c.l.b16 %v2150
          %v2885 = vunpack.c.h.b16 %v2150
          %v2886 = vunpack.c.l.b16 %v2151
          %v2887 = vunpack.c.h.b16 %v2151
          %v2888 = vunpack.c.l.b16 %v2152
          %v2889 = vunpack.c.h.b16 %v2152
          %v2890 = vunpack.c.l.b16 %v2153
          %v2891 = vunpack.c.h.b16 %v2153
          %v2892 = vunpack.c.l.b16 %v2154
          %v2893 = vunpack.c.h.b16 %v2154
          %v2894 = vunpack.c.l.b16 %v2155
          %v2895 = vunpack.c.h.b16 %v2155
          %v2896 = vunpack.c.l.b16 %v2156
          %v2897 = vunpack.c.h.b16 %v2156
          %v2898 = vunpack.c.l.b16 %v2157
          %v2899 = vunpack.c.h.b16 %v2157
          %v2900 = vunpack.c.l.b16 %v2158
          %v2901 = vunpack.c.h.b16 %v2158
          %v2902 = vunpack.c.l.b16 %v2159
          %v2903 = vunpack.c.h.b16 %v2159
          %v2904 = vunpack.c.l.b16 %v2160
          %v2905 = vunpack.c.h.b16 %v2160
          %v2906 = vunpack.c.l.b16 %v2161
          %v2907 = vunpack.c.h.b16 %v2161
          %v2908 = vunpack.c.l.b16 %v2162
          %v2909 = vunpack.c.h.b16 %v2162
          %v2910 = vunpack.c.l.b16 %v2163
          %v2911 = vunpack.c.h.b16 %v2163
          %v2912 = vunpack.c.l.b16 %v2164
          %v2913 = vunpack.c.h.b16 %v2164
          %v2914 = vunpack.c.l.b16 %v2165
          %v2915 = vunpack.c.h.b16 %v2165
          %v2916 = vunpack.c.l.b16 %v2166
          %v2917 = vunpack.c.h.b16 %v2166
          %v2918 = vunpack.c.l.b16 %v2167
          %v2919 = vunpack.c.h.b16 %v2167
          %v2920 = vunpack.c.l.b16 %v2168
          %v2921 = vunpack.c.h.b16 %v2168
          %v2922 = vunpack.c.l.b16 %v2169
          %v2923 = vunpack.c.h.b16 %v2169
          %v2924 = vunpack.c.l.b16 %v2170
          %v2925 = vunpack.c.h.b16 %v2170
          %v2926 = vunpack.c.l.b16 %v2171
          %v2927 = vunpack.c.h.b16 %v2171
          %v2928 = vunpack.c.l.b16 %v2172
          %v2929 = vunpack.c.h.b16 %v2172
          %v2930 = vunpack.c.l.b16 %v2173
          %v2931 = vunpack.c.h.b16 %v2173
          %v2932 = vunpack.c.l.b16 %v2174
          %v2933 = vunpack.c.h.b16 %v2174
          %v2934 = vunpack.c.l.b16 %v2175
          %v2935 = vunpack.c.h.b16 %v2175
          %v2936 = vunpack.c.l.b16 %v2176
          %v2937 = vunpack.c.h.b16 %v2176
          %v2938 = vunpack.c.l.b16 %v2177
          %v2939 = vunpack.c.h.b16 %v2177
          %v2940 = vunpack.c.l.b16 %v2178
          %v2941 = vunpack.c.h.b16 %v2178
          %v2942 = vunpack.c.l.b16 %v2179
          %v2943 = vunpack.c.h.b16 %v2179
          %v2944 = vunpack.c.l.b16 %v2180
          %v2945 = vunpack.c.h.b16 %v2180
          %v2946 = vunpack.c.l.b16 %v2181
          %v2947 = vunpack.c.h.b16 %v2181
          %v2948 = vunpack.c.l.b16 %v2182
          %v2949 = vunpack.c.h.b16 %v2182
          %v2950 = vunpack.c.l.b16 %v2183
          %v2951 = vunpack.c.h.b16 %v2183
          %v2952 = vunpack.c.l.b16 %v2184
          %v2953 = vunpack.c.h.b16 %v2184
          %v2954 = vunpack.c.l.b16 %v2185
          %v2955 = vunpack.c.h.b16 %v2185
          %v2956 = vunpack.c.l.b16 %v2186
          %v2957 = vunpack.c.h.b16 %v2186
          %v2958 = vunpack.c.l.b16 %v2187
          %v2959 = vunpack.c.h.b16 %v2187
          %v2960 = vunpack.c.l.b16 %v2188
          %v2961 = vunpack.c.h.b16 %v2188
          %v2962 = vunpack.c.l.b16 %v2189
          %v2963 = vunpack.c.h.b16 %v2189
          %v2964 = vunpack.c.l.b16 %v2190
          %v2965 = vunpack.c.h.b16 %v2190
          %v2966 = vunpack.c.l.b16 %v2191
          %v2967 = vunpack.c.h.b16 %v2191
          %v2968 = vunpack.c.l.b16 %v2192
          %v2969 = vunpack.c.h.b16 %v2192
          %v2970 = vunpack.c.l.b16 %v2193
          %v2971 = vunpack.c.h.b16 %v2193
          %v2972 = vunpack.c.l.b16 %v2194
          %v2973 = vunpack.c.h.b16 %v2194
          %v2974 = vunpack.c.l.b16 %v2195
          %v2975 = vunpack.c.h.b16 %v2195
          %v2976 = vunpack.c.l.b16 %v2196
          %v2977 = vunpack.c.h.b16 %v2196
          %v2978 = vunpack.c.l.b16 %v2197
          %v2979 = vunpack.c.h.b16 %v2197
          %v2980 = vunpack.c.l.b16 %v2198
          %v2981 = vunpack.c.h.b16 %v2198
          %v2982 = vunpack.c.l.b16 %v2199
          %v2983 = vunpack.c.h.b16 %v2199
          %v2984 = vunpack.c.l.b16 %v2200
          %v2985 = vunpack.c.h.b16 %v2200
          %v2986 = vunpack.c.l.b16 %v2201
          %v2987 = vunpack.c.h.b16 %v2201
          %v2988 = vunpack.c.l.b16 %v2202
          %v2989 = vunpack.c.h.b16 %v2202
          %v2990 = vunpack.c.l.b16 %v2203
          %v2991 = vunpack.c.h.b16 %v2203
          %v2992 = vunpack.c.l.b16 %v2204
          %v2993 = vunpack.c.h.b16 %v2204
          %v2994 = vunpack.c.l.b16 %v2205
          %v2995 = vunpack.c.h.b16 %v2205
          %v2996 = vpack.c.b16 %v2488, %v2484
          %v2997 = vpack.c.b16 %v2489, %v2485
          %v2998 = vpack.c.b16 %v2490, %v2486
          %v2999 = vpack.c.b16 %v2491, %v2487
          %v3000 = vpack.c.b16 %v2496, %v2492
          %v3001 = vpack.c.b16 %v2497, %v2493
          %v3002 = vpack.c.b16 %v2498, %v2494
          %v3003 = vpack.c.b16 %v2499, %v2495
          %v3004 = vpack.c.b16 %v2504, %v2500
          %v3005 = vpack.c.b16 %v2505, %v2501
          %v3006 = vpack.c.b16 %v2506, %v2502
          %v3007 = vpack.c.b16 %v2507, %v2503
          %v3008 = vpack.c.b16 %v2512, %v2508
          %v3009 = vpack.c.b16 %v2513, %v2509
          %v3010 = vpack.c.b16 %v2514, %v2510
          %v3011 = vpack.c.b16 %v2515, %v2511
          %v3012 = vpack.c.b16 %v2520, %v2516
          %v3013 = vpack.c.b16 %v2521, %v2517
          %v3014 = vpack.c.b16 %v2522, %v2518
          %v3015 = vpack.c.b16 %v2523, %v2519
          %v3016 = vpack.c.b16 %v2528, %v2524
          %v3017 = vpack.c.b16 %v2529, %v2525
          %v3018 = vpack.c.b16 %v2530, %v2526
          %v3019 = vpack.c.b16 %v2531, %v2527
          %v3020 = vpack.c.b16 %v2536, %v2532
          %v3021 = vpack.c.b16 %v2537, %v2533
          %v3022 = vpack.c.b16 %v2538, %v2534
          %v3023 = vpack.c.b16 %v2539, %v2535
          %v3024 = vpack.c.b16 %v2544, %v2540
          %v3025 = vpack.c.b16 %v2545, %v2541
          %v3026 = vpack.c.b16 %v2546, %v2542
          %v3027 = vpack.c.b16 %v2547, %v2543
          %v3028 = vpack.c.b16 %v2552, %v2548
          %v3029 = vpack.c.b16 %v2553, %v2549
          %v3030 = vpack.c.b16 %v2554, %v2550
          %v3031 = vpack.c.b16 %v2555, %v2551
          %v3032 = vpack.c.b16 %v2560, %v2556
          %v3033 = vpack.c.b16 %v2561, %v2557
          %v3034 = vpack.c.b16 %v2562, %v2558
          %v3035 = vpack.c.b16 %v2563, %v2559
          %v3036 = vpack.c.b16 %v2568, %v2564
          %v3037 = vpack.c.b16 %v2569, %v2565
          %v3038 = vpack.c.b16 %v2570, %v2566
          %v3039 = vpack.c.b16 %v2571, %v2567
          %v3040 = vpack.c.b16 %v2576, %v2572
          %v3041 = vpack.c.b16 %v2577, %v2573
          %v3042 = vpack.c.b16 %v2578, %v2574
          %v3043 = vpack.c.b16 %v2579, %v2575
          %v3044 = vpack.c.b16 %v2584, %v2580
          %v3045 = vpack.c.b16 %v2585, %v2581
          %v3046 = vpack.c.b16 %v2586, %v2582
          %v3047 = vpack.c.b16 %v2587, %v2583
          %v3048 = vpack.c.b16 %v2592, %v2588
          %v3049 = vpack.c.b16 %v2593, %v2589
          %v3050 = vpack.c.b16 %v2594, %v2590
          %v3051 = vpack.c.b16 %v2595, %v2591
          %v3052 = vpack.c.b16 %v2600, %v2596
          %v3053 = vpack.c.b16 %v2601, %v2597
          %v3054 = vpack.c.b16 %v2602, %v2598
          %v3055 = vpack.c.b16 %v2603, %v2599
          %v3056 = vpack.c.b16 %v2608, %v2604
          %v3057 = vpack.c.b16 %v2609, %v2605
          %v3058 = vpack.c.b16 %v2610, %v2606
          %v3059 = vpack.c.b16 %v2611, %v2607
          %v3060 = vpack.c.b16 %v2616, %v2612
          %v3061 = vpack.c.b16 %v2617, %v2613
          %v3062 = vpack.c.b16 %v2618, %v2614
          %v3063 = vpack.c.b16 %v2619, %v2615
          %v3064 = vpack.c.b16 %v2624, %v2620
          %v3065 = vpack.c.b16 %v2625, %v2621
          %v3066 = vpack.c.b16 %v2626, %v2622
          %v3067 = vpack.c.b16 %v2627, %v2623
          %v3068 = vpack.c.b16 %v2632, %v2628
          %v3069 = vpack.c.b16 %v2633, %v2629
          %v3070 = vpack.c.b16 %v2634, %v2630
          %v3071 = vpack.c.b16 %v2635, %v2631
          %v3072 = vpack.c.b16 %v2640, %v2636
          %v3073 = vpack.c.b16 %v2641, %v2637
          %v3074 = vpack.c.b16 %v2642, %v2638
          %v3075 = vpack.c.b16 %v2643, %v2639
          %v3076 = vpack.c.b16 %v2648, %v2644
          %v3077 = vpack.c.b16 %v2649, %v2645
          %v3078 = vpack.c.b16 %v2650, %v2646
          %v3079 = vpack.c.b16 %v2651, %v2647
          %v3080 = vpack.c.b16 %v2656, %v2652
          %v3081 = vpack.c.b16 %v2657, %v2653
          %v3082 = vpack.c.b16 %v2658, %v2654
          %v3083 = vpack.c.b16 %v2659, %v2655
          %v3084 = vpack.c.b16 %v2664, %v2660
          %v3085 = vpack.c.b16 %v2665, %v2661
          %v3086 = vpack.c.b16 %v2666, %v2662
          %v3087 = vpack.c.b16 %v2667, %v2663
          %v3088 = vpack.c.b16 %v2672, %v2668
          %v3089 = vpack.c.b16 %v2673, %v2669
          %v3090 = vpack.c.b16 %v2674, %v2670
          %v3091 = vpack.c.b16 %v2675, %v2671
          %v3092 = vpack.c.b16 %v2680, %v2676
          %v3093 = vpack.c.b16 %v2681, %v2677
          %v3094 = vpack.c.b16 %v2682, %v2678
          %v3095 = vpack.c.b16 %v2683, %v2679
          %v3096 = vpack.c.b16 %v2688, %v2684
          %v3097 = vpack.c.b16 %v2689, %v2685
          %v3098 = vpack.c.b16 %v2690, %v2686
          %v3099 = vpack.c.b16 %v2691, %v2687
          %v3100 = vpack.c.b16 %v2696, %v2692
          %v3101 = vpack.c.b16 %v2697, %v2693
          %v3102 = vpack.c.b16 %v2698, %v2694
          %v3103 = vpack.c.b16 %v2699, %v2695
          %v3104 = vpack.c.b16 %v2704, %v2700
          %v3105 = vpack.c.b16 %v2705, %v2701
          %v3106 = vpack.c.b16 %v2706, %v2702
          %v3107 = vpack.c.b16 %v2707, %v2703
          %v3108 = vpack.c.b16 %v2712, %v2708
          %v3109 = vpack.c.b16 %v2713, %v2709
          %v3110 = vpack.c.b16 %v2714, %v2710
          %v3111 = vpack.c.b16 %v2715, %v2711
          %v3112 = vpack.c.b16 %v2720, %v2716
          %v3113 = vpack.c.b16 %v2721, %v2717
          %v3114 = vpack.c.b16 %v2722, %v2718
          %v3115 = vpack.c.b16 %v2723, %v2719
          %v3116 = vpack.c.b16 %v2728, %v2724
          %v3117 = vpack.c.b16 %v2729, %v2725
          %v3118 = vpack.c.b16 %v2730, %v2726
          %v3119 = vpack.c.b16 %v2731, %v2727
          %v3120 = vpack.c.b16 %v2736, %v2732
          %v3121 = vpack.c.b16 %v2737, %v2733
          %v3122 = vpack.c.b16 %v2738, %v2734
          %v3123 = vpack.c.b16 %v2739, %v2735
          %v3124 = vpack.c.b16 %v2744, %v2740
          %v3125 = vpack.c.b16 %v2745, %v2741
          %v3126 = vpack.c.b16 %v2746, %v2742
          %v3127 = vpack.c.b16 %v2747, %v2743
          %v3128 = vpack.c.b16 %v2752, %v2748
          %v3129 = vpack.c.b16 %v2753, %v2749
          %v3130 = vpack.c.b16 %v2754, %v2750
          %v3131 = vpack.c.b16 %v2755, %v2751
          %v3132 = vpack.c.b16 %v2760, %v2756
          %v3133 = vpack.c.b16 %v2761, %v2757
          %v3134 = vpack.c.b16 %v2762, %v2758
          %v3135 = vpack.c.b16 %v2763, %v2759
          %v3136 = vpack.c.b16 %v2768, %v2764
          %v3137 = vpack.c.b16 %v2769, %v2765
          %v3138 = vpack.c.b16 %v2770, %v2766
          %v3139 = vpack.c.b16 %v2771, %v2767
          %v3140 = vpack.c.b16 %v2776, %v2772
          %v3141 = vpack.c.b16 %v2777, %v2773
          %v3142 = vpack.c.b16 %v2778, %v2774
          %v3143 = vpack.c.b16 %v2779, %v2775
          %v3144 = vpack.c.b16 %v2784, %v2780
          %v3145 = vpack.c.b16 %v2785, %v2781
          %v3146 = vpack.c.b16 %v2786, %v2782
          %v3147 = vpack.c.b16 %v2787, %v2783
          %v3148 = vpack.c.b16 %v2792, %v2788
          %v3149 = vpack.c.b16 %v2793, %v2789
          %v3150 = vpack.c.b16 %v2794, %v2790
          %v3151 = vpack.c.b16 %v2795, %v2791
          %v3152 = vpack.c.b16 %v2800, %v2796
          %v3153 = vpack.c.b16 %v2801, %v2797
          %v3154 = vpack.c.b16 %v2802, %v2798
          %v3155 = vpack.c.b16 %v2803, %v2799
          %v3156 = vpack.c.b16 %v2808, %v2804
          %v3157 = vpack.c.b16 %v2809, %v2805
          %v3158 = vpack.c.b16 %v2810, %v2806
          %v3159 = vpack.c.b16 %v2811, %v2807
          %v3160 = vpack.c.b16 %v2816, %v2812
          %v3161 = vpack.c.b16 %v2817, %v2813
          %v3162 = vpack.c.b16 %v2818, %v2814
          %v3163 = vpack.c.b16 %v2819, %v2815
          %v3164 = vpack.c.b16 %v2824, %v2820
          %v3165 = vpack.c.b16 %v2825, %v2821
          %v3166 = vpack.c.b16 %v2826, %v2822
          %v3167 = vpack.c.b16 %v2827, %v2823
          %v3168 = vpack.c.b16 %v2832, %v2828
          %v3169 = vpack.c.b16 %v2833, %v2829
          %v3170 = vpack.c.b16 %v2834, %v2830
          %v3171 = vpack.c.b16 %v2835, %v2831
          %v3172 = vpack.c.b16 %v2840, %v2836
          %v3173 = vpack.c.b16 %v2841, %v2837
          %v3174 = vpack.c.b16 %v2842, %v2838
          %v3175 = vpack.c.b16 %v2843, %v2839
          %v3176 = vpack.c.b16 %v2848, %v2844
          %v3177 = vpack.c.b16 %v2849, %v2845
          %v3178 = vpack.c.b16 %v2850, %v2846
          %v3179 = vpack.c.b16 %v2851, %v2847
          %v3180 = vpack.c.b16 %v2856, %v2852
          %v3181 = vpack.c.b16 %v2857, %v2853
          %v3182 = vpack.c.b16 %v2858, %v2854
          %v3183 = vpack.c.b16 %v2859, %v2855
          %v3184 = vpack.c.b16 %v2864, %v2860
          %v3185 = vpack.c.b16 %v2865, %v2861
          %v3186 = vpack.c.b16 %v2866, %v2862
          %v3187 = vpack.c.b16 %v2867, %v2863
          %v3188 = vpack.c.b16 %v2872, %v2868
          %v3189 = vpack.c.b16 %v2873, %v2869
          %v3190 = vpack.c.b16 %v2874, %v2870
          %v3191 = vpack.c.b16 %v2875, %v2871
          %v3192 = vpack.c.b16 %v2880, %v2876
          %v3193 = vpack.c.b16 %v2881, %v2877
          %v3194 = vpack.c.b16 %v2882, %v2878
          %v3195 = vpack.c.b16 %v2883, %v2879
          %v3196 = vpack.c.b16 %v2888, %v2884
          %v3197 = vpack.c.b16 %v2889, %v2885
          %v3198 = vpack.c.b16 %v2890, %v2886
          %v3199 = vpack.c.b16 %v2891, %v2887
          %v3200 = vpack.c.b16 %v2896, %v2892
          %v3201 = vpack.c.b16 %v2897, %v2893
          %v3202 = vpack.c.b16 %v2898, %v2894
          %v3203 = vpack.c.b16 %v2899, %v2895
          %v3204 = vpack.c.b16 %v2904, %v2900
          %v3205 = vpack.c.b16 %v2905, %v2901
          %v3206 = vpack.c.b16 %v2906, %v2902
          %v3207 = vpack.c.b16 %v2907, %v2903
          %v3208 = vpack.c.b16 %v2912, %v2908
          %v3209 = vpack.c.b16 %v2913, %v2909
          %v3210 = vpack.c.b16 %v2914, %v2910
          %v3211 = vpack.c.b16 %v2915, %v2911
          %v3212 = vpack.c.b16 %v2920, %v2916
          %v3213 = vpack.c.b16 %v2921, %v2917
          %v3214 = vpack.c.b16 %v2922, %v2918
          %v3215 = vpack.c.b16 %v2923, %v2919
          %v3216 = vpack.c.b16 %v2928, %v2924
          %v3217 = vpack.c.b16 %v2929, %v2925
          %v3218 = vpack.c.b16 %v2930, %v2926
          %v3219 = vpack.c.b16 %v2931, %v2927
          %v3220 = vpack.c.b16 %v2936, %v2932
          %v3221 = vpack.c.b16 %v2937, %v2933
          %v3222 = vpack.c.b16 %v2938, %v2934
          %v3223 = vpack.c.b16 %v2939, %v2935
          %v3224 = vpack.c.b16 %v2944, %v2940
          %v3225 = vpack.c.b16 %v2945, %v2941
          %v3226 = vpack.c.b16 %v2946, %v2942
          %v3227 = vpack.c.b16 %v2947, %v2943
          %v3228 = vpack.c.b16 %v2952, %v2948
          %v3229 = vpack.c.b16 %v2953, %v2949
          %v3230 = vpack.c.b16 %v2954, %v2950
          %v3231 = vpack.c.b16 %v2955, %v2951
          %v3232 = vpack.c.b16 %v2960, %v2956
          %v3233 = vpack.c.b16 %v2961, %v2957
          %v3234 = vpack.c.b16 %v2962, %v2958
          %v3235 = vpack.c.b16 %v2963, %v2959
          %v3236 = vpack.c.b16 %v2968, %v2964
          %v3237 = vpack.c.b16 %v2969, %v2965
          %v3238 = vpack.c.b16 %v2970, %v2966
          %v3239 = vpack.c.b16 %v2971, %v2967
          %v3240 = vpack.c.b16 %v2976, %v2972
          %v3241 = vpack.c.b16 %v2977, %v2973
          %v3242 = vpack.c.b16 %v2978, %v2974
          %v3243 = vpack.c.b16 %v2979, %v2975
          %v3244 = vpack.c.b16 %v2984, %v2980
          %v3245 = vpack.c.b16 %v2985, %v2981
          %v3246 = vpack.c.b16 %v2986, %v2982
          %v3247 = vpack.c.b16 %v2987, %v2983
          %v3248 = vpack.c.b16 %v2992, %v2988
          %v3249 = vpack.c.b16 %v2993, %v2989
          %v3250 = vpack.c.b16 %v2994, %v2990
          %v3251 = vpack.c.b16 %v2995, %v2991
          %3508 = vmatprep.subr.bf16.mxu0 %v2997
          %3509 = vmatpush1.bf16.msra.mxu0 %v2996
          %3510 = vmatprep.subr.bf16.mxu0 %v3001
          %3511 = vmatpush1.bf16.msra.mxu0 %v3000
          %3512 = vmatprep.subr.bf16.mxu0 %v3005
          %3513 = vmatpush1.bf16.msra.mxu0 %v3004
          %3514 = vmatprep.subr.bf16.mxu0 %v3009
          %3515 = vmatpush1.bf16.msra.mxu0 %v3008
          %3516 = vmatprep.subr.bf16.mxu0 %v3013
          %3517 = vmatpush1.bf16.msra.mxu0 %v3012
          %3518 = vmatprep.subr.bf16.mxu0 %v3017
          %3519 = vmatpush1.bf16.msra.mxu0 %v3016
          %3520 = vmatprep.subr.bf16.mxu0 %v3021
          %3521 = vmatpush1.bf16.msra.mxu0 %v3020
          %3522 = vmatprep.subr.bf16.mxu0 %v3025
          %3523 = vmatpush1.bf16.msra.mxu0 %v3024
          %3524 = vmatprep.subr.bf16.mxu0 %v3029
          %3525 = vmatpush1.bf16.msra.mxu0 %v3028
          %3526 = vmatprep.subr.bf16.mxu0 %v3033
          %3527 = vmatpush1.bf16.msra.mxu0 %v3032
          %3528 = vmatprep.subr.bf16.mxu0 %v3037
          %3529 = vmatpush1.bf16.msra.mxu0 %v3036
          %3530 = vmatprep.subr.bf16.mxu0 %v3041
          %3531 = vmatpush1.bf16.msra.mxu0 %v3040
          %3532 = vmatprep.subr.bf16.mxu0 %v3045
          %3533 = vmatpush1.bf16.msra.mxu0 %v3044
          %3534 = vmatprep.subr.bf16.mxu0 %v3049
          %3535 = vmatpush1.bf16.msra.mxu0 %v3048
          %3536 = vmatprep.subr.bf16.mxu0 %v3053
          %3537 = vmatpush1.bf16.msra.mxu0 %v3052
          %3538 = vmatprep.subr.bf16.mxu0 %v3057
          %3539 = vmatpush1.bf16.msra.mxu0 %v3056
          %3540 = vmatprep.mubr.bf16.mxu0 %v1943
          %3541 = vmatmul.mubr.bf16.gmra.mrb[0].mxu0 %v1942
          %v3542 = vpop.f32.mrb[0].mxu0
          %v3543 = vadd.f32 %v2211, %v3542
          %v3544 = vpop.f32.mrb[0].mxu0
          %v3545 = vadd.f32 %v2215, %v3544
          %v3546 = vpop.f32.mrb[0].mxu0
          %v3547 = vpop.f32.mrb[0].mxu0
          %3548 = vdwg.mxu0
          %3549 = vmatprep.subr.bf16.mxu0 %v3061
          %3550 = vmatpush1.bf16.msra.mxu0 %v3060
          %3551 = vmatprep.subr.bf16.mxu0 %v3065
          %3552 = vmatpush1.bf16.msra.mxu0 %v3064
          %3553 = vmatprep.subr.bf16.mxu0 %v3069
          %3554 = vmatpush1.bf16.msra.mxu0 %v3068
          %3555 = vmatprep.subr.bf16.mxu0 %v3073
          %3556 = vmatpush1.bf16.msra.mxu0 %v3072
          %3557 = vmatprep.subr.bf16.mxu0 %v3077
          %3558 = vmatpush1.bf16.msra.mxu0 %v3076
          %3559 = vmatprep.subr.bf16.mxu0 %v3081
          %3560 = vmatpush1.bf16.msra.mxu0 %v3080
          %3561 = vmatprep.subr.bf16.mxu0 %v3085
          %3562 = vmatpush1.bf16.msra.mxu0 %v3084
          %3563 = vmatprep.subr.bf16.mxu0 %v3089
          %3564 = vmatpush1.bf16.msra.mxu0 %v3088
          %3565 = vmatprep.subr.bf16.mxu0 %v3093
          %3566 = vmatpush1.bf16.msra.mxu0 %v3092
          %3567 = vmatprep.subr.bf16.mxu0 %v3097
          %3568 = vmatpush1.bf16.msra.mxu0 %v3096
          %3569 = vmatprep.subr.bf16.mxu0 %v3101
          %3570 = vmatpush1.bf16.msra.mxu0 %v3100
          %3571 = vmatprep.subr.bf16.mxu0 %v3105
          %3572 = vmatpush1.bf16.msra.mxu0 %v3104
          %3573 = vmatprep.subr.bf16.mxu0 %v3109
          %3574 = vmatpush1.bf16.msra.mxu0 %v3108
          %3575 = vmatprep.subr.bf16.mxu0 %v3113
          %3576 = vmatpush1.bf16.msra.mxu0 %v3112
          %3577 = vmatprep.subr.bf16.mxu0 %v3117
          %3578 = vmatpush1.bf16.msra.mxu0 %v3116
          %3579 = vmatprep.subr.bf16.mxu0 %v3121
          %3580 = vmatpush1.bf16.msra.mxu0 %v3120
          %3581 = vmatprep.mubr.bf16.mxu0 %v1945
          %3582 = vmatmul.mubr.bf16.gmra.mrb[0].mxu0 %v1944
          %v3583 = vpop.f32.mrb[0].mxu0
          %v3584 = vadd.f32 %v3543, %v3583
          %v3585 = vpop.f32.mrb[0].mxu0
          %v3586 = vadd.f32 %v3545, %v3585
          %v3587 = vpop.f32.mrb[0].mxu0
          %v3588 = vpop.f32.mrb[0].mxu0
          %3589 = vdwg.mxu0
          %3590 = vmatprep.subr.bf16.mxu0 %v3125
          %3591 = vmatpush1.bf16.msra.mxu0 %v3124
          %3592 = vmatprep.subr.bf16.mxu0 %v3129
          %3593 = vmatpush1.bf16.msra.mxu0 %v3128
          %3594 = vmatprep.subr.bf16.mxu0 %v3133
          %3595 = vmatpush1.bf16.msra.mxu0 %v3132
          %3596 = vmatprep.subr.bf16.mxu0 %v3137
          %3597 = vmatpush1.bf16.msra.mxu0 %v3136
          %3598 = vmatprep.subr.bf16.mxu0 %v3141
          %3599 = vmatpush1.bf16.msra.mxu0 %v3140
          %3600 = vmatprep.subr.bf16.mxu0 %v3145
          %3601 = vmatpush1.bf16.msra.mxu0 %v3144
          %3602 = vmatprep.subr.bf16.mxu0 %v3149
          %3603 = vmatpush1.bf16.msra.mxu0 %v3148
          %3604 = vmatprep.subr.bf16.mxu0 %v3153
          %3605 = vmatpush1.bf16.msra.mxu0 %v3152
          %3606 = vmatprep.subr.bf16.mxu0 %v3157
          %3607 = vmatpush1.bf16.msra.mxu0 %v3156
          %3608 = vmatprep.subr.bf16.mxu0 %v3161
          %3609 = vmatpush1.bf16.msra.mxu0 %v3160
          %3610 = vmatprep.subr.bf16.mxu0 %v3165
          %3611 = vmatpush1.bf16.msra.mxu0 %v3164
          %3612 = vmatprep.subr.bf16.mxu0 %v3169
          %3613 = vmatpush1.bf16.msra.mxu0 %v3168
          %3614 = vmatprep.subr.bf16.mxu0 %v3173
          %3615 = vmatpush1.bf16.msra.mxu0 %v3172
          %3616 = vmatprep.subr.bf16.mxu0 %v3177
          %3617 = vmatpush1.bf16.msra.mxu0 %v3176
          %3618 = vmatprep.subr.bf16.mxu0 %v3181
          %3619 = vmatpush1.bf16.msra.mxu0 %v3180
          %3620 = vmatprep.subr.bf16.mxu0 %v3185
          %3621 = vmatpush1.bf16.msra.mxu0 %v3184
          %3622 = vmatprep.mubr.bf16.mxu0 %v1947
          %3623 = vmatmul.mubr.bf16.gmra.mrb[0].mxu0 %v1946
          %v3624 = vpop.f32.mrb[0].mxu0
          %v3625 = vadd.f32 %v3584, %v3624
          %v3626 = vpop.f32.mrb[0].mxu0
          %v3627 = vadd.f32 %v3586, %v3626
          %v3628 = vpop.f32.mrb[0].mxu0
          %v3629 = vpop.f32.mrb[0].mxu0
          %3630 = vdwg.mxu0
          %3631 = vmatprep.subr.bf16.mxu0 %v3189
          %3632 = vmatpush1.bf16.msra.mxu0 %v3188
          %3633 = vmatprep.subr.bf16.mxu0 %v3193
          %3634 = vmatpush1.bf16.msra.mxu0 %v3192
          %3635 = vmatprep.subr.bf16.mxu0 %v3197
          %3636 = vmatpush1.bf16.msra.mxu0 %v3196
          %3637 = vmatprep.subr.bf16.mxu0 %v3201
          %3638 = vmatpush1.bf16.msra.mxu0 %v3200
          %3639 = vmatprep.subr.bf16.mxu0 %v3205
          %3640 = vmatpush1.bf16.msra.mxu0 %v3204
          %3641 = vmatprep.subr.bf16.mxu0 %v3209
          %3642 = vmatpush1.bf16.msra.mxu0 %v3208
          %3643 = vmatprep.subr.bf16.mxu0 %v3213
          %3644 = vmatpush1.bf16.msra.mxu0 %v3212
          %3645 = vmatprep.subr.bf16.mxu0 %v3217
          %3646 = vmatpush1.bf16.msra.mxu0 %v3216
          %3647 = vmatprep.subr.bf16.mxu0 %v3221
          %3648 = vmatpush1.bf16.msra.mxu0 %v3220
          %3649 = vmatprep.subr.bf16.mxu0 %v3225
          %3650 = vmatpush1.bf16.msra.mxu0 %v3224
          %3651 = vmatprep.subr.bf16.mxu0 %v3229
          %3652 = vmatpush1.bf16.msra.mxu0 %v3228
          %3653 = vmatprep.subr.bf16.mxu0 %v3233
          %3654 = vmatpush1.bf16.msra.mxu0 %v3232
          %3655 = vmatprep.subr.bf16.mxu0 %v3237
          %3656 = vmatpush1.bf16.msra.mxu0 %v3236
          %3657 = vmatprep.subr.bf16.mxu0 %v3241
          %3658 = vmatpush1.bf16.msra.mxu0 %v3240
          %3659 = vmatprep.subr.bf16.mxu0 %v3245
          %3660 = vmatpush1.bf16.msra.mxu0 %v3244
          %3661 = vmatprep.subr.bf16.mxu0 %v3249
          %3662 = vmatpush1.bf16.msra.mxu0 %v3248
          %3663 = vmatprep.mubr.bf16.mxu0 %v1949
          %3664 = vmatmul.mubr.bf16.gmra.mrb[0].mxu0 %v1948
          %v3665 = vpop.f32.mrb[0].mxu0
          %v3666 = vadd.f32 %v3625, %v3665
          %v3667 = vpop.f32.mrb[0].mxu0
          %v3668 = vadd.f32 %v3627, %v3667
          %v3669 = vpop.f32.mrb[0].mxu0
          %v3670 = vpop.f32.mrb[0].mxu0
          %3671 = vdwg.mxu0
          %3672 = vmatprep.subr.bf16.mxu0 %v2999
          %3673 = vmatpush1.bf16.msra.mxu0 %v2998
          %3674 = vmatprep.subr.bf16.mxu0 %v3003
          %3675 = vmatpush1.bf16.msra.mxu0 %v3002
          %3676 = vmatprep.subr.bf16.mxu0 %v3007
          %3677 = vmatpush1.bf16.msra.mxu0 %v3006
          %3678 = vmatprep.subr.bf16.mxu0 %v3011
          %3679 = vmatpush1.bf16.msra.mxu0 %v3010
          %3680 = vmatprep.subr.bf16.mxu0 %v3015
          %3681 = vmatpush1.bf16.msra.mxu0 %v3014
          %3682 = vmatprep.subr.bf16.mxu0 %v3019
          %3683 = vmatpush1.bf16.msra.mxu0 %v3018
          %3684 = vmatprep.subr.bf16.mxu0 %v3023
          %3685 = vmatpush1.bf16.msra.mxu0 %v3022
          %3686 = vmatprep.subr.bf16.mxu0 %v3027
          %3687 = vmatpush1.bf16.msra.mxu0 %v3026
          %3688 = vmatprep.subr.bf16.mxu0 %v3031
          %3689 = vmatpush1.bf16.msra.mxu0 %v3030
          %3690 = vmatprep.subr.bf16.mxu0 %v3035
          %3691 = vmatpush1.bf16.msra.mxu0 %v3034
          %3692 = vmatprep.subr.bf16.mxu0 %v3039
          %3693 = vmatpush1.bf16.msra.mxu0 %v3038
          %3694 = vmatprep.subr.bf16.mxu0 %v3043
          %3695 = vmatpush1.bf16.msra.mxu0 %v3042
          %3696 = vmatprep.subr.bf16.mxu0 %v3047
          %3697 = vmatpush1.bf16.msra.mxu0 %v3046
          %3698 = vmatprep.subr.bf16.mxu0 %v3051
          %3699 = vmatpush1.bf16.msra.mxu0 %v3050
          %3700 = vmatprep.subr.bf16.mxu0 %v3055
          %3701 = vmatpush1.bf16.msra.mxu0 %v3054
          %3702 = vmatprep.subr.bf16.mxu0 %v3059
          %3703 = vmatpush1.bf16.msra.mxu0 %v3058
          %3704 = vmatprep.mubr.bf16.mxu0 %v1943
          %3705 = vmatmul.mubr.bf16.gmra.mrb[0].mxu0 %v1942
          %v3706 = vpop.f32.mrb[0].mxu0
          %v3707 = vadd.f32 %v2219, %v3706
          %v3708 = vpop.f32.mrb[0].mxu0
          %v3709 = vadd.f32 %v2223, %v3708
          %v3710 = vpop.f32.mrb[0].mxu0
          %v3711 = vpop.f32.mrb[0].mxu0
          %3712 = vdwg.mxu0
          %3713 = vmatprep.subr.bf16.mxu0 %v3063
          %3714 = vmatpush1.bf16.msra.mxu0 %v3062
          %3715 = vmatprep.subr.bf16.mxu0 %v3067
          %3716 = vmatpush1.bf16.msra.mxu0 %v3066
          %3717 = vmatprep.subr.bf16.mxu0 %v3071
          %3718 = vmatpush1.bf16.msra.mxu0 %v3070
          %3719 = vmatprep.subr.bf16.mxu0 %v3075
          %3720 = vmatpush1.bf16.msra.mxu0 %v3074
          %3721 = vmatprep.subr.bf16.mxu0 %v3079
          %3722 = vmatpush1.bf16.msra.mxu0 %v3078
          %3723 = vmatprep.subr.bf16.mxu0 %v3083
          %3724 = vmatpush1.bf16.msra.mxu0 %v3082
          %3725 = vmatprep.subr.bf16.mxu0 %v3087
          %3726 = vmatpush1.bf16.msra.mxu0 %v3086
          %3727 = vmatprep.subr.bf16.mxu0 %v3091
          %3728 = vmatpush1.bf16.msra.mxu0 %v3090
          %3729 = vmatprep.subr.bf16.mxu0 %v3095
          %3730 = vmatpush1.bf16.msra.mxu0 %v3094
          %3731 = vmatprep.subr.bf16.mxu0 %v3099
          %3732 = vmatpush1.bf16.msra.mxu0 %v3098
          %3733 = vmatprep.subr.bf16.mxu0 %v3103
          %3734 = vmatpush1.bf16.msra.mxu0 %v3102
          %3735 = vmatprep.subr.bf16.mxu0 %v3107
          %3736 = vmatpush1.bf16.msra.mxu0 %v3106
          %3737 = vmatprep.subr.bf16.mxu0 %v3111
          %3738 = vmatpush1.bf16.msra.mxu0 %v3110
          %3739 = vmatprep.subr.bf16.mxu0 %v3115
          %3740 = vmatpush1.bf16.msra.mxu0 %v3114
          %3741 = vmatprep.subr.bf16.mxu0 %v3119
          %3742 = vmatpush1.bf16.msra.mxu0 %v3118
          %3743 = vmatprep.subr.bf16.mxu0 %v3123
          %3744 = vmatpush1.bf16.msra.mxu0 %v3122
          %3745 = vmatprep.mubr.bf16.mxu0 %v1945
          %3746 = vmatmul.mubr.bf16.gmra.mrb[0].mxu0 %v1944
          %v3747 = vpop.f32.mrb[0].mxu0
          %v3748 = vadd.f32 %v3707, %v3747
          %v3749 = vpop.f32.mrb[0].mxu0
          %v3750 = vadd.f32 %v3709, %v3749
          %v3751 = vpop.f32.mrb[0].mxu0
          %v3752 = vpop.f32.mrb[0].mxu0
          %3753 = vdwg.mxu0
          %3754 = vmatprep.subr.bf16.mxu0 %v3127
          %3755 = vmatpush1.bf16.msra.mxu0 %v3126
          %3756 = vmatprep.subr.bf16.mxu0 %v3131
          %3757 = vmatpush1.bf16.msra.mxu0 %v3130
          %3758 = vmatprep.subr.bf16.mxu0 %v3135
          %3759 = vmatpush1.bf16.msra.mxu0 %v3134
          %3760 = vmatprep.subr.bf16.mxu0 %v3139
          %3761 = vmatpush1.bf16.msra.mxu0 %v3138
          %3762 = vmatprep.subr.bf16.mxu0 %v3143
          %3763 = vmatpush1.bf16.msra.mxu0 %v3142
          %3764 = vmatprep.subr.bf16.mxu0 %v3147
          %3765 = vmatpush1.bf16.msra.mxu0 %v3146
          %3766 = vmatprep.subr.bf16.mxu0 %v3151
          %3767 = vmatpush1.bf16.msra.mxu0 %v3150
          %3768 = vmatprep.subr.bf16.mxu0 %v3155
          %3769 = vmatpush1.bf16.msra.mxu0 %v3154
          %3770 = vmatprep.subr.bf16.mxu0 %v3159
          %3771 = vmatpush1.bf16.msra.mxu0 %v3158
          %3772 = vmatprep.subr.bf16.mxu0 %v3163
          %3773 = vmatpush1.bf16.msra.mxu0 %v3162
          %3774 = vmatprep.subr.bf16.mxu0 %v3167
          %3775 = vmatpush1.bf16.msra.mxu0 %v3166
          %3776 = vmatprep.subr.bf16.mxu0 %v3171
          %3777 = vmatpush1.bf16.msra.mxu0 %v3170
          %3778 = vmatprep.subr.bf16.mxu0 %v3175
          %3779 = vmatpush1.bf16.msra.mxu0 %v3174
          %3780 = vmatprep.subr.bf16.mxu0 %v3179
          %3781 = vmatpush1.bf16.msra.mxu0 %v3178
          %3782 = vmatprep.subr.bf16.mxu0 %v3183
          %3783 = vmatpush1.bf16.msra.mxu0 %v3182
          %3784 = vmatprep.subr.bf16.mxu0 %v3187
          %3785 = vmatpush1.bf16.msra.mxu0 %v3186
          %3786 = vmatprep.mubr.bf16.mxu0 %v1947
          %3787 = vmatmul.mubr.bf16.gmra.mrb[0].mxu0 %v1946
          %v3788 = vpop.f32.mrb[0].mxu0
          %v3789 = vadd.f32 %v3748, %v3788
          %v3790 = vpop.f32.mrb[0].mxu0
          %v3791 = vadd.f32 %v3750, %v3790
          %v3792 = vpop.f32.mrb[0].mxu0
          %v3793 = vpop.f32.mrb[0].mxu0
          %3794 = vdwg.mxu0
          %3795 = vmatprep.subr.bf16.mxu0 %v3191
          %3796 = vmatpush1.bf16.msra.mxu0 %v3190
          %3797 = vmatprep.subr.bf16.mxu0 %v3195
          %3798 = vmatpush1.bf16.msra.mxu0 %v3194
          %3799 = vmatprep.subr.bf16.mxu0 %v3199
          %3800 = vmatpush1.bf16.msra.mxu0 %v3198
          %3801 = vmatprep.subr.bf16.mxu0 %v3203
          %3802 = vmatpush1.bf16.msra.mxu0 %v3202
          %3803 = vmatprep.subr.bf16.mxu0 %v3207
          %3804 = vmatpush1.bf16.msra.mxu0 %v3206
          %3805 = vmatprep.subr.bf16.mxu0 %v3211
          %3806 = vmatpush1.bf16.msra.mxu0 %v3210
          %3807 = vmatprep.subr.bf16.mxu0 %v3215
          %3808 = vmatpush1.bf16.msra.mxu0 %v3214
          %3809 = vmatprep.subr.bf16.mxu0 %v3219
          %3810 = vmatpush1.bf16.msra.mxu0 %v3218
          %3811 = vmatprep.subr.bf16.mxu0 %v3223
          %3812 = vmatpush1.bf16.msra.mxu0 %v3222
          %3813 = vmatprep.subr.bf16.mxu0 %v3227
          %3814 = vmatpush1.bf16.msra.mxu0 %v3226
          %3815 = vmatprep.subr.bf16.mxu0 %v3231
          %3816 = vmatpush1.bf16.msra.mxu0 %v3230
          %3817 = vmatprep.subr.bf16.mxu0 %v3235
          %3818 = vmatpush1.bf16.msra.mxu0 %v3234
          %3819 = vmatprep.subr.bf16.mxu0 %v3239
          %3820 = vmatpush1.bf16.msra.mxu0 %v3238
          %3821 = vmatprep.subr.bf16.mxu0 %v3243
          %3822 = vmatpush1.bf16.msra.mxu0 %v3242
          %3823 = vmatprep.subr.bf16.mxu0 %v3247
          %3824 = vmatpush1.bf16.msra.mxu0 %v3246
          %3825 = vmatprep.subr.bf16.mxu0 %v3251
          %3826 = vmatpush1.bf16.msra.mxu0 %v3250
          %3827 = vmatprep.mubr.bf16.mxu0 %v1949
          %3828 = vmatmul.mubr.bf16.gmra.mrb[0].mxu0 %v1948
          %v3829 = vpop.f32.mrb[0].mxu0
          %v3830 = vadd.f32 %v3789, %v3829
          %v3831 = vpop.f32.mrb[0].mxu0
          %v3832 = vadd.f32 %v3791, %v3831
          %v3833 = vpop.f32.mrb[0].mxu0
          %v3834 = vpop.f32.mrb[0].mxu0
          %3835 = vdwg.mxu0
          %v3836 = vld [vmem:[%s15] sm:$0xf]
          %v3838 = vlaneseq
          %v3839 = vshrl.u32 %v3838, 7
          %v3840 = vsub.s32 0, %v3839
          %v3841 = vrot.slane %v3836, %v3840
          %v3842 = vlaneseq
          %v3843 = vshrl.u32 %v3842, 7
          %v3844 = vsub.s32 1, %v3843
          %v3845 = vrot.slane %v3836, %v3844
          %v3846 = vlaneseq
          %v3847 = vshrl.u32 %v3846, 7
          %v3848 = vsub.s32 2, %v3847
          %v3849 = vrot.slane %v3836, %v3848
          %v3850 = vlaneseq
          %v3851 = vshrl.u32 %v3850, 7
          %v3852 = vsub.s32 3, %v3851
          %v3853 = vrot.slane %v3836, %v3852
          %v3858 = vmul.f32 %v3666, %v3841
          %v3859 = vmul.f32 %v3668, %v3845
          %v3860 = vmul.f32 %v3830, %v3849
          %v3861 = vmul.f32 %v3832, %v3853
          %v3862 = vld [vmem:[%s16] sm:$0xf]
          %v3864 = vlaneseq
          %v3865 = vshrl.u32 %v3864, 7
          %v3866 = vsub.s32 0, %v3865
          %v3867 = vrot.slane %v3862, %v3866
          %v3868 = vlaneseq
          %v3869 = vshrl.u32 %v3868, 7
          %v3870 = vsub.s32 1, %v3869
          %v3871 = vrot.slane %v3862, %v3870
          %v3872 = vlaneseq
          %v3873 = vshrl.u32 %v3872, 7
          %v3874 = vsub.s32 2, %v3873
          %v3875 = vrot.slane %v3862, %v3874
          %v3876 = vlaneseq
          %v3877 = vshrl.u32 %v3876, 7
          %v3878 = vsub.s32 3, %v3877
          %v3879 = vrot.slane %v3862, %v3878
          %v3884 = vadd.f32 %v3858, %v3867
          %v3885 = vadd.f32 %v3859, %v3871
          %v3886 = vadd.f32 %v3860, %v3875
          %v3887 = vadd.f32 %v3861, %v3879
          %v3888 = vmax.f32 %v3884, 0.0
          %v3889 = vmax.f32 %v3885, 0.0
          %v3890 = vmax.f32 %v3886, 0.0
          %v3891 = vmax.f32 %v3887, 0.0
          %v3892 = vpack.c.bf16 %v3888, %v3888
          %v3893 = vpack.c.bf16 %v3889, %v3889
          %v3894 = vpack.c.bf16 %v3890, %v3890
          %v3895 = vpack.c.bf16 %v3891, %v3891
          %v3896 = vld [vmem:[#allocation18] sm:$0xff]
          %v3897 = vld [vmem:[#allocation18 + $0x8] sm:$0xff]
          %v3898 = vld [vmem:[#allocation18 + $0x10] sm:$0xff]
          %v3899 = vld [vmem:[#allocation18 + $0x18] sm:$0xff]
          %v3900 = vld [vmem:[#allocation18 + $0x20] sm:$0xff]
          %v3901 = vld [vmem:[#allocation18 + $0x28] sm:$0xff]
          %v3902 = vld [vmem:[#allocation18 + $0x30] sm:$0xff]
          %v3903 = vld [vmem:[#allocation18 + $0x38] sm:$0xff]
          %v3904 = vld [vmem:[#allocation18 + $0x40] sm:$0xff]
          %v3905 = vld [vmem:[#allocation18 + $0x48] sm:$0xff]
          %v3906 = vld [vmem:[#allocation18 + $0x50] sm:$0xff]
          %v3907 = vld [vmem:[#allocation18 + $0x58] sm:$0xff]
          %v3908 = vld [vmem:[#allocation18 + $0x60] sm:$0xff]
          %v3909 = vld [vmem:[#allocation18 + $0x68] sm:$0xff]
          %v3910 = vld [vmem:[#allocation18 + $0x70] sm:$0xff]
          %v3911 = vld [vmem:[#allocation18 + $0x78] sm:$0xff]
          %v3912 = vld [vmem:[#allocation18 + $0x80] sm:$0xff]
          %v3913 = vld [vmem:[#allocation18 + $0x88] sm:$0xff]
          %v3914 = vld [vmem:[#allocation18 + $0x90] sm:$0xff]
          %v3915 = vld [vmem:[#allocation18 + $0x98] sm:$0xff]
          %v3916 = vld [vmem:[#allocation18 + $0xa0] sm:$0xff]
          %v3917 = vld [vmem:[#allocation18 + $0xa8] sm:$0xff]
          %v3918 = vld [vmem:[#allocation18 + $0xb0] sm:$0xff]
          %v3919 = vld [vmem:[#allocation18 + $0xb8] sm:$0xff]
          %v3920 = vld [vmem:[#allocation18 + $0xc0] sm:$0xff]
          %v3921 = vld [vmem:[#allocation18 + $0xc8] sm:$0xff]
          %v3922 = vld [vmem:[#allocation18 + $0xd0] sm:$0xff]
          %v3923 = vld [vmem:[#allocation18 + $0xd8] sm:$0xff]
          %v3924 = vld [vmem:[#allocation18 + $0xe0] sm:$0xff]
          %v3925 = vld [vmem:[#allocation18 + $0xe8] sm:$0xff]
          %v3926 = vld [vmem:[#allocation18 + $0xf0] sm:$0xff]
          %v3927 = vld [vmem:[#allocation18 + $0xf8] sm:$0xff]
          %v3928 = vld [vmem:[#allocation18 + $0x100] sm:$0xff]
          %v3929 = vld [vmem:[#allocation18 + $0x108] sm:$0xff]
          %v3930 = vld [vmem:[#allocation18 + $0x110] sm:$0xff]
          %v3931 = vld [vmem:[#allocation18 + $0x118] sm:$0xff]
          %v3932 = vld [vmem:[#allocation18 + $0x120] sm:$0xff]
          %v3933 = vld [vmem:[#allocation18 + $0x128] sm:$0xff]
          %v3934 = vld [vmem:[#allocation18 + $0x130] sm:$0xff]
          %v3935 = vld [vmem:[#allocation18 + $0x138] sm:$0xff]
          %v3936 = vld [vmem:[#allocation18 + $0x140] sm:$0xff]
          %v3937 = vld [vmem:[#allocation18 + $0x148] sm:$0xff]
          %v3938 = vld [vmem:[#allocation18 + $0x150] sm:$0xff]
          %v3939 = vld [vmem:[#allocation18 + $0x158] sm:$0xff]
          %v3940 = vld [vmem:[#allocation18 + $0x160] sm:$0xff]
          %v3941 = vld [vmem:[#allocation18 + $0x168] sm:$0xff]
          %v3942 = vld [vmem:[#allocation18 + $0x170] sm:$0xff]
          %v3943 = vld [vmem:[#allocation18 + $0x178] sm:$0xff]
          %v3944 = vld [vmem:[#allocation18 + $0x180] sm:$0xff]
          %v3945 = vld [vmem:[#allocation18 + $0x188] sm:$0xff]
          %v3946 = vld [vmem:[#allocation18 + $0x190] sm:$0xff]
          %v3947 = vld [vmem:[#allocation18 + $0x198] sm:$0xff]
          %v3948 = vld [vmem:[#allocation18 + $0x1a0] sm:$0xff]
          %v3949 = vld [vmem:[#allocation18 + $0x1a8] sm:$0xff]
          %v3950 = vld [vmem:[#allocation18 + $0x1b0] sm:$0xff]
          %v3951 = vld [vmem:[#allocation18 + $0x1b8] sm:$0xff]
          %v3952 = vld [vmem:[#allocation18 + $0x1c0] sm:$0xff]
          %v3953 = vld [vmem:[#allocation18 + $0x1c8] sm:$0xff]
          %v3954 = vld [vmem:[#allocation18 + $0x1d0] sm:$0xff]
          %v3955 = vld [vmem:[#allocation18 + $0x1d8] sm:$0xff]
          %v3956 = vld [vmem:[#allocation18 + $0x1e0] sm:$0xff]
          %v3957 = vld [vmem:[#allocation18 + $0x1e8] sm:$0xff]
          %v3958 = vld [vmem:[#allocation18 + $0x1f0] sm:$0xff]
          %v3959 = vld [vmem:[#allocation18 + $0x1f8] sm:$0xff]
          %v3960 = vld [vmem:[%s18] sm:$0x3]
          %v3962 = vlaneseq
          %v3963 = vshrl.u32 %v3962, 7
          %v3964 = vsub.s32 0, %v3963
          %v3965 = vrot.slane %v3960, %v3964
          %v3966 = vlaneseq
          %v3967 = vshrl.u32 %v3966, 7
          %v3968 = vsub.s32 1, %v3967
          %v3969 = vrot.slane %v3960, %v3968
          %v4036 = vunpack.c.l.b16 %v3896
          %v4037 = vunpack.c.h.b16 %v3896
          %v4038 = vunpack.c.l.b16 %v3897
          %v4039 = vunpack.c.h.b16 %v3897
          %v4040 = vunpack.c.l.b16 %v3898
          %v4041 = vunpack.c.h.b16 %v3898
          %v4042 = vunpack.c.l.b16 %v3899
          %v4043 = vunpack.c.h.b16 %v3899
          %v4044 = vunpack.c.l.b16 %v3900
          %v4045 = vunpack.c.h.b16 %v3900
          %v4046 = vunpack.c.l.b16 %v3901
          %v4047 = vunpack.c.h.b16 %v3901
          %v4048 = vunpack.c.l.b16 %v3902
          %v4049 = vunpack.c.h.b16 %v3902
          %v4050 = vunpack.c.l.b16 %v3903
          %v4051 = vunpack.c.h.b16 %v3903
          %v4052 = vunpack.c.l.b16 %v3904
          %v4053 = vunpack.c.h.b16 %v3904
          %v4054 = vunpack.c.l.b16 %v3905
          %v4055 = vunpack.c.h.b16 %v3905
          %v4056 = vunpack.c.l.b16 %v3906
          %v4057 = vunpack.c.h.b16 %v3906
          %v4058 = vunpack.c.l.b16 %v3907
          %v4059 = vunpack.c.h.b16 %v3907
          %v4060 = vunpack.c.l.b16 %v3908
          %v4061 = vunpack.c.h.b16 %v3908
          %v4062 = vunpack.c.l.b16 %v3909
          %v4063 = vunpack.c.h.b16 %v3909
          %v4064 = vunpack.c.l.b16 %v3910
          %v4065 = vunpack.c.h.b16 %v3910
          %v4066 = vunpack.c.l.b16 %v3911
          %v4067 = vunpack.c.h.b16 %v3911
          %v4068 = vunpack.c.l.b16 %v3912
          %v4069 = vunpack.c.h.b16 %v3912
          %v4070 = vunpack.c.l.b16 %v3913
          %v4071 = vunpack.c.h.b16 %v3913
          %v4072 = vunpack.c.l.b16 %v3914
          %v4073 = vunpack.c.h.b16 %v3914
          %v4074 = vunpack.c.l.b16 %v3915
          %v4075 = vunpack.c.h.b16 %v3915
          %v4076 = vunpack.c.l.b16 %v3916
          %v4077 = vunpack.c.h.b16 %v3916
          %v4078 = vunpack.c.l.b16 %v3917
          %v4079 = vunpack.c.h.b16 %v3917
          %v4080 = vunpack.c.l.b16 %v3918
          %v4081 = vunpack.c.h.b16 %v3918
          %v4082 = vunpack.c.l.b16 %v3919
          %v4083 = vunpack.c.h.b16 %v3919
          %v4084 = vunpack.c.l.b16 %v3920
          %v4085 = vunpack.c.h.b16 %v3920
          %v4086 = vunpack.c.l.b16 %v3921
          %v4087 = vunpack.c.h.b16 %v3921
          %v4088 = vunpack.c.l.b16 %v3922
          %v4089 = vunpack.c.h.b16 %v3922
          %v4090 = vunpack.c.l.b16 %v3923
          %v4091 = vunpack.c.h.b16 %v3923
          %v4092 = vunpack.c.l.b16 %v3924
          %v4093 = vunpack.c.h.b16 %v3924
          %v4094 = vunpack.c.l.b16 %v3925
          %v4095 = vunpack.c.h.b16 %v3925
          %v4096 = vunpack.c.l.b16 %v3926
          %v4097 = vunpack.c.h.b16 %v3926
          %v4098 = vunpack.c.l.b16 %v3927
          %v4099 = vunpack.c.h.b16 %v3927
          %v4100 = vunpack.c.l.b16 %v3928
          %v4101 = vunpack.c.h.b16 %v3928
          %v4102 = vunpack.c.l.b16 %v3929
          %v4103 = vunpack.c.h.b16 %v3929
          %v4104 = vunpack.c.l.b16 %v3930
          %v4105 = vunpack.c.h.b16 %v3930
          %v4106 = vunpack.c.l.b16 %v3931
          %v4107 = vunpack.c.h.b16 %v3931
          %v4108 = vunpack.c.l.b16 %v3932
          %v4109 = vunpack.c.h.b16 %v3932
          %v4110 = vunpack.c.l.b16 %v3933
          %v4111 = vunpack.c.h.b16 %v3933
          %v4112 = vunpack.c.l.b16 %v3934
          %v4113 = vunpack.c.h.b16 %v3934
          %v4114 = vunpack.c.l.b16 %v3935
          %v4115 = vunpack.c.h.b16 %v3935
          %v4116 = vunpack.c.l.b16 %v3936
          %v4117 = vunpack.c.h.b16 %v3936
          %v4118 = vunpack.c.l.b16 %v3937
          %v4119 = vunpack.c.h.b16 %v3937
          %v4120 = vunpack.c.l.b16 %v3938
          %v4121 = vunpack.c.h.b16 %v3938
          %v4122 = vunpack.c.l.b16 %v3939
          %v4123 = vunpack.c.h.b16 %v3939
          %v4124 = vunpack.c.l.b16 %v3940
          %v4125 = vunpack.c.h.b16 %v3940
          %v4126 = vunpack.c.l.b16 %v3941
          %v4127 = vunpack.c.h.b16 %v3941
          %v4128 = vunpack.c.l.b16 %v3942
          %v4129 = vunpack.c.h.b16 %v3942
          %v4130 = vunpack.c.l.b16 %v3943
          %v4131 = vunpack.c.h.b16 %v3943
          %v4132 = vunpack.c.l.b16 %v3944
          %v4133 = vunpack.c.h.b16 %v3944
          %v4134 = vunpack.c.l.b16 %v3945
          %v4135 = vunpack.c.h.b16 %v3945
          %v4136 = vunpack.c.l.b16 %v3946
          %v4137 = vunpack.c.h.b16 %v3946
          %v4138 = vunpack.c.l.b16 %v3947
          %v4139 = vunpack.c.h.b16 %v3947
          %v4140 = vunpack.c.l.b16 %v3948
          %v4141 = vunpack.c.h.b16 %v3948
          %v4142 = vunpack.c.l.b16 %v3949
          %v4143 = vunpack.c.h.b16 %v3949
          %v4144 = vunpack.c.l.b16 %v3950
          %v4145 = vunpack.c.h.b16 %v3950
          %v4146 = vunpack.c.l.b16 %v3951
          %v4147 = vunpack.c.h.b16 %v3951
          %v4148 = vunpack.c.l.b16 %v3952
          %v4149 = vunpack.c.h.b16 %v3952
          %v4150 = vunpack.c.l.b16 %v3953
          %v4151 = vunpack.c.h.b16 %v3953
          %v4152 = vunpack.c.l.b16 %v3954
          %v4153 = vunpack.c.h.b16 %v3954
          %v4154 = vunpack.c.l.b16 %v3955
          %v4155 = vunpack.c.h.b16 %v3955
          %v4156 = vunpack.c.l.b16 %v3956
          %v4157 = vunpack.c.h.b16 %v3956
          %v4158 = vunpack.c.l.b16 %v3957
          %v4159 = vunpack.c.h.b16 %v3957
          %v4160 = vunpack.c.l.b16 %v3958
          %v4161 = vunpack.c.h.b16 %v3958
          %v4162 = vunpack.c.l.b16 %v3959
          %v4163 = vunpack.c.h.b16 %v3959
          %v4164 = vpack.c.b16 %v4038, %v4036
          %v4165 = vpack.c.b16 %v4039, %v4037
          %v4166 = vpack.c.b16 %v4042, %v4040
          %v4167 = vpack.c.b16 %v4043, %v4041
          %v4168 = vpack.c.b16 %v4046, %v4044
          %v4169 = vpack.c.b16 %v4047, %v4045
          %v4170 = vpack.c.b16 %v4050, %v4048
          %v4171 = vpack.c.b16 %v4051, %v4049
          %v4172 = vpack.c.b16 %v4054, %v4052
          %v4173 = vpack.c.b16 %v4055, %v4053
          %v4174 = vpack.c.b16 %v4058, %v4056
          %v4175 = vpack.c.b16 %v4059, %v4057
          %v4176 = vpack.c.b16 %v4062, %v4060
          %v4177 = vpack.c.b16 %v4063, %v4061
          %v4178 = vpack.c.b16 %v4066, %v4064
          %v4179 = vpack.c.b16 %v4067, %v4065
          %v4180 = vpack.c.b16 %v4070, %v4068
          %v4181 = vpack.c.b16 %v4071, %v4069
          %v4182 = vpack.c.b16 %v4074, %v4072
          %v4183 = vpack.c.b16 %v4075, %v4073
          %v4184 = vpack.c.b16 %v4078, %v4076
          %v4185 = vpack.c.b16 %v4079, %v4077
          %v4186 = vpack.c.b16 %v4082, %v4080
          %v4187 = vpack.c.b16 %v4083, %v4081
          %v4188 = vpack.c.b16 %v4086, %v4084
          %v4189 = vpack.c.b16 %v4087, %v4085
          %v4190 = vpack.c.b16 %v4090, %v4088
          %v4191 = vpack.c.b16 %v4091, %v4089
          %v4192 = vpack.c.b16 %v4094, %v4092
          %v4193 = vpack.c.b16 %v4095, %v4093
          %v4194 = vpack.c.b16 %v4098, %v4096
          %v4195 = vpack.c.b16 %v4099, %v4097
          %v4196 = vpack.c.b16 %v4102, %v4100
          %v4197 = vpack.c.b16 %v4103, %v4101
          %v4198 = vpack.c.b16 %v4106, %v4104
          %v4199 = vpack.c.b16 %v4107, %v4105
          %v4200 = vpack.c.b16 %v4110, %v4108
          %v4201 = vpack.c.b16 %v4111, %v4109
          %v4202 = vpack.c.b16 %v4114, %v4112
          %v4203 = vpack.c.b16 %v4115, %v4113
          %v4204 = vpack.c.b16 %v4118, %v4116
          %v4205 = vpack.c.b16 %v4119, %v4117
          %v4206 = vpack.c.b16 %v4122, %v4120
          %v4207 = vpack.c.b16 %v4123, %v4121
          %v4208 = vpack.c.b16 %v4126, %v4124
          %v4209 = vpack.c.b16 %v4127, %v4125
          %v4210 = vpack.c.b16 %v4130, %v4128
          %v4211 = vpack.c.b16 %v4131, %v4129
          %v4212 = vpack.c.b16 %v4134, %v4132
          %v4213 = vpack.c.b16 %v4135, %v4133
          %v4214 = vpack.c.b16 %v4138, %v4136
          %v4215 = vpack.c.b16 %v4139, %v4137
          %v4216 = vpack.c.b16 %v4142, %v4140
          %v4217 = vpack.c.b16 %v4143, %v4141
          %v4218 = vpack.c.b16 %v4146, %v4144
          %v4219 = vpack.c.b16 %v4147, %v4145
          %v4220 = vpack.c.b16 %v4150, %v4148
          %v4221 = vpack.c.b16 %v4151, %v4149
          %v4222 = vpack.c.b16 %v4154, %v4152
          %v4223 = vpack.c.b16 %v4155, %v4153
          %v4224 = vpack.c.b16 %v4158, %v4156
          %v4225 = vpack.c.b16 %v4159, %v4157
          %v4226 = vpack.c.b16 %v4162, %v4160
          %v4227 = vpack.c.b16 %v4163, %v4161
          %4292 = vmatprep.subr.bf16.mxu0 %v4165
          %4293 = vmatpush1.bf16.msra.mxu0 %v4164
          %4294 = vmatprep.subr.bf16.mxu0 %v4167
          %4295 = vmatpush1.bf16.msra.mxu0 %v4166
          %4296 = vmatprep.subr.bf16.mxu0 %v4169
          %4297 = vmatpush1.bf16.msra.mxu0 %v4168
          %4298 = vmatprep.subr.bf16.mxu0 %v4171
          %4299 = vmatpush1.bf16.msra.mxu0 %v4170
          %4300 = vmatprep.subr.bf16.mxu0 %v4173
          %4301 = vmatpush1.bf16.msra.mxu0 %v4172
          %4302 = vmatprep.subr.bf16.mxu0 %v4175
          %4303 = vmatpush1.bf16.msra.mxu0 %v4174
          %4304 = vmatprep.subr.bf16.mxu0 %v4177
          %4305 = vmatpush1.bf16.msra.mxu0 %v4176
          %4306 = vmatprep.subr.bf16.mxu0 %v4179
          %4307 = vmatpush1.bf16.msra.mxu0 %v4178
          %4308 = vmatprep.subr.bf16.mxu0 %v4181
          %4309 = vmatpush1.bf16.msra.mxu0 %v4180
          %4310 = vmatprep.subr.bf16.mxu0 %v4183
          %4311 = vmatpush1.bf16.msra.mxu0 %v4182
          %4312 = vmatprep.subr.bf16.mxu0 %v4185
          %4313 = vmatpush1.bf16.msra.mxu0 %v4184
          %4314 = vmatprep.subr.bf16.mxu0 %v4187
          %4315 = vmatpush1.bf16.msra.mxu0 %v4186
          %4316 = vmatprep.subr.bf16.mxu0 %v4189
          %4317 = vmatpush1.bf16.msra.mxu0 %v4188
          %4318 = vmatprep.subr.bf16.mxu0 %v4191
          %4319 = vmatpush1.bf16.msra.mxu0 %v4190
          %4320 = vmatprep.subr.bf16.mxu0 %v4193
          %4321 = vmatpush1.bf16.msra.mxu0 %v4192
          %4322 = vmatprep.subr.bf16.mxu0 %v4195
          %4323 = vmatpush1.bf16.msra.mxu0 %v4194
          %4324 = vmatprep.mubr.bf16.mxu0 %v3893
          %4325 = vmatmul.mubr.bf16.gmra.mrb[0].mxu0 %v3892
          %v4326 = vpop.f32.mrb[0].mxu0
          %v4327 = vadd.f32 %v3965, %v4326
          %v4328 = vpop.f32.mrb[0].mxu0
          %v4329 = vadd.f32 %v3969, %v4328
          %v4330 = vpop.f32.mrb[0].mxu0
          %v4331 = vpop.f32.mrb[0].mxu0
          %4332 = vdwg.mxu0
          %4333 = vmatprep.subr.bf16.mxu0 %v4197
          %4334 = vmatpush1.bf16.msra.mxu0 %v4196
          %4335 = vmatprep.subr.bf16.mxu0 %v4199
          %4336 = vmatpush1.bf16.msra.mxu0 %v4198
          %4337 = vmatprep.subr.bf16.mxu0 %v4201
          %4338 = vmatpush1.bf16.msra.mxu0 %v4200
          %4339 = vmatprep.subr.bf16.mxu0 %v4203
          %4340 = vmatpush1.bf16.msra.mxu0 %v4202
          %4341 = vmatprep.subr.bf16.mxu0 %v4205
          %4342 = vmatpush1.bf16.msra.mxu0 %v4204
          %4343 = vmatprep.subr.bf16.mxu0 %v4207
          %4344 = vmatpush1.bf16.msra.mxu0 %v4206
          %4345 = vmatprep.subr.bf16.mxu0 %v4209
          %4346 = vmatpush1.bf16.msra.mxu0 %v4208
          %4347 = vmatprep.subr.bf16.mxu0 %v4211
          %4348 = vmatpush1.bf16.msra.mxu0 %v4210
          %4349 = vmatprep.subr.bf16.mxu0 %v4213
          %4350 = vmatpush1.bf16.msra.mxu0 %v4212
          %4351 = vmatprep.subr.bf16.mxu0 %v4215
          %4352 = vmatpush1.bf16.msra.mxu0 %v4214
          %4353 = vmatprep.subr.bf16.mxu0 %v4217
          %4354 = vmatpush1.bf16.msra.mxu0 %v4216
          %4355 = vmatprep.subr.bf16.mxu0 %v4219
          %4356 = vmatpush1.bf16.msra.mxu0 %v4218
          %4357 = vmatprep.subr.bf16.mxu0 %v4221
          %4358 = vmatpush1.bf16.msra.mxu0 %v4220
          %4359 = vmatprep.subr.bf16.mxu0 %v4223
          %4360 = vmatpush1.bf16.msra.mxu0 %v4222
          %4361 = vmatprep.subr.bf16.mxu0 %v4225
          %4362 = vmatpush1.bf16.msra.mxu0 %v4224
          %4363 = vmatprep.subr.bf16.mxu0 %v4227
          %4364 = vmatpush1.bf16.msra.mxu0 %v4226
          %4365 = vmatprep.mubr.bf16.mxu0 %v3895
          %4366 = vmatmul.mubr.bf16.gmra.mrb[0].mxu0 %v3894
          %v4367 = vpop.f32.mrb[0].mxu0
          %v4368 = vadd.f32 %v4327, %v4367
          %v4369 = vpop.f32.mrb[0].mxu0
          %v4370 = vadd.f32 %v4329, %v4369
          %v4371 = vpop.f32.mrb[0].mxu0
          %v4372 = vpop.f32.mrb[0].mxu0
          %4373 = vdwg.mxu0
          %v4374 = vld [vmem:[%s19] sm:$0x3]
          %v4376 = vlaneseq
          %v4377 = vshrl.u32 %v4376, 7
          %v4378 = vsub.s32 0, %v4377
          %v4379 = vrot.slane %v4374, %v4378
          %v4380 = vlaneseq
          %v4381 = vshrl.u32 %v4380, 7
          %v4382 = vsub.s32 1, %v4381
          %v4383 = vrot.slane %v4374, %v4382
          %v4386 = vmul.f32 %v4368, %v4379
          %v4387 = vmul.f32 %v4370, %v4383
          %v4388 = vld [vmem:[%s20] sm:$0x3]
          %v4390 = vlaneseq
          %v4391 = vshrl.u32 %v4390, 7
          %v4392 = vsub.s32 0, %v4391
          %v4393 = vrot.slane %v4388, %v4392
          %v4394 = vlaneseq
          %v4395 = vshrl.u32 %v4394, 7
          %v4396 = vsub.s32 1, %v4395
          %v4397 = vrot.slane %v4388, %v4396
          %v4400 = vadd.f32 %v4386, %v4393
          %v4401 = vadd.f32 %v4387, %v4397
          %v4402 = vmax.f32 %v4400, 0.0
          %v4403 = vmax.f32 %v4401, 0.0
          %v4404 = vpack.c.bf16 %v4402, %v4402
          %v4405 = vpack.c.bf16 %v4403, %v4403
          %v4406 = vld [vmem:[#allocation20] sm:$0xf]
          %v4407 = vld [vmem:[#allocation20 + $0x4] sm:$0xf]
          %v4408 = vld [vmem:[#allocation20 + $0x8] sm:$0xf]
          %v4409 = vld [vmem:[#allocation20 + $0xc] sm:$0xf]
          %v4410 = vld [vmem:[#allocation20 + $0x10] sm:$0xf]
          %v4411 = vld [vmem:[#allocation20 + $0x14] sm:$0xf]
          %v4412 = vld [vmem:[#allocation20 + $0x18] sm:$0xf]
          %v4413 = vld [vmem:[#allocation20 + $0x1c] sm:$0xf]
          %v4414 = vld [vmem:[#allocation20 + $0x20] sm:$0xf]
          %v4415 = vld [vmem:[#allocation20 + $0x24] sm:$0xf]
          %v4416 = vld [vmem:[#allocation20 + $0x28] sm:$0xf]
          %v4417 = vld [vmem:[#allocation20 + $0x2c] sm:$0xf]
          %v4418 = vld [vmem:[#allocation20 + $0x30] sm:$0xf]
          %v4419 = vld [vmem:[#allocation20 + $0x34] sm:$0xf]
          %v4420 = vld [vmem:[#allocation20 + $0x38] sm:$0xf]
          %v4421 = vld [vmem:[#allocation20 + $0x3c] sm:$0xf]
          %v4422 = vld [vmem:[#allocation20 + $0x40] sm:$0xf]
          %v4423 = vld [vmem:[#allocation20 + $0x44] sm:$0xf]
          %v4424 = vld [vmem:[#allocation20 + $0x48] sm:$0xf]
          %v4425 = vld [vmem:[#allocation20 + $0x4c] sm:$0xf]
          %v4426 = vld [vmem:[#allocation20 + $0x50] sm:$0xf]
          %v4427 = vld [vmem:[#allocation20 + $0x54] sm:$0xf]
          %v4428 = vld [vmem:[#allocation20 + $0x58] sm:$0xf]
          %v4429 = vld [vmem:[#allocation20 + $0x5c] sm:$0xf]
          %v4430 = vld [vmem:[#allocation20 + $0x60] sm:$0xf]
          %v4431 = vld [vmem:[#allocation20 + $0x64] sm:$0xf]
          %v4432 = vld [vmem:[#allocation20 + $0x68] sm:$0xf]
          %v4433 = vld [vmem:[#allocation20 + $0x6c] sm:$0xf]
          %v4434 = vld [vmem:[#allocation20 + $0x70] sm:$0xf]
          %v4435 = vld [vmem:[#allocation20 + $0x74] sm:$0xf]
          %v4436 = vld [vmem:[#allocation20 + $0x78] sm:$0xf]
          %v4437 = vld [vmem:[#allocation20 + $0x7c] sm:$0xf]
          %v4438 = vld [vmem:[%s22] sm:$0x1]
          %v4440 = vlaneseq
          %v4441 = vshrl.u32 %v4440, 7
          %v4442 = vsub.s32 0, %v4441
          %v4443 = vrot.slane %v4438, %v4442
          %v4477 = vunpack.c.l.b16 %v4406
          %v4478 = vunpack.c.l.b16 %v4407
          %v4479 = vunpack.c.l.b16 %v4408
          %v4480 = vunpack.c.l.b16 %v4409
          %v4481 = vunpack.c.l.b16 %v4410
          %v4482 = vunpack.c.l.b16 %v4411
          %v4483 = vunpack.c.l.b16 %v4412
          %v4484 = vunpack.c.l.b16 %v4413
          %v4485 = vunpack.c.l.b16 %v4414
          %v4486 = vunpack.c.l.b16 %v4415
          %v4487 = vunpack.c.l.b16 %v4416
          %v4488 = vunpack.c.l.b16 %v4417
          %v4489 = vunpack.c.l.b16 %v4418
          %v4490 = vunpack.c.l.b16 %v4419
          %v4491 = vunpack.c.l.b16 %v4420
          %v4492 = vunpack.c.l.b16 %v4421
          %v4493 = vunpack.c.l.b16 %v4422
          %v4494 = vunpack.c.l.b16 %v4423
          %v4495 = vunpack.c.l.b16 %v4424
          %v4496 = vunpack.c.l.b16 %v4425
          %v4497 = vunpack.c.l.b16 %v4426
          %v4498 = vunpack.c.l.b16 %v4427
          %v4499 = vunpack.c.l.b16 %v4428
          %v4500 = vunpack.c.l.b16 %v4429
          %v4501 = vunpack.c.l.b16 %v4430
          %v4502 = vunpack.c.l.b16 %v4431
          %v4503 = vunpack.c.l.b16 %v4432
          %v4504 = vunpack.c.l.b16 %v4433
          %v4505 = vunpack.c.l.b16 %v4434
          %v4506 = vunpack.c.l.b16 %v4435
          %v4507 = vunpack.c.l.b16 %v4436
          %v4508 = vunpack.c.l.b16 %v4437
          %v4509 = vpack.c.b16 %v4478, %v4477
          %v4510 = vpack.c.b16 %v4480, %v4479
          %v4511 = vpack.c.b16 %v4482, %v4481
          %v4512 = vpack.c.b16 %v4484, %v4483
          %v4513 = vpack.c.b16 %v4486, %v4485
          %v4514 = vpack.c.b16 %v4488, %v4487
          %v4515 = vpack.c.b16 %v4490, %v4489
          %v4516 = vpack.c.b16 %v4492, %v4491
          %v4517 = vpack.c.b16 %v4494, %v4493
          %v4518 = vpack.c.b16 %v4496, %v4495
          %v4519 = vpack.c.b16 %v4498, %v4497
          %v4520 = vpack.c.b16 %v4500, %v4499
          %v4521 = vpack.c.b16 %v4502, %v4501
          %v4522 = vpack.c.b16 %v4504, %v4503
          %v4523 = vpack.c.b16 %v4506, %v4505
          %v4524 = vpack.c.b16 %v4508, %v4507
          %4541 = vmatprep.subr.bf16.mxu0 0
          %4542 = vmatpush1.bf16.msra.mxu0 %v4509
          %4543 = vmatprep.subr.bf16.mxu0 0
          %4544 = vmatpush1.bf16.msra.mxu0 %v4510
          %4545 = vmatprep.subr.bf16.mxu0 0
          %4546 = vmatpush1.bf16.msra.mxu0 %v4511
          %4547 = vmatprep.subr.bf16.mxu0 0
          %4548 = vmatpush1.bf16.msra.mxu0 %v4512
          %4549 = vmatprep.subr.bf16.mxu0 0
          %4550 = vmatpush1.bf16.msra.mxu0 %v4513
          %4551 = vmatprep.subr.bf16.mxu0 0
          %4552 = vmatpush1.bf16.msra.mxu0 %v4514
          %4553 = vmatprep.subr.bf16.mxu0 0
          %4554 = vmatpush1.bf16.msra.mxu0 %v4515
          %4555 = vmatprep.subr.bf16.mxu0 0
          %4556 = vmatpush1.bf16.msra.mxu0 %v4516
          %4557 = vmatprep.subr.bf16.mxu0 0
          %4558 = vmatpush1.bf16.msra.mxu0 %v4517
          %4559 = vmatprep.subr.bf16.mxu0 0
          %4560 = vmatpush1.bf16.msra.mxu0 %v4518
          %4561 = vmatprep.subr.bf16.mxu0 0
          %4562 = vmatpush1.bf16.msra.mxu0 %v4519
          %4563 = vmatprep.subr.bf16.mxu0 0
          %4564 = vmatpush1.bf16.msra.mxu0 %v4520
          %4565 = vmatprep.subr.bf16.mxu0 0
          %4566 = vmatpush1.bf16.msra.mxu0 %v4521
          %4567 = vmatprep.subr.bf16.mxu0 0
          %4568 = vmatpush1.bf16.msra.mxu0 %v4522
          %4569 = vmatprep.subr.bf16.mxu0 0
          %4570 = vmatpush1.bf16.msra.mxu0 %v4523
          %4571 = vmatprep.subr.bf16.mxu0 0
          %4572 = vmatpush1.bf16.msra.mxu0 %v4524
          %4573 = vmatprep.mubr.bf16.mxu0 %v4405
          %4574 = vmatmul.mubr.bf16.gmra.mrb[0].mxu0 %v4404
          %v4575 = vpop.f32.mrb[0].mxu0
          %v4576 = vadd.f32 %v4443, %v4575
          %v4577 = vpop.f32.mrb[0].mxu0
          %v4578 = vpop.f32.mrb[0].mxu0
          %v4579 = vpop.f32.mrb[0].mxu0
          %4580 = vdwg.mxu0
          %4581 = vst [vmem:[%s867] sm:$0xff] %v4576
        $region164: #{tpu_custom_call.1} parent=111 // pred_fallthru
          _
        %s4582 = sand.u32 %s553, 1
        %s4583 = scalar_lea.sflag [#allocation5], %s4582
        %s4584 = sand.u32 %s553, 1
        %s4585 = smul.addr %s4584, 8
        %s4586 = scalar_lea.vmem [#allocation21], %s4585
        // Predicated region
        $region165: #{tpu_custom_call.1} parent=111 // pred_check
          %p4587 = pneg %p563
        $region166: #{tpu_custom_call.1} parent=111 // pred_check_branch
          %4589 = sbr.rel (%p4587) target = $region168
        $region167: #{tpu_custom_call.1} parent=111 // pred_region
          %s4591 = ssub.s32 128, 128
          %4592 = vsyncadd %s4583, %s4591
          %s4593 = smul.addr %s47, 128
          %s4594 = scalar_lea.hbm %s23, %s4593
          %s4596 = sshll.u32 %s4586, 4
          %s4597 = int_to_ptr.vmem [resolvable:$true] %s4596
          %4599 = dma.vmem_to_hbm [thread:$0]  %s4597, 128, %s4594, %s4583
        $region168: #{tpu_custom_call.1} parent=111 // pred_fallthru
          _
      $region112: #{tpu_custom_call.1} parent=5 // pred_fallthru
        _
      %p4600 = scmp.le.s32.totalorder 2, %s38
      // Predicated region
      $region169: #{tpu_custom_call.1} parent=5 // pred_check
        %p4601 = pneg %p4600
      $region170: #{tpu_custom_call.1} parent=5 // pred_check_branch
        %4603 = sbr.rel (%p4601) target = $region172
      $region171: #{tpu_custom_call.1} parent=5 // pred_region
        %s4604 = ssub.s32 %s38, 2
        // Predicated region
        $region173: #{tpu_custom_call.1} parent=171 // pred_check
          %p4605 = pneg %p569
        $region174: #{tpu_custom_call.1} parent=171 // pred_check_branch
          %4607 = sbr.rel (%p4605) target = $region176
        $region175: #{tpu_custom_call.1} parent=171 // pred_region
          %s4608 = sand.u32 %s554, 1
          %s4609 = scalar_lea.sflag [#allocation5], %s4608
          %s4610 = sand.u32 %s554, 1
          %s4611 = smul.addr %s4610, 8
          %s4612 = scalar_lea.vmem [#allocation21], %s4611
          %4613 = dma.done %s4609, 128
        $region176: #{tpu_custom_call.1} parent=171 // pred_fallthru
          _
      $region172: #{tpu_custom_call.1} parent=5 // pred_fallthru
        _
    $region6: #{tpu_custom_call.1} parent=1 // loop_footer
      %s42 = sadd.s32 1, %s38
    $region7: #{tpu_custom_call.1} parent=1 // loop_footer_branch
      %37 = sbr.rel target = $region3
    $region8: #{tpu_custom_call.1} parent=1 // loop_exit
      _
    %4614 = vsyncpa [#allocation4], 1
    %s4615 = scalar_lea.sflag [#allocation4], 1
    %4616 = vsyncpa %s4615, 1
    %4617 = vsyncpa [#allocation7], 1
    %4618 = vsyncpa [#allocation10], 1
    %4619 = vsyncpa [#allocation13], 1
    %4620 = vsyncpa [#allocation16], 1
    %4621 = vsyncpa [#allocation19], 1
    %4622 = vsyncpa [#allocation5], 1
    %s4623 = scalar_lea.sflag [#allocation5], 1
    %4624 = vsyncpa %s4623, 1

</llo_original>
